<compile_context>
chip_gen: v7x
topology: tpu7x:2x2x1
jax: 0.10.0
libtpu: 0.0.40
codegen_flags: <defaults>
</compile_context>

<pallas_src>
import jax
import jax.numpy as jnp
from jax import lax
from jax.experimental import pallas as pl
from jax.experimental.pallas import tpu as pltpu

# ---------------------------------------------------------------------------
# Problem sizes (layer_name='1' => in_channels=256).
# ---------------------------------------------------------------------------
N, H, W = 2, 16, 16
CIN = 256                      # in_channels for layer '1'
COUT = 32                      # out_channels
DILS = (3, 5, 7)
KK = 9                         # taps per 3x3 kernel
CCAT = 4 * COUT                # 128 channels after concat
HW = H * W                     # 256 pixels per image
R = N * HW                     # 512 pixels total (lane axis of the matmul)
NCOLS = COUT + 3 * KK * COUT   # 32 + 864 = 896 matmul rows (transposed form)
EPS = 1e-5

assert (H & (H - 1)) == 0 and (W & (W - 1)) == 0, "mask math assumes pow2 H, W"
_LOG2_W = W.bit_length() - 1


# ---------------------------------------------------------------------------
# Fused kernel: one bf16 matmul -> roll+mask tap accumulate -> concat ->
#               BatchNorm(train) -> ReLU.
# ---------------------------------------------------------------------------
def cpfe_kernel(x_ref, w_ref, g_ref, b_ref, o_ref):
    # x_ref : (N, CIN, HW)   f32   NCHW input, spatially flattened
    # w_ref : (NCOLS, CIN)   bf16  packed [w1x1 ; d3 taps ; d5 taps ; d7 taps]
    # g_ref : (CCAT, 1)      f32   BN gamma
    # b_ref : (CCAT, 1)      f32   BN beta
    # o_ref : (N, CCAT, HW)  f32   NCHW output, spatially flattened

    # --- pixel-index masks along the 512-wide lane axis ---------------------
    pix = lax.broadcasted_iota(jnp.int32, (1, R), 1)          # 0..511
    w_idx = pix & (W - 1)                                      # w within row
    h_idx = (pix >> _LOG2_W) & (H - 1)                         # h within image

    # --- one fat bf16 matmul: every conv partial for both images ------------
    x_all = jnp.concatenate(
        [x_ref[n, :, :].astype(jnp.bfloat16) for n in range(N)], axis=1
    )                                                          # (CIN, 512) bf16
    allp = jnp.dot(w_ref[...], x_all,
                   preferred_element_type=jnp.float32)         # (896, 512) f32

    feats = [allp[0:COUT, :]]                                  # 1x1 branch

    for bi, d in enumerate(DILS):
        base = COUT + bi * KK * COUT
        hn = h_idx >= d            # valid when dy = -d
        hp = h_idx < H - d         # valid when dy = +d
        wn = w_idx >= d            # valid when dx = -d
        wp = w_idx < W - d         # valid when dx = +d

        # centre tap (ky=1, kx=1): no shift, always valid -> init accumulator
        acc = allp[base + 4 * COUT: base + 5 * COUT, :]        # (32, 512)

        for ky in range(3):
            for kx in range(3):
                if ky == 1 and kx == 1:
                    continue
                t = ky * 3 + kx
                dy = (ky - 1) * d
                dx = (kx - 1) * d
                tap = allp[base + t * COUT: base + (t + 1) * COUT, :]
                # out[p] += tap[p + dy*W + dx]   (zero outside the image)
                shifted = pltpu.roll(tap, (-(dy * W + dx)) % R, axis=1)
                m = None
                if ky == 0:
                    m = hn
                elif ky == 2:
                    m = hp
                if kx == 0:
                    m = wn if m is None else (m & wn)
                elif kx == 2:
                    m = wp if m is None else (m & wp)
                acc = acc + jnp.where(m, shifted, 0.0)
        feats.append(acc)

    # sublane-aligned stack -> (128, 512), lane dense
    cat = jnp.concatenate(feats, axis=0)

    # --- training-mode BatchNorm (batch stats, biased var) + ReLU -----------
    inv_r = 1.0 / float(R)
    mean = jnp.sum(cat, axis=1, keepdims=True) * inv_r         # (128, 1)
    ex2 = jnp.sum(cat * cat, axis=1, keepdims=True) * inv_r
    var = ex2 - mean * mean
    scale = g_ref[...] * lax.rsqrt(var + EPS)                  # (128, 1)
    bias = b_ref[...] - mean * scale
    y = jnp.maximum(cat * scale + bias, 0.0)                   # (128, 512)

    # lane-dense (256-wide) stores, one per image
    for n in range(N):
        o_ref[n, :, :] = y[:, n * HW:(n + 1) * HW]


# ---------------------------------------------------------------------------
# Host-side weight packing: PyTorch OIHW -> one (896, 256) bf16 matrix.
# Row order: [1x1 (32 rows)] then per dilation branch, per tap t = ky*3+kx,
# per output channel o  ->  row = 32 + bi*288 + t*32 + o.
# ---------------------------------------------------------------------------
def pack_weights(w11_oihw, w3_oihw, w5_oihw, w7_oihw):
    rows = [w11_oihw[:, :, 0, 0]]                              # (COUT, CIN)
    for wb in (w3_oihw, w5_oihw, w7_oihw):
        # (COUT, CIN, 3, 3) -> (ky, kx, COUT, CIN) -> (9*COUT, CIN)
        rows.append(jnp.transpose(wb, (2, 3, 0, 1)).reshape(KK * COUT, CIN))
    return jnp.concatenate(rows, axis=0).astype(jnp.bfloat16)  # (896, 256)


@jax.jit
def cpfe_forward(x_nchw, w_all, gamma, beta):
    x = x_nchw.reshape(N, CIN, HW)                             # free reshape
    bytes_accessed = (x_nchw.size * 4 + w_all.size * 2
                      + 2 * CCAT * 4 + N * CCAT * HW * 4)
    out = pl.pallas_call(
        cpfe_kernel,
        out_shape=jax.ShapeDtypeStruct((N, CCAT, HW), jnp.float32),
        in_specs=[
            pl.BlockSpec(memory_space=pltpu.MemorySpace.VMEM),
            pl.BlockSpec(memory_space=pltpu.MemorySpace.VMEM),
            pl.BlockSpec(memory_space=pltpu.MemorySpace.VMEM),
            pl.BlockSpec(memory_space=pltpu.MemorySpace.VMEM),
        ],
        out_specs=pl.BlockSpec(memory_space=pltpu.MemorySpace.VMEM),
        compiler_params=pltpu.CompilerParams(
            vmem_limit_bytes=32 * 1024 * 1024),
        cost_estimate=pl.CostEstimate(
            flops=2 * R * CIN * NCOLS,
            transcendentals=CCAT,
            bytes_accessed=bytes_accessed),
    )(x, w_all, gamma.reshape(CCAT, 1), beta.reshape(CCAT, 1))
    return out.reshape(N, CCAT, H, W)                          # NCHW, free reshape


# ---------------------------------------------------------------------------
# Pure-JAX reference (mirrors the PyTorch forward in training mode, NCHW).
# ---------------------------------------------------------------------------
def cpfe_reference(x_nchw, w11, w3, w5, w7, gamma, beta):
    dn = lax.conv_dimension_numbers(x_nchw.shape, w3.shape,
                                    ("NCHW", "OIHW", "NCHW"))

    def dil_conv(wb, d):
        return lax.conv_general_dilated(
            x_nchw, wb, window_strides=(1, 1), padding=((d, d), (d, d)),
            rhs_dilation=(d, d), dimension_numbers=dn,
            precision=lax.Precision.HIGHEST)

    c11 = lax.conv_general_dilated(
        x_nchw, w11, window_strides=(1, 1), padding=((0, 0), (0, 0)),
        dimension_numbers=dn, precision=lax.Precision.HIGHEST)

    cat = jnp.concatenate(
        [c11] + [dil_conv(wb, d) for wb, d in zip((w3, w5, w7), DILS)], axis=1)

    mean = jnp.mean(cat, axis=(0, 2, 3), keepdims=True)
    var = jnp.mean((cat - mean) ** 2, axis=(0, 2, 3), keepdims=True)
    y = (cat - mean) * lax.rsqrt(var + EPS) * gamma.reshape(1, -1, 1, 1) \
        + beta.reshape(1, -1, 1, 1)
    return jnp.maximum(y, 0.0)


if __name__ == "__main__":
    key = jax.random.PRNGKey(0)
    k_x, k1, k3, k5, k7, kg, kb = jax.random.split(key, 7)

    # PyTorch-layout parameters (OIHW) and NCHW input.
    x_nchw = jax.random.normal(k_x, (N, CIN, H, W), dtype=jnp.float32)

    scale = 0.05
    w11 = scale * jax.random.normal(k1, (COUT, CIN, 1, 1), dtype=jnp.float32)
    w3 = scale * jax.random.normal(k3, (COUT, CIN, 3, 3), dtype=jnp.float32)
    w5 = scale * jax.random.normal(k5, (COUT, CIN, 3, 3), dtype=jnp.float32)
    w7 = scale * jax.random.normal(k7, (COUT, CIN, 3, 3), dtype=jnp.float32)
    gamma = 1.0 + 0.1 * jax.random.normal(kg, (CCAT,), dtype=jnp.float32)
    beta = 0.1 * jax.random.normal(kb, (CCAT,), dtype=jnp.float32)

    w_all = pack_weights(w11, w3, w5, w7)

    out_nchw = cpfe_forward(x_nchw, w_all, gamma, beta)
    out_nchw = jax.block_until_ready(out_nchw)
    assert out_nchw.shape == (N, CCAT, H, W)

    ref = cpfe_reference(x_nchw, w11, w3, w5, w7, gamma, beta)
    ref = jax.block_until_ready(ref)

    import numpy as np
    np.testing.assert_allclose(np.asarray(out_nchw), np.asarray(ref),
                               rtol=2e-2, atol=2e-2)
    print("KERNEL_OK")
</pallas_src>

<mosaic_0001>
module attributes {stable_mosaic.version = 11 : i64} {
  func.func @cpfe_kernel(%arg0: memref<2x256x256xf32, #tpu.memory_space<vmem>>, %arg1: memref<896x256xbf16, #tpu.memory_space<vmem>>, %arg2: memref<128x1xf32, #tpu.memory_space<vmem>>, %arg3: memref<128x1xf32, #tpu.memory_space<vmem>>, %arg4: memref<2x128x256xf32, #tpu.memory_space<vmem>>) attributes {dimension_semantics = [], scalar_prefetch = 0 : i64, scratch_operands = 0 : i64, tpu.core_type = #tpu.core_type<tc>} {
    %0 = tpu.iota {dimensions = array<i32: 1>} : vector<1x512xi32>
    %c15_i32 = arith.constant 15 : i32
    %1 = vector.broadcast %c15_i32 : i32 to vector<1x512xi32>
    %2 = arith.andi %0, %1 : vector<1x512xi32>
    %c4_i32 = arith.constant 4 : i32
    %3 = vector.broadcast %c4_i32 : i32 to vector<1x512xi32>
    %4 = arith.shrsi %0, %3 : vector<1x512xi32>
    %c15_i32_0 = arith.constant 15 : i32
    %5 = vector.broadcast %c15_i32_0 : i32 to vector<1x512xi32>
    %6 = arith.andi %4, %5 : vector<1x512xi32>
    %c0 = arith.constant 0 : index
    %c0_1 = arith.constant 0 : index
    %c0_2 = arith.constant 0 : index
    %7 = vector.load %arg0[%c0, %c0_1, %c0_2] : memref<2x256x256xf32, #tpu.memory_space<vmem>>, vector<1x256x256xf32>
    %8 = vector.shape_cast %7 : vector<1x256x256xf32> to vector<256x256xf32>
    %9 = arith.truncf %8 : vector<256x256xf32> to vector<256x256xbf16>
    %c1 = arith.constant 1 : index
    %c0_3 = arith.constant 0 : index
    %c0_4 = arith.constant 0 : index
    %10 = vector.load %arg0[%c1, %c0_3, %c0_4] : memref<2x256x256xf32, #tpu.memory_space<vmem>>, vector<1x256x256xf32>
    %11 = vector.shape_cast %10 : vector<1x256x256xf32> to vector<256x256xf32>
    %12 = arith.truncf %11 : vector<256x256xf32> to vector<256x256xbf16>
    %13 = tpu.concatenate %9, %12 in 1 : vector<256x256xbf16>, vector<256x256xbf16> -> vector<256x512xbf16>
    %c0_5 = arith.constant 0 : index
    %c0_6 = arith.constant 0 : index
    %14 = vector.load %arg1[%c0_5, %c0_6] : memref<896x256xbf16, #tpu.memory_space<vmem>>, vector<896x256xbf16>
    %cst = arith.constant dense<0.000000e+00> : vector<896x512xf32>
    %15 = tpu.matmul %14, %13, %cst {dimension_numbers = #tpu.dot_dimension_numbers<[1], [0], [0], [1], [0, 0, 1, 1], [], []>} : vector<896x256xbf16>, vector<256x512xbf16>, vector<896x512xf32> -> vector<896x512xf32>
    %16 = vector.extract_strided_slice %15 {offsets = [0, 0], sizes = [32, 512], strides = [1, 1]} : vector<896x512xf32> to vector<32x512xf32>
    %c3_i32 = arith.constant 3 : i32
    %17 = vector.broadcast %c3_i32 : i32 to vector<1x512xi32>
    %18 = arith.cmpi sge, %6, %17 : vector<1x512xi32>
    %c13_i32 = arith.constant 13 : i32
    %19 = vector.broadcast %c13_i32 : i32 to vector<1x512xi32>
    %20 = arith.cmpi slt, %6, %19 : vector<1x512xi32>
    %c3_i32_7 = arith.constant 3 : i32
    %21 = vector.broadcast %c3_i32_7 : i32 to vector<1x512xi32>
    %22 = arith.cmpi sge, %2, %21 : vector<1x512xi32>
    %c13_i32_8 = arith.constant 13 : i32
    %23 = vector.broadcast %c13_i32_8 : i32 to vector<1x512xi32>
    %24 = arith.cmpi slt, %2, %23 : vector<1x512xi32>
    %25 = vector.extract_strided_slice %15 {offsets = [160, 0], sizes = [32, 512], strides = [1, 1]} : vector<896x512xf32> to vector<32x512xf32>
    %26 = vector.extract_strided_slice %15 {offsets = [32, 0], sizes = [32, 512], strides = [1, 1]} : vector<896x512xf32> to vector<32x512xf32>
    %c51_i32 = arith.constant 51 : i32
    %27 = tpu.dynamic_rotate %26 by %c51_i32 dim 1 : vector<32x512xf32>, i32 -> vector<32x512xf32>
    %28 = arith.andi %18, %22 : vector<1x512xi1>
    %cst_9 = arith.constant 0.000000e+00 : f32
    %29 = vector.shape_cast %28 : vector<1x512xi1> to vector<1x512xi1>
    %30 = vector.broadcast %29 : vector<1x512xi1> to vector<32x512xi1>
    %31 = vector.broadcast %cst_9 : f32 to vector<32x512xf32>
    %32 = arith.select %30, %27, %31 : vector<32x512xi1>, vector<32x512xf32>
    %33 = arith.addf %25, %32 : vector<32x512xf32>
    %34 = vector.extract_strided_slice %15 {offsets = [64, 0], sizes = [32, 512], strides = [1, 1]} : vector<896x512xf32> to vector<32x512xf32>
    %c48_i32 = arith.constant 48 : i32
    %35 = tpu.dynamic_rotate %34 by %c48_i32 dim 1 : vector<32x512xf32>, i32 -> vector<32x512xf32>
    %cst_10 = arith.constant 0.000000e+00 : f32
    %36 = vector.shape_cast %18 : vector<1x512xi1> to vector<1x512xi1>
    %37 = vector.broadcast %36 : vector<1x512xi1> to vector<32x512xi1>
    %38 = vector.broadcast %cst_10 : f32 to vector<32x512xf32>
    %39 = arith.select %37, %35, %38 : vector<32x512xi1>, vector<32x512xf32>
    %40 = arith.addf %33, %39 : vector<32x512xf32>
    %41 = vector.extract_strided_slice %15 {offsets = [96, 0], sizes = [32, 512], strides = [1, 1]} : vector<896x512xf32> to vector<32x512xf32>
    %c45_i32 = arith.constant 45 : i32
    %42 = tpu.dynamic_rotate %41 by %c45_i32 dim 1 : vector<32x512xf32>, i32 -> vector<32x512xf32>
    %43 = arith.andi %18, %24 : vector<1x512xi1>
    %cst_11 = arith.constant 0.000000e+00 : f32
    %44 = vector.shape_cast %43 : vector<1x512xi1> to vector<1x512xi1>
    %45 = vector.broadcast %44 : vector<1x512xi1> to vector<32x512xi1>
    %46 = vector.broadcast %cst_11 : f32 to vector<32x512xf32>
    %47 = arith.select %45, %42, %46 : vector<32x512xi1>, vector<32x512xf32>
    %48 = arith.addf %40, %47 : vector<32x512xf32>
    %49 = vector.extract_strided_slice %15 {offsets = [128, 0], sizes = [32, 512], strides = [1, 1]} : vector<896x512xf32> to vector<32x512xf32>
    %c3_i32_12 = arith.constant 3 : i32
    %50 = tpu.dynamic_rotate %49 by %c3_i32_12 dim 1 : vector<32x512xf32>, i32 -> vector<32x512xf32>
    %cst_13 = arith.constant 0.000000e+00 : f32
    %51 = vector.shape_cast %22 : vector<1x512xi1> to vector<1x512xi1>
    %52 = vector.broadcast %51 : vector<1x512xi1> to vector<32x512xi1>
    %53 = vector.broadcast %cst_13 : f32 to vector<32x512xf32>
    %54 = arith.select %52, %50, %53 : vector<32x512xi1>, vector<32x512xf32>
    %55 = arith.addf %48, %54 : vector<32x512xf32>
    %56 = vector.extract_strided_slice %15 {offsets = [192, 0], sizes = [32, 512], strides = [1, 1]} : vector<896x512xf32> to vector<32x512xf32>
    %c509_i32 = arith.constant 509 : i32
    %57 = tpu.dynamic_rotate %56 by %c509_i32 dim 1 : vector<32x512xf32>, i32 -> vector<32x512xf32>
    %cst_14 = arith.constant 0.000000e+00 : f32
    %58 = vector.shape_cast %24 : vector<1x512xi1> to vector<1x512xi1>
    %59 = vector.broadcast %58 : vector<1x512xi1> to vector<32x512xi1>
    %60 = vector.broadcast %cst_14 : f32 to vector<32x512xf32>
    %61 = arith.select %59, %57, %60 : vector<32x512xi1>, vector<32x512xf32>
    %62 = arith.addf %55, %61 : vector<32x512xf32>
    %63 = vector.extract_strided_slice %15 {offsets = [224, 0], sizes = [32, 512], strides = [1, 1]} : vector<896x512xf32> to vector<32x512xf32>
    %c467_i32 = arith.constant 467 : i32
    %64 = tpu.dynamic_rotate %63 by %c467_i32 dim 1 : vector<32x512xf32>, i32 -> vector<32x512xf32>
    %65 = arith.andi %20, %22 : vector<1x512xi1>
    %cst_15 = arith.constant 0.000000e+00 : f32
    %66 = vector.shape_cast %65 : vector<1x512xi1> to vector<1x512xi1>
    %67 = vector.broadcast %66 : vector<1x512xi1> to vector<32x512xi1>
    %68 = vector.broadcast %cst_15 : f32 to vector<32x512xf32>
    %69 = arith.select %67, %64, %68 : vector<32x512xi1>, vector<32x512xf32>
    %70 = arith.addf %62, %69 : vector<32x512xf32>
    %71 = vector.extract_strided_slice %15 {offsets = [256, 0], sizes = [32, 512], strides = [1, 1]} : vector<896x512xf32> to vector<32x512xf32>
    %c464_i32 = arith.constant 464 : i32
    %72 = tpu.dynamic_rotate %71 by %c464_i32 dim 1 : vector<32x512xf32>, i32 -> vector<32x512xf32>
    %cst_16 = arith.constant 0.000000e+00 : f32
    %73 = vector.shape_cast %20 : vector<1x512xi1> to vector<1x512xi1>
    %74 = vector.broadcast %73 : vector<1x512xi1> to vector<32x512xi1>
    %75 = vector.broadcast %cst_16 : f32 to vector<32x512xf32>
    %76 = arith.select %74, %72, %75 : vector<32x512xi1>, vector<32x512xf32>
    %77 = arith.addf %70, %76 : vector<32x512xf32>
    %78 = vector.extract_strided_slice %15 {offsets = [288, 0], sizes = [32, 512], strides = [1, 1]} : vector<896x512xf32> to vector<32x512xf32>
    %c461_i32 = arith.constant 461 : i32
    %79 = tpu.dynamic_rotate %78 by %c461_i32 dim 1 : vector<32x512xf32>, i32 -> vector<32x512xf32>
    %80 = arith.andi %20, %24 : vector<1x512xi1>
    %cst_17 = arith.constant 0.000000e+00 : f32
    %81 = vector.shape_cast %80 : vector<1x512xi1> to vector<1x512xi1>
    %82 = vector.broadcast %81 : vector<1x512xi1> to vector<32x512xi1>
    %83 = vector.broadcast %cst_17 : f32 to vector<32x512xf32>
    %84 = arith.select %82, %79, %83 : vector<32x512xi1>, vector<32x512xf32>
    %85 = arith.addf %77, %84 : vector<32x512xf32>
    %c5_i32 = arith.constant 5 : i32
    %86 = vector.broadcast %c5_i32 : i32 to vector<1x512xi32>
    %87 = arith.cmpi sge, %6, %86 : vector<1x512xi32>
    %c11_i32 = arith.constant 11 : i32
    %88 = vector.broadcast %c11_i32 : i32 to vector<1x512xi32>
    %89 = arith.cmpi slt, %6, %88 : vector<1x512xi32>
    %c5_i32_18 = arith.constant 5 : i32
    %90 = vector.broadcast %c5_i32_18 : i32 to vector<1x512xi32>
    %91 = arith.cmpi sge, %2, %90 : vector<1x512xi32>
    %c11_i32_19 = arith.constant 11 : i32
    %92 = vector.broadcast %c11_i32_19 : i32 to vector<1x512xi32>
    %93 = arith.cmpi slt, %2, %92 : vector<1x512xi32>
    %94 = vector.extract_strided_slice %15 {offsets = [448, 0], sizes = [32, 512], strides = [1, 1]} : vector<896x512xf32> to vector<32x512xf32>
    %95 = vector.extract_strided_slice %15 {offsets = [320, 0], sizes = [32, 512], strides = [1, 1]} : vector<896x512xf32> to vector<32x512xf32>
    %c85_i32 = arith.constant 85 : i32
    %96 = tpu.dynamic_rotate %95 by %c85_i32 dim 1 : vector<32x512xf32>, i32 -> vector<32x512xf32>
    %97 = arith.andi %87, %91 : vector<1x512xi1>
    %cst_20 = arith.constant 0.000000e+00 : f32
    %98 = vector.shape_cast %97 : vector<1x512xi1> to vector<1x512xi1>
    %99 = vector.broadcast %98 : vector<1x512xi1> to vector<32x512xi1>
    %100 = vector.broadcast %cst_20 : f32 to vector<32x512xf32>
    %101 = arith.select %99, %96, %100 : vector<32x512xi1>, vector<32x512xf32>
    %102 = arith.addf %94, %101 : vector<32x512xf32>
    %103 = vector.extract_strided_slice %15 {offsets = [352, 0], sizes = [32, 512], strides = [1, 1]} : vector<896x512xf32> to vector<32x512xf32>
    %c80_i32 = arith.constant 80 : i32
    %104 = tpu.dynamic_rotate %103 by %c80_i32 dim 1 : vector<32x512xf32>, i32 -> vector<32x512xf32>
    %cst_21 = arith.constant 0.000000e+00 : f32
    %105 = vector.shape_cast %87 : vector<1x512xi1> to vector<1x512xi1>
    %106 = vector.broadcast %105 : vector<1x512xi1> to vector<32x512xi1>
    %107 = vector.broadcast %cst_21 : f32 to vector<32x512xf32>
    %108 = arith.select %106, %104, %107 : vector<32x512xi1>, vector<32x512xf32>
    %109 = arith.addf %102, %108 : vector<32x512xf32>
    %110 = vector.extract_strided_slice %15 {offsets = [384, 0], sizes = [32, 512], strides = [1, 1]} : vector<896x512xf32> to vector<32x512xf32>
    %c75_i32 = arith.constant 75 : i32
    %111 = tpu.dynamic_rotate %110 by %c75_i32 dim 1 : vector<32x512xf32>, i32 -> vector<32x512xf32>
    %112 = arith.andi %87, %93 : vector<1x512xi1>
    %cst_22 = arith.constant 0.000000e+00 : f32
    %113 = vector.shape_cast %112 : vector<1x512xi1> to vector<1x512xi1>
    %114 = vector.broadcast %113 : vector<1x512xi1> to vector<32x512xi1>
    %115 = vector.broadcast %cst_22 : f32 to vector<32x512xf32>
    %116 = arith.select %114, %111, %115 : vector<32x512xi1>, vector<32x512xf32>
    %117 = arith.addf %109, %116 : vector<32x512xf32>
    %118 = vector.extract_strided_slice %15 {offsets = [416, 0], sizes = [32, 512], strides = [1, 1]} : vector<896x512xf32> to vector<32x512xf32>
    %c5_i32_23 = arith.constant 5 : i32
    %119 = tpu.dynamic_rotate %118 by %c5_i32_23 dim 1 : vector<32x512xf32>, i32 -> vector<32x512xf32>
    %cst_24 = arith.constant 0.000000e+00 : f32
    %120 = vector.shape_cast %91 : vector<1x512xi1> to vector<1x512xi1>
    %121 = vector.broadcast %120 : vector<1x512xi1> to vector<32x512xi1>
    %122 = vector.broadcast %cst_24 : f32 to vector<32x512xf32>
    %123 = arith.select %121, %119, %122 : vector<32x512xi1>, vector<32x512xf32>
    %124 = arith.addf %117, %123 : vector<32x512xf32>
    %125 = vector.extract_strided_slice %15 {offsets = [480, 0], sizes = [32, 512], strides = [1, 1]} : vector<896x512xf32> to vector<32x512xf32>
    %c507_i32 = arith.constant 507 : i32
    %126 = tpu.dynamic_rotate %125 by %c507_i32 dim 1 : vector<32x512xf32>, i32 -> vector<32x512xf32>
    %cst_25 = arith.constant 0.000000e+00 : f32
    %127 = vector.shape_cast %93 : vector<1x512xi1> to vector<1x512xi1>
    %128 = vector.broadcast %127 : vector<1x512xi1> to vector<32x512xi1>
    %129 = vector.broadcast %cst_25 : f32 to vector<32x512xf32>
    %130 = arith.select %128, %126, %129 : vector<32x512xi1>, vector<32x512xf32>
    %131 = arith.addf %124, %130 : vector<32x512xf32>
    %132 = vector.extract_strided_slice %15 {offsets = [512, 0], sizes = [32, 512], strides = [1, 1]} : vector<896x512xf32> to vector<32x512xf32>
    %c437_i32 = arith.constant 437 : i32
    %133 = tpu.dynamic_rotate %132 by %c437_i32 dim 1 : vector<32x512xf32>, i32 -> vector<32x512xf32>
    %134 = arith.andi %89, %91 : vector<1x512xi1>
    %cst_26 = arith.constant 0.000000e+00 : f32
    %135 = vector.shape_cast %134 : vector<1x512xi1> to vector<1x512xi1>
    %136 = vector.broadcast %135 : vector<1x512xi1> to vector<32x512xi1>
    %137 = vector.broadcast %cst_26 : f32 to vector<32x512xf32>
    %138 = arith.select %136, %133, %137 : vector<32x512xi1>, vector<32x512xf32>
    %139 = arith.addf %131, %138 : vector<32x512xf32>
    %140 = vector.extract_strided_slice %15 {offsets = [544, 0], sizes = [32, 512], strides = [1, 1]} : vector<896x512xf32> to vector<32x512xf32>
    %c432_i32 = arith.constant 432 : i32
    %141 = tpu.dynamic_rotate %140 by %c432_i32 dim 1 : vector<32x512xf32>, i32 -> vector<32x512xf32>
    %cst_27 = arith.constant 0.000000e+00 : f32
    %142 = vector.shape_cast %89 : vector<1x512xi1> to vector<1x512xi1>
    %143 = vector.broadcast %142 : vector<1x512xi1> to vector<32x512xi1>
    %144 = vector.broadcast %cst_27 : f32 to vector<32x512xf32>
    %145 = arith.select %143, %141, %144 : vector<32x512xi1>, vector<32x512xf32>
    %146 = arith.addf %139, %145 : vector<32x512xf32>
    %147 = vector.extract_strided_slice %15 {offsets = [576, 0], sizes = [32, 512], strides = [1, 1]} : vector<896x512xf32> to vector<32x512xf32>
    %c427_i32 = arith.constant 427 : i32
    %148 = tpu.dynamic_rotate %147 by %c427_i32 dim 1 : vector<32x512xf32>, i32 -> vector<32x512xf32>
    %149 = arith.andi %89, %93 : vector<1x512xi1>
    %cst_28 = arith.constant 0.000000e+00 : f32
    %150 = vector.shape_cast %149 : vector<1x512xi1> to vector<1x512xi1>
    %151 = vector.broadcast %150 : vector<1x512xi1> to vector<32x512xi1>
    %152 = vector.broadcast %cst_28 : f32 to vector<32x512xf32>
    %153 = arith.select %151, %148, %152 : vector<32x512xi1>, vector<32x512xf32>
    %154 = arith.addf %146, %153 : vector<32x512xf32>
    %c7_i32 = arith.constant 7 : i32
    %155 = vector.broadcast %c7_i32 : i32 to vector<1x512xi32>
    %156 = arith.cmpi sge, %6, %155 : vector<1x512xi32>
    %c9_i32 = arith.constant 9 : i32
    %157 = vector.broadcast %c9_i32 : i32 to vector<1x512xi32>
    %158 = arith.cmpi slt, %6, %157 : vector<1x512xi32>
    %c7_i32_29 = arith.constant 7 : i32
    %159 = vector.broadcast %c7_i32_29 : i32 to vector<1x512xi32>
    %160 = arith.cmpi sge, %2, %159 : vector<1x512xi32>
    %c9_i32_30 = arith.constant 9 : i32
    %161 = vector.broadcast %c9_i32_30 : i32 to vector<1x512xi32>
    %162 = arith.cmpi slt, %2, %161 : vector<1x512xi32>
    %163 = vector.extract_strided_slice %15 {offsets = [736, 0], sizes = [32, 512], strides = [1, 1]} : vector<896x512xf32> to vector<32x512xf32>
    %164 = vector.extract_strided_slice %15 {offsets = [608, 0], sizes = [32, 512], strides = [1, 1]} : vector<896x512xf32> to vector<32x512xf32>
    %c119_i32 = arith.constant 119 : i32
    %165 = tpu.dynamic_rotate %164 by %c119_i32 dim 1 : vector<32x512xf32>, i32 -> vector<32x512xf32>
    %166 = arith.andi %156, %160 : vector<1x512xi1>
    %cst_31 = arith.constant 0.000000e+00 : f32
    %167 = vector.shape_cast %166 : vector<1x512xi1> to vector<1x512xi1>
    %168 = vector.broadcast %167 : vector<1x512xi1> to vector<32x512xi1>
    %169 = vector.broadcast %cst_31 : f32 to vector<32x512xf32>
    %170 = arith.select %168, %165, %169 : vector<32x512xi1>, vector<32x512xf32>
    %171 = arith.addf %163, %170 : vector<32x512xf32>
    %172 = vector.extract_strided_slice %15 {offsets = [640, 0], sizes = [32, 512], strides = [1, 1]} : vector<896x512xf32> to vector<32x512xf32>
    %c112_i32 = arith.constant 112 : i32
    %173 = tpu.dynamic_rotate %172 by %c112_i32 dim 1 : vector<32x512xf32>, i32 -> vector<32x512xf32>
    %cst_32 = arith.constant 0.000000e+00 : f32
    %174 = vector.shape_cast %156 : vector<1x512xi1> to vector<1x512xi1>
    %175 = vector.broadcast %174 : vector<1x512xi1> to vector<32x512xi1>
    %176 = vector.broadcast %cst_32 : f32 to vector<32x512xf32>
    %177 = arith.select %175, %173, %176 : vector<32x512xi1>, vector<32x512xf32>
    %178 = arith.addf %171, %177 : vector<32x512xf32>
    %179 = vector.extract_strided_slice %15 {offsets = [672, 0], sizes = [32, 512], strides = [1, 1]} : vector<896x512xf32> to vector<32x512xf32>
    %c105_i32 = arith.constant 105 : i32
    %180 = tpu.dynamic_rotate %179 by %c105_i32 dim 1 : vector<32x512xf32>, i32 -> vector<32x512xf32>
    %181 = arith.andi %156, %162 : vector<1x512xi1>
    %cst_33 = arith.constant 0.000000e+00 : f32
    %182 = vector.shape_cast %181 : vector<1x512xi1> to vector<1x512xi1>
    %183 = vector.broadcast %182 : vector<1x512xi1> to vector<32x512xi1>
    %184 = vector.broadcast %cst_33 : f32 to vector<32x512xf32>
    %185 = arith.select %183, %180, %184 : vector<32x512xi1>, vector<32x512xf32>
    %186 = arith.addf %178, %185 : vector<32x512xf32>
    %187 = vector.extract_strided_slice %15 {offsets = [704, 0], sizes = [32, 512], strides = [1, 1]} : vector<896x512xf32> to vector<32x512xf32>
    %c7_i32_34 = arith.constant 7 : i32
    %188 = tpu.dynamic_rotate %187 by %c7_i32_34 dim 1 : vector<32x512xf32>, i32 -> vector<32x512xf32>
    %cst_35 = arith.constant 0.000000e+00 : f32
    %189 = vector.shape_cast %160 : vector<1x512xi1> to vector<1x512xi1>
    %190 = vector.broadcast %189 : vector<1x512xi1> to vector<32x512xi1>
    %191 = vector.broadcast %cst_35 : f32 to vector<32x512xf32>
    %192 = arith.select %190, %188, %191 : vector<32x512xi1>, vector<32x512xf32>
    %193 = arith.addf %186, %192 : vector<32x512xf32>
    %194 = vector.extract_strided_slice %15 {offsets = [768, 0], sizes = [32, 512], strides = [1, 1]} : vector<896x512xf32> to vector<32x512xf32>
    %c505_i32 = arith.constant 505 : i32
    %195 = tpu.dynamic_rotate %194 by %c505_i32 dim 1 : vector<32x512xf32>, i32 -> vector<32x512xf32>
    %cst_36 = arith.constant 0.000000e+00 : f32
    %196 = vector.shape_cast %162 : vector<1x512xi1> to vector<1x512xi1>
    %197 = vector.broadcast %196 : vector<1x512xi1> to vector<32x512xi1>
    %198 = vector.broadcast %cst_36 : f32 to vector<32x512xf32>
    %199 = arith.select %197, %195, %198 : vector<32x512xi1>, vector<32x512xf32>
    %200 = arith.addf %193, %199 : vector<32x512xf32>
    %201 = vector.extract_strided_slice %15 {offsets = [800, 0], sizes = [32, 512], strides = [1, 1]} : vector<896x512xf32> to vector<32x512xf32>
    %c407_i32 = arith.constant 407 : i32
    %202 = tpu.dynamic_rotate %201 by %c407_i32 dim 1 : vector<32x512xf32>, i32 -> vector<32x512xf32>
    %203 = arith.andi %158, %160 : vector<1x512xi1>
    %cst_37 = arith.constant 0.000000e+00 : f32
    %204 = vector.shape_cast %203 : vector<1x512xi1> to vector<1x512xi1>
    %205 = vector.broadcast %204 : vector<1x512xi1> to vector<32x512xi1>
    %206 = vector.broadcast %cst_37 : f32 to vector<32x512xf32>
    %207 = arith.select %205, %202, %206 : vector<32x512xi1>, vector<32x512xf32>
    %208 = arith.addf %200, %207 : vector<32x512xf32>
    %209 = vector.extract_strided_slice %15 {offsets = [832, 0], sizes = [32, 512], strides = [1, 1]} : vector<896x512xf32> to vector<32x512xf32>
    %c400_i32 = arith.constant 400 : i32
    %210 = tpu.dynamic_rotate %209 by %c400_i32 dim 1 : vector<32x512xf32>, i32 -> vector<32x512xf32>
    %cst_38 = arith.constant 0.000000e+00 : f32
    %211 = vector.shape_cast %158 : vector<1x512xi1> to vector<1x512xi1>
    %212 = vector.broadcast %211 : vector<1x512xi1> to vector<32x512xi1>
    %213 = vector.broadcast %cst_38 : f32 to vector<32x512xf32>
    %214 = arith.select %212, %210, %213 : vector<32x512xi1>, vector<32x512xf32>
    %215 = arith.addf %208, %214 : vector<32x512xf32>
    %216 = vector.extract_strided_slice %15 {offsets = [864, 0], sizes = [32, 512], strides = [1, 1]} : vector<896x512xf32> to vector<32x512xf32>
    %c393_i32 = arith.constant 393 : i32
    %217 = tpu.dynamic_rotate %216 by %c393_i32 dim 1 : vector<32x512xf32>, i32 -> vector<32x512xf32>
    %218 = arith.andi %158, %162 : vector<1x512xi1>
    %cst_39 = arith.constant 0.000000e+00 : f32
    %219 = vector.shape_cast %218 : vector<1x512xi1> to vector<1x512xi1>
    %220 = vector.broadcast %219 : vector<1x512xi1> to vector<32x512xi1>
    %221 = vector.broadcast %cst_39 : f32 to vector<32x512xf32>
    %222 = arith.select %220, %217, %221 : vector<32x512xi1>, vector<32x512xf32>
    %223 = arith.addf %215, %222 : vector<32x512xf32>
    %224 = tpu.concatenate %16, %85, %154, %223 in 0 : vector<32x512xf32>, vector<32x512xf32>, vector<32x512xf32>, vector<32x512xf32> -> vector<128x512xf32>
    %cst_40 = arith.constant dense<0.000000e+00> : vector<128xf32>
    %225 = vector.multi_reduction <add>, %224, %cst_40 [1] : vector<128x512xf32> to vector<128xf32>
    %226 = vector.shape_cast %225 : vector<128xf32> to vector<128x1xf32>
    %cst_41 = arith.constant 0.001953125 : f32
    %227 = vector.broadcast %cst_41 : f32 to vector<128x1xf32>
    %228 = arith.mulf %226, %227 : vector<128x1xf32>
    %229 = arith.mulf %224, %224 : vector<128x512xf32>
    %cst_42 = arith.constant dense<0.000000e+00> : vector<128xf32>
    %230 = vector.multi_reduction <add>, %229, %cst_42 [1] : vector<128x512xf32> to vector<128xf32>
    %231 = vector.shape_cast %230 : vector<128xf32> to vector<128x1xf32>
    %cst_43 = arith.constant 0.001953125 : f32
    %232 = vector.broadcast %cst_43 : f32 to vector<128x1xf32>
    %233 = arith.mulf %231, %232 : vector<128x1xf32>
    %234 = arith.mulf %228, %228 : vector<128x1xf32>
    %235 = arith.subf %233, %234 : vector<128x1xf32>
    %c0_44 = arith.constant 0 : index
    %c0_45 = arith.constant 0 : index
    %236 = vector.load %arg2[%c0_44, %c0_45] : memref<128x1xf32, #tpu.memory_space<vmem>>, vector<128x1xf32>
    %cst_46 = arith.constant 9.99999974E-6 : f32
    %237 = vector.broadcast %cst_46 : f32 to vector<128x1xf32>
    %238 = arith.addf %235, %237 : vector<128x1xf32>
    %239 = math.rsqrt %238 : vector<128x1xf32>
    %240 = arith.mulf %236, %239 : vector<128x1xf32>
    %c0_47 = arith.constant 0 : index
    %c0_48 = arith.constant 0 : index
    %241 = vector.load %arg3[%c0_47, %c0_48] : memref<128x1xf32, #tpu.memory_space<vmem>>, vector<128x1xf32>
    %242 = arith.mulf %228, %240 : vector<128x1xf32>
    %243 = arith.subf %241, %242 : vector<128x1xf32>
    %244 = vector.broadcast %240 : vector<128x1xf32> to vector<128x512xf32>
    %245 = arith.mulf %224, %244 : vector<128x512xf32>
    %246 = vector.broadcast %243 : vector<128x1xf32> to vector<128x512xf32>
    %247 = arith.addf %245, %246 : vector<128x512xf32>
    %cst_49 = arith.constant 0.000000e+00 : f32
    %248 = vector.broadcast %cst_49 : f32 to vector<128x512xf32>
    %249 = arith.maximumf %247, %248 : vector<128x512xf32>
    %250 = vector.extract_strided_slice %249 {offsets = [0, 0], sizes = [128, 256], strides = [1, 1]} : vector<128x512xf32> to vector<128x256xf32>
    %c0_50 = arith.constant 0 : index
    %c0_51 = arith.constant 0 : index
    %c0_52 = arith.constant 0 : index
    %251 = vector.load %arg4[%c0_50, %c0_51, %c0_52] : memref<2x128x256xf32, #tpu.memory_space<vmem>>, vector<1x128x256xf32>
    %252 = vector.shape_cast %251 : vector<1x128x256xf32> to vector<128x256xf32>
    %253 = vector.shape_cast %250 : vector<128x256xf32> to vector<1x128x256xf32>
    tpu.vector_store %arg4[%c0_50, %c0_51, %c0_52], %253 {strides = array<i32>} : memref<2x128x256xf32, #tpu.memory_space<vmem>>, vector<1x128x256xf32>,
    %254 = vector.extract_strided_slice %249 {offsets = [0, 256], sizes = [128, 256], strides = [1, 1]} : vector<128x512xf32> to vector<128x256xf32>
    %c1_53 = arith.constant 1 : index
    %c0_54 = arith.constant 0 : index
    %c0_55 = arith.constant 0 : index
    %255 = vector.load %arg4[%c1_53, %c0_54, %c0_55] : memref<2x128x256xf32, #tpu.memory_space<vmem>>, vector<1x128x256xf32>
    %256 = vector.shape_cast %255 : vector<1x128x256xf32> to vector<128x256xf32>
    %257 = vector.shape_cast %254 : vector<128x256xf32> to vector<1x128x256xf32>
    tpu.vector_store %arg4[%c1_53, %c0_54, %c0_55], %257 {strides = array<i32>} : memref<2x128x256xf32, #tpu.memory_space<vmem>>, vector<1x128x256xf32>,
    return
  }
}

</mosaic_0001>

<llo_original>
// kernel: cpfe_forward.1
$region0: #{cpfe_forward.1}
  #allocation0 [shape = 'u32[]', space=smem, size = 0x4, offset = 0x4, fixed_abs, tag = 'smem constant byte address 0x4 - core index']
  #allocation1 [shape = 'u32[144,128]{1,0:T(1,128)}', space=vmem, size = 0x12000, scoped, tag = 'internal scratch']
  %s0 = inlined_call_operand.vmem [shape: f32[2,256,256], index: 0, kind: input, shape index: {}]
  %s1 = inlined_call_operand.vmem [shape: bf16[896,256], index: 1, kind: input, shape index: {}]
  %s2 = inlined_call_operand.vmem [shape: f32[128,1], index: 2, kind: input, shape index: {}]
  %s3 = inlined_call_operand.vmem [shape: f32[128,1], index: 3, kind: input, shape index: {}]
  %s4 = inlined_call_operand.vmem [shape: f32[2,128,256], index: 4, kind: output, shape index: {}]
  %s5 = sld [smem:[#allocation0]]
  $region26: #{cpfe_forward.1} parent=0
    _
  %s7 = ssub.s32 1, %s5
  %s8 = scalar_select 0, %s7, %s5
  // Predicated region
  $region2: #{cpfe_forward.1} parent=0 // pred_check
    _
  $region3: #{cpfe_forward.1} parent=0 // pred_check_branch
    %10 = sbr.rel (0) target = $region5
  $region4: #{cpfe_forward.1} parent=0 // pred_region
    _
  $region5: #{cpfe_forward.1} parent=0 // pred_fallthru
    _
  // Predicated region
  $region6: #{cpfe_forward.1} parent=0 // pred_check
    _
  $region7: #{cpfe_forward.1} parent=0 // pred_check_branch
    %12 = sbr.rel (0) target = $region9
  $region8: #{cpfe_forward.1} parent=0 // pred_region
    _
  $region9: #{cpfe_forward.1} parent=0 // pred_fallthru
    _
  // Predicated region
  $region10: #{cpfe_forward.1} parent=0 // pred_check
    _
  $region11: #{cpfe_forward.1} parent=0 // pred_check_branch
    %14 = sbr.rel (0) target = $region13
  $region12: #{cpfe_forward.1} parent=0 // pred_region
    _
  $region13: #{cpfe_forward.1} parent=0 // pred_fallthru
    _
  // Predicated region
  $region14: #{cpfe_forward.1} parent=0 // pred_check
    _
  $region15: #{cpfe_forward.1} parent=0 // pred_check_branch
    %16 = sbr.rel (0) target = $region17
  $region16: #{cpfe_forward.1} parent=0 // pred_region
    _
  $region17: #{cpfe_forward.1} parent=0 // pred_fallthru
    _
  %v17 = vlaneseq
  %v18 = vand.u32 %v17, 127
  %v19 = vadd.s32 %v18, 128
  %v20 = vadd.s32 %v18, 256
  %v21 = vadd.s32 %v18, 384
  %v22 = vand.u32 %v18, 15
  %v23 = vand.u32 %v19, 15
  %v24 = vand.u32 %v20, 15
  %v25 = vand.u32 %v21, 15
  %v26 = vshra.s32 %v18, 4
  %v27 = vshra.s32 %v19, 4
  %v28 = vshra.s32 %v20, 4
  %v29 = vshra.s32 %v21, 4
  %v30 = vand.u32 %v26, 15
  %v31 = vand.u32 %v27, 15
  %v32 = vand.u32 %v28, 15
  %v33 = vand.u32 %v29, 15
  %v34 = vld [vmem:[%s0] sm:$0xff]
  %v35 = vld [vmem:[%s0 + $0x8] sm:$0xff]
  %v36 = vld [vmem:[%s0 + $0x10] sm:$0xff]
  %v37 = vld [vmem:[%s0 + $0x18] sm:$0xff]
  %v38 = vld [vmem:[%s0 + $0x20] sm:$0xff]
  %v39 = vld [vmem:[%s0 + $0x28] sm:$0xff]
  %v40 = vld [vmem:[%s0 + $0x30] sm:$0xff]
  %v41 = vld [vmem:[%s0 + $0x38] sm:$0xff]
  %v42 = vld [vmem:[%s0 + $0x40] sm:$0xff]
  %v43 = vld [vmem:[%s0 + $0x48] sm:$0xff]
  %v44 = vld [vmem:[%s0 + $0x50] sm:$0xff]
  %v45 = vld [vmem:[%s0 + $0x58] sm:$0xff]
  %v46 = vld [vmem:[%s0 + $0x60] sm:$0xff]
  %v47 = vld [vmem:[%s0 + $0x68] sm:$0xff]
  %v48 = vld [vmem:[%s0 + $0x70] sm:$0xff]
  %v49 = vld [vmem:[%s0 + $0x78] sm:$0xff]
  %v50 = vld [vmem:[%s0 + $0x80] sm:$0xff]
  %v51 = vld [vmem:[%s0 + $0x88] sm:$0xff]
  %v52 = vld [vmem:[%s0 + $0x90] sm:$0xff]
  %v53 = vld [vmem:[%s0 + $0x98] sm:$0xff]
  %v54 = vld [vmem:[%s0 + $0xa0] sm:$0xff]
  %v55 = vld [vmem:[%s0 + $0xa8] sm:$0xff]
  %v56 = vld [vmem:[%s0 + $0xb0] sm:$0xff]
  %v57 = vld [vmem:[%s0 + $0xb8] sm:$0xff]
  %v58 = vld [vmem:[%s0 + $0xc0] sm:$0xff]
  %v59 = vld [vmem:[%s0 + $0xc8] sm:$0xff]
  %v60 = vld [vmem:[%s0 + $0xd0] sm:$0xff]
  %v61 = vld [vmem:[%s0 + $0xd8] sm:$0xff]
  %v62 = vld [vmem:[%s0 + $0xe0] sm:$0xff]
  %v63 = vld [vmem:[%s0 + $0xe8] sm:$0xff]
  %v64 = vld [vmem:[%s0 + $0xf0] sm:$0xff]
  %v65 = vld [vmem:[%s0 + $0xf8] sm:$0xff]
  %v66 = vld [vmem:[%s0 + $0x100] sm:$0xff]
  %v67 = vld [vmem:[%s0 + $0x108] sm:$0xff]
  %v68 = vld [vmem:[%s0 + $0x110] sm:$0xff]
  %v69 = vld [vmem:[%s0 + $0x118] sm:$0xff]
  %v70 = vld [vmem:[%s0 + $0x120] sm:$0xff]
  %v71 = vld [vmem:[%s0 + $0x128] sm:$0xff]
  %v72 = vld [vmem:[%s0 + $0x130] sm:$0xff]
  %v73 = vld [vmem:[%s0 + $0x138] sm:$0xff]
  %v74 = vld [vmem:[%s0 + $0x140] sm:$0xff]
  %v75 = vld [vmem:[%s0 + $0x148] sm:$0xff]
  %v76 = vld [vmem:[%s0 + $0x150] sm:$0xff]
  %v77 = vld [vmem:[%s0 + $0x158] sm:$0xff]
  %v78 = vld [vmem:[%s0 + $0x160] sm:$0xff]
  %v79 = vld [vmem:[%s0 + $0x168] sm:$0xff]
  %v80 = vld [vmem:[%s0 + $0x170] sm:$0xff]
  %v81 = vld [vmem:[%s0 + $0x178] sm:$0xff]
  %v82 = vld [vmem:[%s0 + $0x180] sm:$0xff]
  %v83 = vld [vmem:[%s0 + $0x188] sm:$0xff]
  %v84 = vld [vmem:[%s0 + $0x190] sm:$0xff]
  %v85 = vld [vmem:[%s0 + $0x198] sm:$0xff]
  %v86 = vld [vmem:[%s0 + $0x1a0] sm:$0xff]
  %v87 = vld [vmem:[%s0 + $0x1a8] sm:$0xff]
  %v88 = vld [vmem:[%s0 + $0x1b0] sm:$0xff]
  %v89 = vld [vmem:[%s0 + $0x1b8] sm:$0xff]
  %v90 = vld [vmem:[%s0 + $0x1c0] sm:$0xff]
  %v91 = vld [vmem:[%s0 + $0x1c8] sm:$0xff]
  %v92 = vld [vmem:[%s0 + $0x1d0] sm:$0xff]
  %v93 = vld [vmem:[%s0 + $0x1d8] sm:$0xff]
  %v94 = vld [vmem:[%s0 + $0x1e0] sm:$0xff]
  %v95 = vld [vmem:[%s0 + $0x1e8] sm:$0xff]
  %v96 = vld [vmem:[%s0 + $0x1f0] sm:$0xff]
  %v97 = vld [vmem:[%s0 + $0x1f8] sm:$0xff]
  %v98 = vpack.c.bf16 %v36, %v34
  %v99 = vpack.c.bf16 %v37, %v35
  %v100 = vpack.c.bf16 %v40, %v38
  %v101 = vpack.c.bf16 %v41, %v39
  %v102 = vpack.c.bf16 %v44, %v42
  %v103 = vpack.c.bf16 %v45, %v43
  %v104 = vpack.c.bf16 %v48, %v46
  %v105 = vpack.c.bf16 %v49, %v47
  %v106 = vpack.c.bf16 %v52, %v50
  %v107 = vpack.c.bf16 %v53, %v51
  %v108 = vpack.c.bf16 %v56, %v54
  %v109 = vpack.c.bf16 %v57, %v55
  %v110 = vpack.c.bf16 %v60, %v58
  %v111 = vpack.c.bf16 %v61, %v59
  %v112 = vpack.c.bf16 %v64, %v62
  %v113 = vpack.c.bf16 %v65, %v63
  %v114 = vpack.c.bf16 %v68, %v66
  %v115 = vpack.c.bf16 %v69, %v67
  %v116 = vpack.c.bf16 %v72, %v70
  %v117 = vpack.c.bf16 %v73, %v71
  %v118 = vpack.c.bf16 %v76, %v74
  %v119 = vpack.c.bf16 %v77, %v75
  %v120 = vpack.c.bf16 %v80, %v78
  %v121 = vpack.c.bf16 %v81, %v79
  %v122 = vpack.c.bf16 %v84, %v82
  %v123 = vpack.c.bf16 %v85, %v83
  %v124 = vpack.c.bf16 %v88, %v86
  %v125 = vpack.c.bf16 %v89, %v87
  %v126 = vpack.c.bf16 %v92, %v90
  %v127 = vpack.c.bf16 %v93, %v91
  %v128 = vpack.c.bf16 %v96, %v94
  %v129 = vpack.c.bf16 %v97, %v95
  %s130 = scalar_lea.vmem %s0, 512
  %v131 = vld [vmem:[%s130] sm:$0xff]
  %v132 = vld [vmem:[%s130 + $0x8] sm:$0xff]
  %v133 = vld [vmem:[%s130 + $0x10] sm:$0xff]
  %v134 = vld [vmem:[%s130 + $0x18] sm:$0xff]
  %v135 = vld [vmem:[%s130 + $0x20] sm:$0xff]
  %v136 = vld [vmem:[%s130 + $0x28] sm:$0xff]
  %v137 = vld [vmem:[%s130 + $0x30] sm:$0xff]
  %v138 = vld [vmem:[%s130 + $0x38] sm:$0xff]
  %v139 = vld [vmem:[%s130 + $0x40] sm:$0xff]
  %v140 = vld [vmem:[%s130 + $0x48] sm:$0xff]
  %v141 = vld [vmem:[%s130 + $0x50] sm:$0xff]
  %v142 = vld [vmem:[%s130 + $0x58] sm:$0xff]
  %v143 = vld [vmem:[%s130 + $0x60] sm:$0xff]
  %v144 = vld [vmem:[%s130 + $0x68] sm:$0xff]
  %v145 = vld [vmem:[%s130 + $0x70] sm:$0xff]
  %v146 = vld [vmem:[%s130 + $0x78] sm:$0xff]
  %v147 = vld [vmem:[%s130 + $0x80] sm:$0xff]
  %v148 = vld [vmem:[%s130 + $0x88] sm:$0xff]
  %v149 = vld [vmem:[%s130 + $0x90] sm:$0xff]
  %v150 = vld [vmem:[%s130 + $0x98] sm:$0xff]
  %v151 = vld [vmem:[%s130 + $0xa0] sm:$0xff]
  %v152 = vld [vmem:[%s130 + $0xa8] sm:$0xff]
  %v153 = vld [vmem:[%s130 + $0xb0] sm:$0xff]
  %v154 = vld [vmem:[%s130 + $0xb8] sm:$0xff]
  %v155 = vld [vmem:[%s130 + $0xc0] sm:$0xff]
  %v156 = vld [vmem:[%s130 + $0xc8] sm:$0xff]
  %v157 = vld [vmem:[%s130 + $0xd0] sm:$0xff]
  %v158 = vld [vmem:[%s130 + $0xd8] sm:$0xff]
  %v159 = vld [vmem:[%s130 + $0xe0] sm:$0xff]
  %v160 = vld [vmem:[%s130 + $0xe8] sm:$0xff]
  %v161 = vld [vmem:[%s130 + $0xf0] sm:$0xff]
  %v162 = vld [vmem:[%s130 + $0xf8] sm:$0xff]
  %v163 = vld [vmem:[%s130 + $0x100] sm:$0xff]
  %v164 = vld [vmem:[%s130 + $0x108] sm:$0xff]
  %v165 = vld [vmem:[%s130 + $0x110] sm:$0xff]
  %v166 = vld [vmem:[%s130 + $0x118] sm:$0xff]
  %v167 = vld [vmem:[%s130 + $0x120] sm:$0xff]
  %v168 = vld [vmem:[%s130 + $0x128] sm:$0xff]
  %v169 = vld [vmem:[%s130 + $0x130] sm:$0xff]
  %v170 = vld [vmem:[%s130 + $0x138] sm:$0xff]
  %v171 = vld [vmem:[%s130 + $0x140] sm:$0xff]
  %v172 = vld [vmem:[%s130 + $0x148] sm:$0xff]
  %v173 = vld [vmem:[%s130 + $0x150] sm:$0xff]
  %v174 = vld [vmem:[%s130 + $0x158] sm:$0xff]
  %v175 = vld [vmem:[%s130 + $0x160] sm:$0xff]
  %v176 = vld [vmem:[%s130 + $0x168] sm:$0xff]
  %v177 = vld [vmem:[%s130 + $0x170] sm:$0xff]
  %v178 = vld [vmem:[%s130 + $0x178] sm:$0xff]
  %v179 = vld [vmem:[%s130 + $0x180] sm:$0xff]
  %v180 = vld [vmem:[%s130 + $0x188] sm:$0xff]
  %v181 = vld [vmem:[%s130 + $0x190] sm:$0xff]
  %v182 = vld [vmem:[%s130 + $0x198] sm:$0xff]
  %v183 = vld [vmem:[%s130 + $0x1a0] sm:$0xff]
  %v184 = vld [vmem:[%s130 + $0x1a8] sm:$0xff]
  %v185 = vld [vmem:[%s130 + $0x1b0] sm:$0xff]
  %v186 = vld [vmem:[%s130 + $0x1b8] sm:$0xff]
  %v187 = vld [vmem:[%s130 + $0x1c0] sm:$0xff]
  %v188 = vld [vmem:[%s130 + $0x1c8] sm:$0xff]
  %v189 = vld [vmem:[%s130 + $0x1d0] sm:$0xff]
  %v190 = vld [vmem:[%s130 + $0x1d8] sm:$0xff]
  %v191 = vld [vmem:[%s130 + $0x1e0] sm:$0xff]
  %v192 = vld [vmem:[%s130 + $0x1e8] sm:$0xff]
  %v193 = vld [vmem:[%s130 + $0x1f0] sm:$0xff]
  %v194 = vld [vmem:[%s130 + $0x1f8] sm:$0xff]
  %v195 = vpack.c.bf16 %v133, %v131
  %v196 = vpack.c.bf16 %v134, %v132
  %v197 = vpack.c.bf16 %v137, %v135
  %v198 = vpack.c.bf16 %v138, %v136
  %v199 = vpack.c.bf16 %v141, %v139
  %v200 = vpack.c.bf16 %v142, %v140
  %v201 = vpack.c.bf16 %v145, %v143
  %v202 = vpack.c.bf16 %v146, %v144
  %v203 = vpack.c.bf16 %v149, %v147
  %v204 = vpack.c.bf16 %v150, %v148
  %v205 = vpack.c.bf16 %v153, %v151
  %v206 = vpack.c.bf16 %v154, %v152
  %v207 = vpack.c.bf16 %v157, %v155
  %v208 = vpack.c.bf16 %v158, %v156
  %v209 = vpack.c.bf16 %v161, %v159
  %v210 = vpack.c.bf16 %v162, %v160
  %v211 = vpack.c.bf16 %v165, %v163
  %v212 = vpack.c.bf16 %v166, %v164
  %v213 = vpack.c.bf16 %v169, %v167
  %v214 = vpack.c.bf16 %v170, %v168
  %v215 = vpack.c.bf16 %v173, %v171
  %v216 = vpack.c.bf16 %v174, %v172
  %v217 = vpack.c.bf16 %v177, %v175
  %v218 = vpack.c.bf16 %v178, %v176
  %v219 = vpack.c.bf16 %v181, %v179
  %v220 = vpack.c.bf16 %v182, %v180
  %v221 = vpack.c.bf16 %v185, %v183
  %v222 = vpack.c.bf16 %v186, %v184
  %v223 = vpack.c.bf16 %v189, %v187
  %v224 = vpack.c.bf16 %v190, %v188
  %v225 = vpack.c.bf16 %v193, %v191
  %v226 = vpack.c.bf16 %v194, %v192
  %v227 = vld [vmem:[%s1] sm:$0xff]
  %v228 = vld [vmem:[%s1 + $0x8] sm:$0xff]
  %v229 = vld [vmem:[%s1 + $0x10] sm:$0xff]
  %v230 = vld [vmem:[%s1 + $0x18] sm:$0xff]
  %v231 = vld [vmem:[%s1 + $0x20] sm:$0xff]
  %v232 = vld [vmem:[%s1 + $0x28] sm:$0xff]
  %v233 = vld [vmem:[%s1 + $0x30] sm:$0xff]
  %v234 = vld [vmem:[%s1 + $0x38] sm:$0xff]
  %v235 = vld [vmem:[%s1 + $0x40] sm:$0xff]
  %v236 = vld [vmem:[%s1 + $0x48] sm:$0xff]
  %v237 = vld [vmem:[%s1 + $0x50] sm:$0xff]
  %v238 = vld [vmem:[%s1 + $0x58] sm:$0xff]
  %v239 = vld [vmem:[%s1 + $0x60] sm:$0xff]
  %v240 = vld [vmem:[%s1 + $0x68] sm:$0xff]
  %v241 = vld [vmem:[%s1 + $0x70] sm:$0xff]
  %v242 = vld [vmem:[%s1 + $0x78] sm:$0xff]
  %v243 = vld [vmem:[%s1 + $0x80] sm:$0xff]
  %v244 = vld [vmem:[%s1 + $0x88] sm:$0xff]
  %v245 = vld [vmem:[%s1 + $0x90] sm:$0xff]
  %v246 = vld [vmem:[%s1 + $0x98] sm:$0xff]
  %v247 = vld [vmem:[%s1 + $0xa0] sm:$0xff]
  %v248 = vld [vmem:[%s1 + $0xa8] sm:$0xff]
  %v249 = vld [vmem:[%s1 + $0xb0] sm:$0xff]
  %v250 = vld [vmem:[%s1 + $0xb8] sm:$0xff]
  %v251 = vld [vmem:[%s1 + $0xc0] sm:$0xff]
  %v252 = vld [vmem:[%s1 + $0xc8] sm:$0xff]
  %v253 = vld [vmem:[%s1 + $0xd0] sm:$0xff]
  %v254 = vld [vmem:[%s1 + $0xd8] sm:$0xff]
  %v255 = vld [vmem:[%s1 + $0xe0] sm:$0xff]
  %v256 = vld [vmem:[%s1 + $0xe8] sm:$0xff]
  %v257 = vld [vmem:[%s1 + $0xf0] sm:$0xff]
  %v258 = vld [vmem:[%s1 + $0xf8] sm:$0xff]
  %v259 = vld [vmem:[%s1 + $0x100] sm:$0xff]
  %v260 = vld [vmem:[%s1 + $0x108] sm:$0xff]
  %v261 = vld [vmem:[%s1 + $0x110] sm:$0xff]
  %v262 = vld [vmem:[%s1 + $0x118] sm:$0xff]
  %v263 = vld [vmem:[%s1 + $0x120] sm:$0xff]
  %v264 = vld [vmem:[%s1 + $0x128] sm:$0xff]
  %v265 = vld [vmem:[%s1 + $0x130] sm:$0xff]
  %v266 = vld [vmem:[%s1 + $0x138] sm:$0xff]
  %v267 = vld [vmem:[%s1 + $0x140] sm:$0xff]
  %v268 = vld [vmem:[%s1 + $0x148] sm:$0xff]
  %v269 = vld [vmem:[%s1 + $0x150] sm:$0xff]
  %v270 = vld [vmem:[%s1 + $0x158] sm:$0xff]
  %v271 = vld [vmem:[%s1 + $0x160] sm:$0xff]
  %v272 = vld [vmem:[%s1 + $0x168] sm:$0xff]
  %v273 = vld [vmem:[%s1 + $0x170] sm:$0xff]
  %v274 = vld [vmem:[%s1 + $0x178] sm:$0xff]
  %v275 = vld [vmem:[%s1 + $0x180] sm:$0xff]
  %v276 = vld [vmem:[%s1 + $0x188] sm:$0xff]
  %v277 = vld [vmem:[%s1 + $0x190] sm:$0xff]
  %v278 = vld [vmem:[%s1 + $0x198] sm:$0xff]
  %v279 = vld [vmem:[%s1 + $0x1a0] sm:$0xff]
  %v280 = vld [vmem:[%s1 + $0x1a8] sm:$0xff]
  %v281 = vld [vmem:[%s1 + $0x1b0] sm:$0xff]
  %v282 = vld [vmem:[%s1 + $0x1b8] sm:$0xff]
  %v283 = vld [vmem:[%s1 + $0x1c0] sm:$0xff]
  %v284 = vld [vmem:[%s1 + $0x1c8] sm:$0xff]
  %v285 = vld [vmem:[%s1 + $0x1d0] sm:$0xff]
  %v286 = vld [vmem:[%s1 + $0x1d8] sm:$0xff]
  %v287 = vld [vmem:[%s1 + $0x1e0] sm:$0xff]
  %v288 = vld [vmem:[%s1 + $0x1e8] sm:$0xff]
  %v289 = vld [vmem:[%s1 + $0x1f0] sm:$0xff]
  %v290 = vld [vmem:[%s1 + $0x1f8] sm:$0xff]
  %v291 = vld [vmem:[%s1 + $0x200] sm:$0xff]
  %v292 = vld [vmem:[%s1 + $0x208] sm:$0xff]
  %v293 = vld [vmem:[%s1 + $0x210] sm:$0xff]
  %v294 = vld [vmem:[%s1 + $0x218] sm:$0xff]
  %v295 = vld [vmem:[%s1 + $0x220] sm:$0xff]
  %v296 = vld [vmem:[%s1 + $0x228] sm:$0xff]
  %v297 = vld [vmem:[%s1 + $0x230] sm:$0xff]
  %v298 = vld [vmem:[%s1 + $0x238] sm:$0xff]
  %v299 = vld [vmem:[%s1 + $0x240] sm:$0xff]
  %v300 = vld [vmem:[%s1 + $0x248] sm:$0xff]
  %v301 = vld [vmem:[%s1 + $0x250] sm:$0xff]
  %v302 = vld [vmem:[%s1 + $0x258] sm:$0xff]
  %v303 = vld [vmem:[%s1 + $0x260] sm:$0xff]
  %v304 = vld [vmem:[%s1 + $0x268] sm:$0xff]
  %v305 = vld [vmem:[%s1 + $0x270] sm:$0xff]
  %v306 = vld [vmem:[%s1 + $0x278] sm:$0xff]
  %v307 = vld [vmem:[%s1 + $0x280] sm:$0xff]
  %v308 = vld [vmem:[%s1 + $0x288] sm:$0xff]
  %v309 = vld [vmem:[%s1 + $0x290] sm:$0xff]
  %v310 = vld [vmem:[%s1 + $0x298] sm:$0xff]
  %v311 = vld [vmem:[%s1 + $0x2a0] sm:$0xff]
  %v312 = vld [vmem:[%s1 + $0x2a8] sm:$0xff]
  %v313 = vld [vmem:[%s1 + $0x2b0] sm:$0xff]
  %v314 = vld [vmem:[%s1 + $0x2b8] sm:$0xff]
  %v315 = vld [vmem:[%s1 + $0x2c0] sm:$0xff]
  %v316 = vld [vmem:[%s1 + $0x2c8] sm:$0xff]
  %v317 = vld [vmem:[%s1 + $0x2d0] sm:$0xff]
  %v318 = vld [vmem:[%s1 + $0x2d8] sm:$0xff]
  %v319 = vld [vmem:[%s1 + $0x2e0] sm:$0xff]
  %v320 = vld [vmem:[%s1 + $0x2e8] sm:$0xff]
  %v321 = vld [vmem:[%s1 + $0x2f0] sm:$0xff]
  %v322 = vld [vmem:[%s1 + $0x2f8] sm:$0xff]
  %v323 = vld [vmem:[%s1 + $0x300] sm:$0xff]
  %v324 = vld [vmem:[%s1 + $0x308] sm:$0xff]
  %v325 = vld [vmem:[%s1 + $0x310] sm:$0xff]
  %v326 = vld [vmem:[%s1 + $0x318] sm:$0xff]
  %v327 = vld [vmem:[%s1 + $0x320] sm:$0xff]
  %v328 = vld [vmem:[%s1 + $0x328] sm:$0xff]
  %v329 = vld [vmem:[%s1 + $0x330] sm:$0xff]
  %v330 = vld [vmem:[%s1 + $0x338] sm:$0xff]
  %v331 = vld [vmem:[%s1 + $0x340] sm:$0xff]
  %v332 = vld [vmem:[%s1 + $0x348] sm:$0xff]
  %v333 = vld [vmem:[%s1 + $0x350] sm:$0xff]
  %v334 = vld [vmem:[%s1 + $0x358] sm:$0xff]
  %v335 = vld [vmem:[%s1 + $0x360] sm:$0xff]
  %v336 = vld [vmem:[%s1 + $0x368] sm:$0xff]
  %v337 = vld [vmem:[%s1 + $0x370] sm:$0xff]
  %v338 = vld [vmem:[%s1 + $0x378] sm:$0xff]
  %v451 = vunpack.c.l.b16 %v227
  %v452 = vunpack.c.h.b16 %v227
  %v453 = vunpack.c.l.b16 %v228
  %v454 = vunpack.c.h.b16 %v228
  %v455 = vunpack.c.l.b16 %v229
  %v456 = vunpack.c.h.b16 %v229
  %v457 = vunpack.c.l.b16 %v230
  %v458 = vunpack.c.h.b16 %v230
  %v459 = vunpack.c.l.b16 %v231
  %v460 = vunpack.c.h.b16 %v231
  %v461 = vunpack.c.l.b16 %v232
  %v462 = vunpack.c.h.b16 %v232
  %v463 = vunpack.c.l.b16 %v233
  %v464 = vunpack.c.h.b16 %v233
  %v465 = vunpack.c.l.b16 %v234
  %v466 = vunpack.c.h.b16 %v234
  %v467 = vunpack.c.l.b16 %v235
  %v468 = vunpack.c.h.b16 %v235
  %v469 = vunpack.c.l.b16 %v236
  %v470 = vunpack.c.h.b16 %v236
  %v471 = vunpack.c.l.b16 %v237
  %v472 = vunpack.c.h.b16 %v237
  %v473 = vunpack.c.l.b16 %v238
  %v474 = vunpack.c.h.b16 %v238
  %v475 = vunpack.c.l.b16 %v239
  %v476 = vunpack.c.h.b16 %v239
  %v477 = vunpack.c.l.b16 %v240
  %v478 = vunpack.c.h.b16 %v240
  %v479 = vunpack.c.l.b16 %v241
  %v480 = vunpack.c.h.b16 %v241
  %v481 = vunpack.c.l.b16 %v242
  %v482 = vunpack.c.h.b16 %v242
  %v483 = vunpack.c.l.b16 %v243
  %v484 = vunpack.c.h.b16 %v243
  %v485 = vunpack.c.l.b16 %v244
  %v486 = vunpack.c.h.b16 %v244
  %v487 = vunpack.c.l.b16 %v245
  %v488 = vunpack.c.h.b16 %v245
  %v489 = vunpack.c.l.b16 %v246
  %v490 = vunpack.c.h.b16 %v246
  %v491 = vunpack.c.l.b16 %v247
  %v492 = vunpack.c.h.b16 %v247
  %v493 = vunpack.c.l.b16 %v248
  %v494 = vunpack.c.h.b16 %v248
  %v495 = vunpack.c.l.b16 %v249
  %v496 = vunpack.c.h.b16 %v249
  %v497 = vunpack.c.l.b16 %v250
  %v498 = vunpack.c.h.b16 %v250
  %v499 = vunpack.c.l.b16 %v251
  %v500 = vunpack.c.h.b16 %v251
  %v501 = vunpack.c.l.b16 %v252
  %v502 = vunpack.c.h.b16 %v252
  %v503 = vunpack.c.l.b16 %v253
  %v504 = vunpack.c.h.b16 %v253
  %v505 = vunpack.c.l.b16 %v254
  %v506 = vunpack.c.h.b16 %v254
  %v507 = vunpack.c.l.b16 %v255
  %v508 = vunpack.c.h.b16 %v255
  %v509 = vunpack.c.l.b16 %v256
  %v510 = vunpack.c.h.b16 %v256
  %v511 = vunpack.c.l.b16 %v257
  %v512 = vunpack.c.h.b16 %v257
  %v513 = vunpack.c.l.b16 %v258
  %v514 = vunpack.c.h.b16 %v258
  %v515 = vunpack.c.l.b16 %v259
  %v516 = vunpack.c.h.b16 %v259
  %v517 = vunpack.c.l.b16 %v260
  %v518 = vunpack.c.h.b16 %v260
  %v519 = vunpack.c.l.b16 %v261
  %v520 = vunpack.c.h.b16 %v261
  %v521 = vunpack.c.l.b16 %v262
  %v522 = vunpack.c.h.b16 %v262
  %v523 = vunpack.c.l.b16 %v263
  %v524 = vunpack.c.h.b16 %v263
  %v525 = vunpack.c.l.b16 %v264
  %v526 = vunpack.c.h.b16 %v264
  %v527 = vunpack.c.l.b16 %v265
  %v528 = vunpack.c.h.b16 %v265
  %v529 = vunpack.c.l.b16 %v266
  %v530 = vunpack.c.h.b16 %v266
  %v531 = vunpack.c.l.b16 %v267
  %v532 = vunpack.c.h.b16 %v267
  %v533 = vunpack.c.l.b16 %v268
  %v534 = vunpack.c.h.b16 %v268
  %v535 = vunpack.c.l.b16 %v269
  %v536 = vunpack.c.h.b16 %v269
  %v537 = vunpack.c.l.b16 %v270
  %v538 = vunpack.c.h.b16 %v270
  %v539 = vunpack.c.l.b16 %v271
  %v540 = vunpack.c.h.b16 %v271
  %v541 = vunpack.c.l.b16 %v272
  %v542 = vunpack.c.h.b16 %v272
  %v543 = vunpack.c.l.b16 %v273
  %v544 = vunpack.c.h.b16 %v273
  %v545 = vunpack.c.l.b16 %v274
  %v546 = vunpack.c.h.b16 %v274
  %v547 = vunpack.c.l.b16 %v275
  %v548 = vunpack.c.h.b16 %v275
  %v549 = vunpack.c.l.b16 %v276
  %v550 = vunpack.c.h.b16 %v276
  %v551 = vunpack.c.l.b16 %v277
  %v552 = vunpack.c.h.b16 %v277
  %v553 = vunpack.c.l.b16 %v278
  %v554 = vunpack.c.h.b16 %v278
  %v555 = vunpack.c.l.b16 %v279
  %v556 = vunpack.c.h.b16 %v279
  %v557 = vunpack.c.l.b16 %v280
  %v558 = vunpack.c.h.b16 %v280
  %v559 = vunpack.c.l.b16 %v281
  %v560 = vunpack.c.h.b16 %v281
  %v561 = vunpack.c.l.b16 %v282
  %v562 = vunpack.c.h.b16 %v282
  %v563 = vunpack.c.l.b16 %v283
  %v564 = vunpack.c.h.b16 %v283
  %v565 = vunpack.c.l.b16 %v284
  %v566 = vunpack.c.h.b16 %v284
  %v567 = vunpack.c.l.b16 %v285
  %v568 = vunpack.c.h.b16 %v285
  %v569 = vunpack.c.l.b16 %v286
  %v570 = vunpack.c.h.b16 %v286
  %v571 = vunpack.c.l.b16 %v287
  %v572 = vunpack.c.h.b16 %v287
  %v573 = vunpack.c.l.b16 %v288
  %v574 = vunpack.c.h.b16 %v288
  %v575 = vunpack.c.l.b16 %v289
  %v576 = vunpack.c.h.b16 %v289
  %v577 = vunpack.c.l.b16 %v290
  %v578 = vunpack.c.h.b16 %v290
  %v579 = vunpack.c.l.b16 %v291
  %v580 = vunpack.c.h.b16 %v291
  %v581 = vunpack.c.l.b16 %v292
  %v582 = vunpack.c.h.b16 %v292
  %v583 = vunpack.c.l.b16 %v293
  %v584 = vunpack.c.h.b16 %v293
  %v585 = vunpack.c.l.b16 %v294
  %v586 = vunpack.c.h.b16 %v294
  %v587 = vunpack.c.l.b16 %v295
  %v588 = vunpack.c.h.b16 %v295
  %v589 = vunpack.c.l.b16 %v296
  %v590 = vunpack.c.h.b16 %v296
  %v591 = vunpack.c.l.b16 %v297
  %v592 = vunpack.c.h.b16 %v297
  %v593 = vunpack.c.l.b16 %v298
  %v594 = vunpack.c.h.b16 %v298
  %v595 = vunpack.c.l.b16 %v299
  %v596 = vunpack.c.h.b16 %v299
  %v597 = vunpack.c.l.b16 %v300
  %v598 = vunpack.c.h.b16 %v300
  %v599 = vunpack.c.l.b16 %v301
  %v600 = vunpack.c.h.b16 %v301
  %v601 = vunpack.c.l.b16 %v302
  %v602 = vunpack.c.h.b16 %v302
  %v603 = vunpack.c.l.b16 %v303
  %v604 = vunpack.c.h.b16 %v303
  %v605 = vunpack.c.l.b16 %v304
  %v606 = vunpack.c.h.b16 %v304
  %v607 = vunpack.c.l.b16 %v305
  %v608 = vunpack.c.h.b16 %v305
  %v609 = vunpack.c.l.b16 %v306
  %v610 = vunpack.c.h.b16 %v306
  %v611 = vunpack.c.l.b16 %v307
  %v612 = vunpack.c.h.b16 %v307
  %v613 = vunpack.c.l.b16 %v308
  %v614 = vunpack.c.h.b16 %v308
  %v615 = vunpack.c.l.b16 %v309
  %v616 = vunpack.c.h.b16 %v309
  %v617 = vunpack.c.l.b16 %v310
  %v618 = vunpack.c.h.b16 %v310
  %v619 = vunpack.c.l.b16 %v311
  %v620 = vunpack.c.h.b16 %v311
  %v621 = vunpack.c.l.b16 %v312
  %v622 = vunpack.c.h.b16 %v312
  %v623 = vunpack.c.l.b16 %v313
  %v624 = vunpack.c.h.b16 %v313
  %v625 = vunpack.c.l.b16 %v314
  %v626 = vunpack.c.h.b16 %v314
  %v627 = vunpack.c.l.b16 %v315
  %v628 = vunpack.c.h.b16 %v315
  %v629 = vunpack.c.l.b16 %v316
  %v630 = vunpack.c.h.b16 %v316
  %v631 = vunpack.c.l.b16 %v317
  %v632 = vunpack.c.h.b16 %v317
  %v633 = vunpack.c.l.b16 %v318
  %v634 = vunpack.c.h.b16 %v318
  %v635 = vunpack.c.l.b16 %v319
  %v636 = vunpack.c.h.b16 %v319
  %v637 = vunpack.c.l.b16 %v320
  %v638 = vunpack.c.h.b16 %v320
  %v639 = vunpack.c.l.b16 %v321
  %v640 = vunpack.c.h.b16 %v321
  %v641 = vunpack.c.l.b16 %v322
  %v642 = vunpack.c.h.b16 %v322
  %v643 = vunpack.c.l.b16 %v323
  %v644 = vunpack.c.h.b16 %v323
  %v645 = vunpack.c.l.b16 %v324
  %v646 = vunpack.c.h.b16 %v324
  %v647 = vunpack.c.l.b16 %v325
  %v648 = vunpack.c.h.b16 %v325
  %v649 = vunpack.c.l.b16 %v326
  %v650 = vunpack.c.h.b16 %v326
  %v651 = vunpack.c.l.b16 %v327
  %v652 = vunpack.c.h.b16 %v327
  %v653 = vunpack.c.l.b16 %v328
  %v654 = vunpack.c.h.b16 %v328
  %v655 = vunpack.c.l.b16 %v329
  %v656 = vunpack.c.h.b16 %v329
  %v657 = vunpack.c.l.b16 %v330
  %v658 = vunpack.c.h.b16 %v330
  %v659 = vunpack.c.l.b16 %v331
  %v660 = vunpack.c.h.b16 %v331
  %v661 = vunpack.c.l.b16 %v332
  %v662 = vunpack.c.h.b16 %v332
  %v663 = vunpack.c.l.b16 %v333
  %v664 = vunpack.c.h.b16 %v333
  %v665 = vunpack.c.l.b16 %v334
  %v666 = vunpack.c.h.b16 %v334
  %v667 = vunpack.c.l.b16 %v335
  %v668 = vunpack.c.h.b16 %v335
  %v669 = vunpack.c.l.b16 %v336
  %v670 = vunpack.c.h.b16 %v336
  %v671 = vunpack.c.l.b16 %v337
  %v672 = vunpack.c.h.b16 %v337
  %v673 = vunpack.c.l.b16 %v338
  %v674 = vunpack.c.h.b16 %v338
  %v675 = vpack.c.b16 %v453, %v451
  %v676 = vpack.c.b16 %v454, %v452
  %v677 = vpack.c.b16 %v457, %v455
  %v678 = vpack.c.b16 %v458, %v456
  %v679 = vpack.c.b16 %v461, %v459
  %v680 = vpack.c.b16 %v462, %v460
  %v681 = vpack.c.b16 %v465, %v463
  %v682 = vpack.c.b16 %v466, %v464
  %v683 = vpack.c.b16 %v469, %v467
  %v684 = vpack.c.b16 %v470, %v468
  %v685 = vpack.c.b16 %v473, %v471
  %v686 = vpack.c.b16 %v474, %v472
  %v687 = vpack.c.b16 %v477, %v475
  %v688 = vpack.c.b16 %v478, %v476
  %v689 = vpack.c.b16 %v481, %v479
  %v690 = vpack.c.b16 %v482, %v480
  %v691 = vpack.c.b16 %v485, %v483
  %v692 = vpack.c.b16 %v486, %v484
  %v693 = vpack.c.b16 %v489, %v487
  %v694 = vpack.c.b16 %v490, %v488
  %v695 = vpack.c.b16 %v493, %v491
  %v696 = vpack.c.b16 %v494, %v492
  %v697 = vpack.c.b16 %v497, %v495
  %v698 = vpack.c.b16 %v498, %v496
  %v699 = vpack.c.b16 %v501, %v499
  %v700 = vpack.c.b16 %v502, %v500
  %v701 = vpack.c.b16 %v505, %v503
  %v702 = vpack.c.b16 %v506, %v504
  %v703 = vpack.c.b16 %v509, %v507
  %v704 = vpack.c.b16 %v510, %v508
  %v705 = vpack.c.b16 %v513, %v511
  %v706 = vpack.c.b16 %v514, %v512
  %v707 = vpack.c.b16 %v517, %v515
  %v708 = vpack.c.b16 %v518, %v516
  %v709 = vpack.c.b16 %v521, %v519
  %v710 = vpack.c.b16 %v522, %v520
  %v711 = vpack.c.b16 %v525, %v523
  %v712 = vpack.c.b16 %v526, %v524
  %v713 = vpack.c.b16 %v529, %v527
  %v714 = vpack.c.b16 %v530, %v528
  %v715 = vpack.c.b16 %v533, %v531
  %v716 = vpack.c.b16 %v534, %v532
  %v717 = vpack.c.b16 %v537, %v535
  %v718 = vpack.c.b16 %v538, %v536
  %v719 = vpack.c.b16 %v541, %v539
  %v720 = vpack.c.b16 %v542, %v540
  %v721 = vpack.c.b16 %v545, %v543
  %v722 = vpack.c.b16 %v546, %v544
  %v723 = vpack.c.b16 %v549, %v547
  %v724 = vpack.c.b16 %v550, %v548
  %v725 = vpack.c.b16 %v553, %v551
  %v726 = vpack.c.b16 %v554, %v552
  %v727 = vpack.c.b16 %v557, %v555
  %v728 = vpack.c.b16 %v558, %v556
  %v729 = vpack.c.b16 %v561, %v559
  %v730 = vpack.c.b16 %v562, %v560
  %v731 = vpack.c.b16 %v565, %v563
  %v732 = vpack.c.b16 %v566, %v564
  %v733 = vpack.c.b16 %v569, %v567
  %v734 = vpack.c.b16 %v570, %v568
  %v735 = vpack.c.b16 %v573, %v571
  %v736 = vpack.c.b16 %v574, %v572
  %v737 = vpack.c.b16 %v577, %v575
  %v738 = vpack.c.b16 %v578, %v576
  %v739 = vpack.c.b16 %v581, %v579
  %v740 = vpack.c.b16 %v582, %v580
  %v741 = vpack.c.b16 %v585, %v583
  %v742 = vpack.c.b16 %v586, %v584
  %v743 = vpack.c.b16 %v589, %v587
  %v744 = vpack.c.b16 %v590, %v588
  %v745 = vpack.c.b16 %v593, %v591
  %v746 = vpack.c.b16 %v594, %v592
  %v747 = vpack.c.b16 %v597, %v595
  %v748 = vpack.c.b16 %v598, %v596
  %v749 = vpack.c.b16 %v601, %v599
  %v750 = vpack.c.b16 %v602, %v600
  %v751 = vpack.c.b16 %v605, %v603
  %v752 = vpack.c.b16 %v606, %v604
  %v753 = vpack.c.b16 %v609, %v607
  %v754 = vpack.c.b16 %v610, %v608
  %v755 = vpack.c.b16 %v613, %v611
  %v756 = vpack.c.b16 %v614, %v612
  %v757 = vpack.c.b16 %v617, %v615
  %v758 = vpack.c.b16 %v618, %v616
  %v759 = vpack.c.b16 %v621, %v619
  %v760 = vpack.c.b16 %v622, %v620
  %v761 = vpack.c.b16 %v625, %v623
  %v762 = vpack.c.b16 %v626, %v624
  %v763 = vpack.c.b16 %v629, %v627
  %v764 = vpack.c.b16 %v630, %v628
  %v765 = vpack.c.b16 %v633, %v631
  %v766 = vpack.c.b16 %v634, %v632
  %v767 = vpack.c.b16 %v637, %v635
  %v768 = vpack.c.b16 %v638, %v636
  %v769 = vpack.c.b16 %v641, %v639
  %v770 = vpack.c.b16 %v642, %v640
  %v771 = vpack.c.b16 %v645, %v643
  %v772 = vpack.c.b16 %v646, %v644
  %v773 = vpack.c.b16 %v649, %v647
  %v774 = vpack.c.b16 %v650, %v648
  %v775 = vpack.c.b16 %v653, %v651
  %v776 = vpack.c.b16 %v654, %v652
  %v777 = vpack.c.b16 %v657, %v655
  %v778 = vpack.c.b16 %v658, %v656
  %v779 = vpack.c.b16 %v661, %v659
  %v780 = vpack.c.b16 %v662, %v660
  %v781 = vpack.c.b16 %v665, %v663
  %v782 = vpack.c.b16 %v666, %v664
  %v783 = vpack.c.b16 %v669, %v667
  %v784 = vpack.c.b16 %v670, %v668
  %v785 = vpack.c.b16 %v673, %v671
  %v786 = vpack.c.b16 %v674, %v672
  %899 = vmatprep.subr.bf16.mxu0 %v99
  %900 = vmatpush1.bf16.msra.mxu0 %v98
  %901 = vmatprep.subr.bf16.mxu0 %v101
  %902 = vmatpush1.bf16.msra.mxu0 %v100
  %903 = vmatprep.subr.bf16.mxu0 %v103
  %904 = vmatpush1.bf16.msra.mxu0 %v102
  %905 = vmatprep.subr.bf16.mxu0 %v105
  %906 = vmatpush1.bf16.msra.mxu0 %v104
  %907 = vmatprep.subr.bf16.mxu0 %v107
  %908 = vmatpush1.bf16.msra.mxu0 %v106
  %909 = vmatprep.subr.bf16.mxu0 %v109
  %910 = vmatpush1.bf16.msra.mxu0 %v108
  %911 = vmatprep.subr.bf16.mxu0 %v111
  %912 = vmatpush1.bf16.msra.mxu0 %v110
  %913 = vmatprep.subr.bf16.mxu0 %v113
  %914 = vmatpush1.bf16.msra.mxu0 %v112
  %915 = vmatprep.subr.bf16.mxu0 %v115
  %916 = vmatpush1.bf16.msra.mxu0 %v114
  %917 = vmatprep.subr.bf16.mxu0 %v117
  %918 = vmatpush1.bf16.msra.mxu0 %v116
  %919 = vmatprep.subr.bf16.mxu0 %v119
  %920 = vmatpush1.bf16.msra.mxu0 %v118
  %921 = vmatprep.subr.bf16.mxu0 %v121
  %922 = vmatpush1.bf16.msra.mxu0 %v120
  %923 = vmatprep.subr.bf16.mxu0 %v123
  %924 = vmatpush1.bf16.msra.mxu0 %v122
  %925 = vmatprep.subr.bf16.mxu0 %v125
  %926 = vmatpush1.bf16.msra.mxu0 %v124
  %927 = vmatprep.subr.bf16.mxu0 %v127
  %928 = vmatpush1.bf16.msra.mxu0 %v126
  %929 = vmatprep.subr.bf16.mxu0 %v129
  %930 = vmatpush1.bf16.msra.mxu0 %v128
  %931 = vmatprep.mubr.bf16.mxu0 %v676
  %932 = vmatmul.mubr.bf16.gmra.mrb[0].mxu0 %v675
  %v933 = vpop.f32.mrb[0].mxu0
  %v934 = vadd.f32 0.0, %v933
  %v935 = vpop.f32.mrb[0].mxu0
  %v936 = vadd.f32 0.0, %v935
  %v937 = vpop.f32.mrb[0].mxu0
  %v938 = vadd.f32 0.0, %v937
  %v939 = vpop.f32.mrb[0].mxu0
  %v940 = vadd.f32 0.0, %v939
  %941 = vmatprep.mubr.bf16.mxu0 %v678
  %942 = vmatmul.mubr.bf16.gmra.mrb[0].mxu0 %v677
  %v943 = vpop.f32.mrb[0].mxu0
  %v944 = vadd.f32 0.0, %v943
  %v945 = vpop.f32.mrb[0].mxu0
  %v946 = vadd.f32 0.0, %v945
  %v947 = vpop.f32.mrb[0].mxu0
  %v948 = vadd.f32 0.0, %v947
  %v949 = vpop.f32.mrb[0].mxu0
  %v950 = vadd.f32 0.0, %v949
  %951 = vmatprep.mubr.bf16.mxu0 %v680
  %952 = vmatmul.mubr.bf16.gmra.mrb[0].mxu0 %v679
  %v953 = vpop.f32.mrb[0].mxu0
  %v954 = vadd.f32 0.0, %v953
  %v955 = vpop.f32.mrb[0].mxu0
  %v956 = vadd.f32 0.0, %v955
  %v957 = vpop.f32.mrb[0].mxu0
  %v958 = vadd.f32 0.0, %v957
  %v959 = vpop.f32.mrb[0].mxu0
  %v960 = vadd.f32 0.0, %v959
  %961 = vmatprep.mubr.bf16.mxu0 %v682
  %962 = vmatmul.mubr.bf16.gmra.mrb[0].mxu0 %v681
  %v963 = vpop.f32.mrb[0].mxu0
  %v964 = vadd.f32 0.0, %v963
  %v965 = vpop.f32.mrb[0].mxu0
  %v966 = vadd.f32 0.0, %v965
  %v967 = vpop.f32.mrb[0].mxu0
  %v968 = vadd.f32 0.0, %v967
  %v969 = vpop.f32.mrb[0].mxu0
  %v970 = vadd.f32 0.0, %v969
  %971 = vmatprep.mubr.bf16.mxu0 %v684
  %972 = vmatmul.mubr.bf16.gmra.mrb[0].mxu0 %v683
  %v973 = vpop.f32.mrb[0].mxu0
  %v974 = vadd.f32 0.0, %v973
  %v975 = vpop.f32.mrb[0].mxu0
  %v976 = vadd.f32 0.0, %v975
  %v977 = vpop.f32.mrb[0].mxu0
  %v978 = vadd.f32 0.0, %v977
  %v979 = vpop.f32.mrb[0].mxu0
  %v980 = vadd.f32 0.0, %v979
  %981 = vmatprep.mubr.bf16.mxu0 %v686
  %982 = vmatmul.mubr.bf16.gmra.mrb[0].mxu0 %v685
  %v983 = vpop.f32.mrb[0].mxu0
  %v984 = vadd.f32 0.0, %v983
  %v985 = vpop.f32.mrb[0].mxu0
  %v986 = vadd.f32 0.0, %v985
  %v987 = vpop.f32.mrb[0].mxu0
  %v988 = vadd.f32 0.0, %v987
  %v989 = vpop.f32.mrb[0].mxu0
  %v990 = vadd.f32 0.0, %v989
  %991 = vmatprep.mubr.bf16.mxu0 %v688
  %992 = vmatmul.mubr.bf16.gmra.mrb[0].mxu0 %v687
  %v993 = vpop.f32.mrb[0].mxu0
  %v994 = vadd.f32 0.0, %v993
  %v995 = vpop.f32.mrb[0].mxu0
  %v996 = vadd.f32 0.0, %v995
  %v997 = vpop.f32.mrb[0].mxu0
  %v998 = vadd.f32 0.0, %v997
  %v999 = vpop.f32.mrb[0].mxu0
  %v1000 = vadd.f32 0.0, %v999
  %1001 = vmatprep.mubr.bf16.mxu0 %v690
  %1002 = vmatmul.mubr.bf16.gmra.mrb[0].mxu0 %v689
  %v1003 = vpop.f32.mrb[0].mxu0
  %v1004 = vadd.f32 0.0, %v1003
  %v1005 = vpop.f32.mrb[0].mxu0
  %v1006 = vadd.f32 0.0, %v1005
  %v1007 = vpop.f32.mrb[0].mxu0
  %v1008 = vadd.f32 0.0, %v1007
  %v1009 = vpop.f32.mrb[0].mxu0
  %v1010 = vadd.f32 0.0, %v1009
  %1011 = vmatprep.mubr.bf16.mxu0 %v692
  %1012 = vmatmul.mubr.bf16.gmra.mrb[0].mxu0 %v691
  %v1013 = vpop.f32.mrb[0].mxu0
  %v1014 = vadd.f32 0.0, %v1013
  %v1015 = vpop.f32.mrb[0].mxu0
  %v1016 = vadd.f32 0.0, %v1015
  %v1017 = vpop.f32.mrb[0].mxu0
  %v1018 = vadd.f32 0.0, %v1017
  %v1019 = vpop.f32.mrb[0].mxu0
  %v1020 = vadd.f32 0.0, %v1019
  %1021 = vmatprep.mubr.bf16.mxu0 %v694
  %1022 = vmatmul.mubr.bf16.gmra.mrb[0].mxu0 %v693
  %v1023 = vpop.f32.mrb[0].mxu0
  %v1024 = vadd.f32 0.0, %v1023
  %v1025 = vpop.f32.mrb[0].mxu0
  %v1026 = vadd.f32 0.0, %v1025
  %v1027 = vpop.f32.mrb[0].mxu0
  %v1028 = vadd.f32 0.0, %v1027
  %v1029 = vpop.f32.mrb[0].mxu0
  %v1030 = vadd.f32 0.0, %v1029
  %1031 = vmatprep.mubr.bf16.mxu0 %v696
  %1032 = vmatmul.mubr.bf16.gmra.mrb[0].mxu0 %v695
  %v1033 = vpop.f32.mrb[0].mxu0
  %v1034 = vadd.f32 0.0, %v1033
  %v1035 = vpop.f32.mrb[0].mxu0
  %v1036 = vadd.f32 0.0, %v1035
  %v1037 = vpop.f32.mrb[0].mxu0
  %v1038 = vadd.f32 0.0, %v1037
  %v1039 = vpop.f32.mrb[0].mxu0
  %v1040 = vadd.f32 0.0, %v1039
  %1041 = vmatprep.mubr.bf16.mxu0 %v698
  %1042 = vmatmul.mubr.bf16.gmra.mrb[0].mxu0 %v697
  %v1043 = vpop.f32.mrb[0].mxu0
  %v1044 = vadd.f32 0.0, %v1043
  %v1045 = vpop.f32.mrb[0].mxu0
  %v1046 = vadd.f32 0.0, %v1045
  %v1047 = vpop.f32.mrb[0].mxu0
  %v1048 = vadd.f32 0.0, %v1047
  %v1049 = vpop.f32.mrb[0].mxu0
  %v1050 = vadd.f32 0.0, %v1049
  %1051 = vmatprep.mubr.bf16.mxu0 %v700
  %1052 = vmatmul.mubr.bf16.gmra.mrb[0].mxu0 %v699
  %v1053 = vpop.f32.mrb[0].mxu0
  %v1054 = vadd.f32 0.0, %v1053
  %v1055 = vpop.f32.mrb[0].mxu0
  %v1056 = vadd.f32 0.0, %v1055
  %v1057 = vpop.f32.mrb[0].mxu0
  %v1058 = vadd.f32 0.0, %v1057
  %v1059 = vpop.f32.mrb[0].mxu0
  %v1060 = vadd.f32 0.0, %v1059
  %1061 = vmatprep.mubr.bf16.mxu0 %v702
  %1062 = vmatmul.mubr.bf16.gmra.mrb[0].mxu0 %v701
  %v1063 = vpop.f32.mrb[0].mxu0
  %v1064 = vadd.f32 0.0, %v1063
  %v1065 = vpop.f32.mrb[0].mxu0
  %v1066 = vadd.f32 0.0, %v1065
  %v1067 = vpop.f32.mrb[0].mxu0
  %v1068 = vadd.f32 0.0, %v1067
  %v1069 = vpop.f32.mrb[0].mxu0
  %v1070 = vadd.f32 0.0, %v1069
  %1071 = vmatprep.mubr.bf16.mxu0 %v704
  %1072 = vmatmul.mubr.bf16.gmra.mrb[0].mxu0 %v703
  %v1073 = vpop.f32.mrb[0].mxu0
  %v1074 = vadd.f32 0.0, %v1073
  %v1075 = vpop.f32.mrb[0].mxu0
  %v1076 = vadd.f32 0.0, %v1075
  %v1077 = vpop.f32.mrb[0].mxu0
  %v1078 = vadd.f32 0.0, %v1077
  %v1079 = vpop.f32.mrb[0].mxu0
  %v1080 = vadd.f32 0.0, %v1079
  %1081 = vmatprep.mubr.bf16.mxu0 %v706
  %1082 = vmatmul.mubr.bf16.gmra.mrb[0].mxu0 %v705
  %v1083 = vpop.f32.mrb[0].mxu0
  %v1084 = vadd.f32 0.0, %v1083
  %v1085 = vpop.f32.mrb[0].mxu0
  %v1086 = vadd.f32 0.0, %v1085
  %v1087 = vpop.f32.mrb[0].mxu0
  %v1088 = vadd.f32 0.0, %v1087
  %v1089 = vpop.f32.mrb[0].mxu0
  %v1090 = vadd.f32 0.0, %v1089
  %1091 = vmatprep.mubr.bf16.mxu0 %v708
  %1092 = vmatmul.mubr.bf16.gmra.mrb[0].mxu0 %v707
  %v1093 = vpop.f32.mrb[0].mxu0
  %v1094 = vadd.f32 0.0, %v1093
  %v1095 = vpop.f32.mrb[0].mxu0
  %v1096 = vadd.f32 0.0, %v1095
  %v1097 = vpop.f32.mrb[0].mxu0
  %v1098 = vadd.f32 0.0, %v1097
  %v1099 = vpop.f32.mrb[0].mxu0
  %v1100 = vadd.f32 0.0, %v1099
  %1101 = vmatprep.mubr.bf16.mxu0 %v710
  %1102 = vmatmul.mubr.bf16.gmra.mrb[0].mxu0 %v709
  %v1103 = vpop.f32.mrb[0].mxu0
  %v1104 = vadd.f32 0.0, %v1103
  %v1105 = vpop.f32.mrb[0].mxu0
  %v1106 = vadd.f32 0.0, %v1105
  %v1107 = vpop.f32.mrb[0].mxu0
  %v1108 = vadd.f32 0.0, %v1107
  %v1109 = vpop.f32.mrb[0].mxu0
  %v1110 = vadd.f32 0.0, %v1109
  %1111 = vmatprep.mubr.bf16.mxu0 %v712
  %1112 = vmatmul.mubr.bf16.gmra.mrb[0].mxu0 %v711
  %v1113 = vpop.f32.mrb[0].mxu0
  %v1114 = vadd.f32 0.0, %v1113
  %v1115 = vpop.f32.mrb[0].mxu0
  %v1116 = vadd.f32 0.0, %v1115
  %v1117 = vpop.f32.mrb[0].mxu0
  %v1118 = vadd.f32 0.0, %v1117
  %v1119 = vpop.f32.mrb[0].mxu0
  %v1120 = vadd.f32 0.0, %v1119
  %1121 = vmatprep.mubr.bf16.mxu0 %v714
  %1122 = vmatmul.mubr.bf16.gmra.mrb[0].mxu0 %v713
  %v1123 = vpop.f32.mrb[0].mxu0
  %v1124 = vadd.f32 0.0, %v1123
  %v1125 = vpop.f32.mrb[0].mxu0
  %v1126 = vadd.f32 0.0, %v1125
  %v1127 = vpop.f32.mrb[0].mxu0
  %v1128 = vadd.f32 0.0, %v1127
  %v1129 = vpop.f32.mrb[0].mxu0
  %v1130 = vadd.f32 0.0, %v1129
  %1131 = vmatprep.mubr.bf16.mxu0 %v716
  %1132 = vmatmul.mubr.bf16.gmra.mrb[0].mxu0 %v715
  %v1133 = vpop.f32.mrb[0].mxu0
  %v1134 = vadd.f32 0.0, %v1133
  %v1135 = vpop.f32.mrb[0].mxu0
  %v1136 = vadd.f32 0.0, %v1135
  %v1137 = vpop.f32.mrb[0].mxu0
  %v1138 = vadd.f32 0.0, %v1137
  %v1139 = vpop.f32.mrb[0].mxu0
  %v1140 = vadd.f32 0.0, %v1139
  %1141 = vmatprep.mubr.bf16.mxu0 %v718
  %1142 = vmatmul.mubr.bf16.gmra.mrb[0].mxu0 %v717
  %v1143 = vpop.f32.mrb[0].mxu0
  %v1144 = vadd.f32 0.0, %v1143
  %v1145 = vpop.f32.mrb[0].mxu0
  %v1146 = vadd.f32 0.0, %v1145
  %v1147 = vpop.f32.mrb[0].mxu0
  %v1148 = vadd.f32 0.0, %v1147
  %v1149 = vpop.f32.mrb[0].mxu0
  %v1150 = vadd.f32 0.0, %v1149
  %1151 = vmatprep.mubr.bf16.mxu0 %v720
  %1152 = vmatmul.mubr.bf16.gmra.mrb[0].mxu0 %v719
  %v1153 = vpop.f32.mrb[0].mxu0
  %v1154 = vadd.f32 0.0, %v1153
  %v1155 = vpop.f32.mrb[0].mxu0
  %v1156 = vadd.f32 0.0, %v1155
  %v1157 = vpop.f32.mrb[0].mxu0
  %v1158 = vadd.f32 0.0, %v1157
  %v1159 = vpop.f32.mrb[0].mxu0
  %v1160 = vadd.f32 0.0, %v1159
  %1161 = vmatprep.mubr.bf16.mxu0 %v722
  %1162 = vmatmul.mubr.bf16.gmra.mrb[0].mxu0 %v721
  %v1163 = vpop.f32.mrb[0].mxu0
  %v1164 = vadd.f32 0.0, %v1163
  %v1165 = vpop.f32.mrb[0].mxu0
  %v1166 = vadd.f32 0.0, %v1165
  %v1167 = vpop.f32.mrb[0].mxu0
  %v1168 = vadd.f32 0.0, %v1167
  %v1169 = vpop.f32.mrb[0].mxu0
  %v1170 = vadd.f32 0.0, %v1169
  %1171 = vmatprep.mubr.bf16.mxu0 %v724
  %1172 = vmatmul.mubr.bf16.gmra.mrb[0].mxu0 %v723
  %v1173 = vpop.f32.mrb[0].mxu0
  %v1174 = vadd.f32 0.0, %v1173
  %v1175 = vpop.f32.mrb[0].mxu0
  %v1176 = vadd.f32 0.0, %v1175
  %v1177 = vpop.f32.mrb[0].mxu0
  %v1178 = vadd.f32 0.0, %v1177
  %v1179 = vpop.f32.mrb[0].mxu0
  %v1180 = vadd.f32 0.0, %v1179
  %1181 = vmatprep.mubr.bf16.mxu0 %v726
  %1182 = vmatmul.mubr.bf16.gmra.mrb[0].mxu0 %v725
  %v1183 = vpop.f32.mrb[0].mxu0
  %v1184 = vadd.f32 0.0, %v1183
  %v1185 = vpop.f32.mrb[0].mxu0
  %v1186 = vadd.f32 0.0, %v1185
  %v1187 = vpop.f32.mrb[0].mxu0
  %v1188 = vadd.f32 0.0, %v1187
  %v1189 = vpop.f32.mrb[0].mxu0
  %v1190 = vadd.f32 0.0, %v1189
  %1191 = vmatprep.mubr.bf16.mxu0 %v728
  %1192 = vmatmul.mubr.bf16.gmra.mrb[0].mxu0 %v727
  %v1193 = vpop.f32.mrb[0].mxu0
  %v1194 = vadd.f32 0.0, %v1193
  %v1195 = vpop.f32.mrb[0].mxu0
  %v1196 = vadd.f32 0.0, %v1195
  %v1197 = vpop.f32.mrb[0].mxu0
  %v1198 = vadd.f32 0.0, %v1197
  %v1199 = vpop.f32.mrb[0].mxu0
  %v1200 = vadd.f32 0.0, %v1199
  %1201 = vmatprep.mubr.bf16.mxu0 %v730
  %1202 = vmatmul.mubr.bf16.gmra.mrb[0].mxu0 %v729
  %v1203 = vpop.f32.mrb[0].mxu0
  %v1204 = vadd.f32 0.0, %v1203
  %v1205 = vpop.f32.mrb[0].mxu0
  %v1206 = vadd.f32 0.0, %v1205
  %v1207 = vpop.f32.mrb[0].mxu0
  %v1208 = vadd.f32 0.0, %v1207
  %v1209 = vpop.f32.mrb[0].mxu0
  %v1210 = vadd.f32 0.0, %v1209
  %1211 = vmatprep.mubr.bf16.mxu0 %v732
  %1212 = vmatmul.mubr.bf16.gmra.mrb[0].mxu0 %v731
  %v1213 = vpop.f32.mrb[0].mxu0
  %v1214 = vadd.f32 0.0, %v1213
  %v1215 = vpop.f32.mrb[0].mxu0
  %v1216 = vadd.f32 0.0, %v1215
  %v1217 = vpop.f32.mrb[0].mxu0
  %v1218 = vadd.f32 0.0, %v1217
  %v1219 = vpop.f32.mrb[0].mxu0
  %v1220 = vadd.f32 0.0, %v1219
  %1221 = vmatprep.mubr.bf16.mxu0 %v734
  %1222 = vmatmul.mubr.bf16.gmra.mrb[0].mxu0 %v733
  %v1223 = vpop.f32.mrb[0].mxu0
  %v1224 = vadd.f32 0.0, %v1223
  %v1225 = vpop.f32.mrb[0].mxu0
  %v1226 = vadd.f32 0.0, %v1225
  %v1227 = vpop.f32.mrb[0].mxu0
  %v1228 = vadd.f32 0.0, %v1227
  %v1229 = vpop.f32.mrb[0].mxu0
  %v1230 = vadd.f32 0.0, %v1229
  %1231 = vmatprep.mubr.bf16.mxu0 %v736
  %1232 = vmatmul.mubr.bf16.gmra.mrb[0].mxu0 %v735
  %v1233 = vpop.f32.mrb[0].mxu0
  %v1234 = vadd.f32 0.0, %v1233
  %v1235 = vpop.f32.mrb[0].mxu0
  %v1236 = vadd.f32 0.0, %v1235
  %v1237 = vpop.f32.mrb[0].mxu0
  %v1238 = vadd.f32 0.0, %v1237
  %v1239 = vpop.f32.mrb[0].mxu0
  %v1240 = vadd.f32 0.0, %v1239
  %1241 = vmatprep.mubr.bf16.mxu0 %v738
  %1242 = vmatmul.mubr.bf16.gmra.mrb[0].mxu0 %v737
  %v1243 = vpop.f32.mrb[0].mxu0
  %v1244 = vadd.f32 0.0, %v1243
  %v1245 = vpop.f32.mrb[0].mxu0
  %v1246 = vadd.f32 0.0, %v1245
  %v1247 = vpop.f32.mrb[0].mxu0
  %v1248 = vadd.f32 0.0, %v1247
  %v1249 = vpop.f32.mrb[0].mxu0
  %v1250 = vadd.f32 0.0, %v1249
  %1251 = vmatprep.mubr.bf16.mxu0 %v740
  %1252 = vmatmul.mubr.bf16.gmra.mrb[0].mxu0 %v739
  %v1253 = vpop.f32.mrb[0].mxu0
  %v1254 = vadd.f32 0.0, %v1253
  %v1255 = vpop.f32.mrb[0].mxu0
  %v1256 = vadd.f32 0.0, %v1255
  %v1257 = vpop.f32.mrb[0].mxu0
  %v1258 = vadd.f32 0.0, %v1257
  %v1259 = vpop.f32.mrb[0].mxu0
  %v1260 = vadd.f32 0.0, %v1259
  %1261 = vmatprep.mubr.bf16.mxu0 %v742
  %1262 = vmatmul.mubr.bf16.gmra.mrb[0].mxu0 %v741
  %v1263 = vpop.f32.mrb[0].mxu0
  %v1264 = vadd.f32 0.0, %v1263
  %v1265 = vpop.f32.mrb[0].mxu0
  %v1266 = vadd.f32 0.0, %v1265
  %v1267 = vpop.f32.mrb[0].mxu0
  %v1268 = vadd.f32 0.0, %v1267
  %v1269 = vpop.f32.mrb[0].mxu0
  %v1270 = vadd.f32 0.0, %v1269
  %1271 = vmatprep.mubr.bf16.mxu0 %v744
  %1272 = vmatmul.mubr.bf16.gmra.mrb[0].mxu0 %v743
  %v1273 = vpop.f32.mrb[0].mxu0
  %v1274 = vadd.f32 0.0, %v1273
  %v1275 = vpop.f32.mrb[0].mxu0
  %v1276 = vadd.f32 0.0, %v1275
  %v1277 = vpop.f32.mrb[0].mxu0
  %v1278 = vadd.f32 0.0, %v1277
  %v1279 = vpop.f32.mrb[0].mxu0
  %v1280 = vadd.f32 0.0, %v1279
  %1281 = vmatprep.mubr.bf16.mxu0 %v746
  %1282 = vmatmul.mubr.bf16.gmra.mrb[0].mxu0 %v745
  %v1283 = vpop.f32.mrb[0].mxu0
  %v1284 = vadd.f32 0.0, %v1283
  %v1285 = vpop.f32.mrb[0].mxu0
  %v1286 = vadd.f32 0.0, %v1285
  %v1287 = vpop.f32.mrb[0].mxu0
  %v1288 = vadd.f32 0.0, %v1287
  %v1289 = vpop.f32.mrb[0].mxu0
  %v1290 = vadd.f32 0.0, %v1289
  %1291 = vmatprep.mubr.bf16.mxu0 %v748
  %1292 = vmatmul.mubr.bf16.gmra.mrb[0].mxu0 %v747
  %v1293 = vpop.f32.mrb[0].mxu0
  %v1294 = vadd.f32 0.0, %v1293
  %v1295 = vpop.f32.mrb[0].mxu0
  %v1296 = vadd.f32 0.0, %v1295
  %v1297 = vpop.f32.mrb[0].mxu0
  %v1298 = vadd.f32 0.0, %v1297
  %v1299 = vpop.f32.mrb[0].mxu0
  %v1300 = vadd.f32 0.0, %v1299
  %1301 = vmatprep.mubr.bf16.mxu0 %v750
  %1302 = vmatmul.mubr.bf16.gmra.mrb[0].mxu0 %v749
  %v1303 = vpop.f32.mrb[0].mxu0
  %v1304 = vadd.f32 0.0, %v1303
  %v1305 = vpop.f32.mrb[0].mxu0
  %v1306 = vadd.f32 0.0, %v1305
  %v1307 = vpop.f32.mrb[0].mxu0
  %v1308 = vadd.f32 0.0, %v1307
  %v1309 = vpop.f32.mrb[0].mxu0
  %v1310 = vadd.f32 0.0, %v1309
  %1311 = vmatprep.mubr.bf16.mxu0 %v752
  %1312 = vmatmul.mubr.bf16.gmra.mrb[0].mxu0 %v751
  %v1313 = vpop.f32.mrb[0].mxu0
  %v1314 = vadd.f32 0.0, %v1313
  %v1315 = vpop.f32.mrb[0].mxu0
  %v1316 = vadd.f32 0.0, %v1315
  %v1317 = vpop.f32.mrb[0].mxu0
  %v1318 = vadd.f32 0.0, %v1317
  %v1319 = vpop.f32.mrb[0].mxu0
  %v1320 = vadd.f32 0.0, %v1319
  %1321 = vmatprep.mubr.bf16.mxu0 %v754
  %1322 = vmatmul.mubr.bf16.gmra.mrb[0].mxu0 %v753
  %v1323 = vpop.f32.mrb[0].mxu0
  %v1324 = vadd.f32 0.0, %v1323
  %v1325 = vpop.f32.mrb[0].mxu0
  %v1326 = vadd.f32 0.0, %v1325
  %v1327 = vpop.f32.mrb[0].mxu0
  %v1328 = vadd.f32 0.0, %v1327
  %v1329 = vpop.f32.mrb[0].mxu0
  %v1330 = vadd.f32 0.0, %v1329
  %1331 = vmatprep.mubr.bf16.mxu0 %v756
  %1332 = vmatmul.mubr.bf16.gmra.mrb[0].mxu0 %v755
  %v1333 = vpop.f32.mrb[0].mxu0
  %v1334 = vadd.f32 0.0, %v1333
  %v1335 = vpop.f32.mrb[0].mxu0
  %v1336 = vadd.f32 0.0, %v1335
  %v1337 = vpop.f32.mrb[0].mxu0
  %v1338 = vadd.f32 0.0, %v1337
  %v1339 = vpop.f32.mrb[0].mxu0
  %v1340 = vadd.f32 0.0, %v1339
  %1341 = vmatprep.mubr.bf16.mxu0 %v758
  %1342 = vmatmul.mubr.bf16.gmra.mrb[0].mxu0 %v757
  %v1343 = vpop.f32.mrb[0].mxu0
  %v1344 = vadd.f32 0.0, %v1343
  %v1345 = vpop.f32.mrb[0].mxu0
  %v1346 = vadd.f32 0.0, %v1345
  %v1347 = vpop.f32.mrb[0].mxu0
  %v1348 = vadd.f32 0.0, %v1347
  %v1349 = vpop.f32.mrb[0].mxu0
  %v1350 = vadd.f32 0.0, %v1349
  %1351 = vmatprep.mubr.bf16.mxu0 %v760
  %1352 = vmatmul.mubr.bf16.gmra.mrb[0].mxu0 %v759
  %v1353 = vpop.f32.mrb[0].mxu0
  %v1354 = vadd.f32 0.0, %v1353
  %v1355 = vpop.f32.mrb[0].mxu0
  %v1356 = vadd.f32 0.0, %v1355
  %v1357 = vpop.f32.mrb[0].mxu0
  %v1358 = vadd.f32 0.0, %v1357
  %v1359 = vpop.f32.mrb[0].mxu0
  %v1360 = vadd.f32 0.0, %v1359
  %1361 = vmatprep.mubr.bf16.mxu0 %v762
  %1362 = vmatmul.mubr.bf16.gmra.mrb[0].mxu0 %v761
  %v1363 = vpop.f32.mrb[0].mxu0
  %v1364 = vadd.f32 0.0, %v1363
  %v1365 = vpop.f32.mrb[0].mxu0
  %v1366 = vadd.f32 0.0, %v1365
  %v1367 = vpop.f32.mrb[0].mxu0
  %v1368 = vadd.f32 0.0, %v1367
  %v1369 = vpop.f32.mrb[0].mxu0
  %v1370 = vadd.f32 0.0, %v1369
  %1371 = vmatprep.mubr.bf16.mxu0 %v764
  %1372 = vmatmul.mubr.bf16.gmra.mrb[0].mxu0 %v763
  %v1373 = vpop.f32.mrb[0].mxu0
  %v1374 = vadd.f32 0.0, %v1373
  %v1375 = vpop.f32.mrb[0].mxu0
  %v1376 = vadd.f32 0.0, %v1375
  %v1377 = vpop.f32.mrb[0].mxu0
  %v1378 = vadd.f32 0.0, %v1377
  %v1379 = vpop.f32.mrb[0].mxu0
  %v1380 = vadd.f32 0.0, %v1379
  %1381 = vmatprep.mubr.bf16.mxu0 %v766
  %1382 = vmatmul.mubr.bf16.gmra.mrb[0].mxu0 %v765
  %v1383 = vpop.f32.mrb[0].mxu0
  %v1384 = vadd.f32 0.0, %v1383
  %v1385 = vpop.f32.mrb[0].mxu0
  %v1386 = vadd.f32 0.0, %v1385
  %v1387 = vpop.f32.mrb[0].mxu0
  %v1388 = vadd.f32 0.0, %v1387
  %v1389 = vpop.f32.mrb[0].mxu0
  %v1390 = vadd.f32 0.0, %v1389
  %1391 = vmatprep.mubr.bf16.mxu0 %v768
  %1392 = vmatmul.mubr.bf16.gmra.mrb[0].mxu0 %v767
  %v1393 = vpop.f32.mrb[0].mxu0
  %v1394 = vadd.f32 0.0, %v1393
  %v1395 = vpop.f32.mrb[0].mxu0
  %v1396 = vadd.f32 0.0, %v1395
  %v1397 = vpop.f32.mrb[0].mxu0
  %v1398 = vadd.f32 0.0, %v1397
  %v1399 = vpop.f32.mrb[0].mxu0
  %v1400 = vadd.f32 0.0, %v1399
  %1401 = vmatprep.mubr.bf16.mxu0 %v770
  %1402 = vmatmul.mubr.bf16.gmra.mrb[0].mxu0 %v769
  %v1403 = vpop.f32.mrb[0].mxu0
  %v1404 = vadd.f32 0.0, %v1403
  %v1405 = vpop.f32.mrb[0].mxu0
  %v1406 = vadd.f32 0.0, %v1405
  %v1407 = vpop.f32.mrb[0].mxu0
  %v1408 = vadd.f32 0.0, %v1407
  %v1409 = vpop.f32.mrb[0].mxu0
  %v1410 = vadd.f32 0.0, %v1409
  %1411 = vmatprep.mubr.bf16.mxu0 %v772
  %1412 = vmatmul.mubr.bf16.gmra.mrb[0].mxu0 %v771
  %v1413 = vpop.f32.mrb[0].mxu0
  %v1414 = vadd.f32 0.0, %v1413
  %v1415 = vpop.f32.mrb[0].mxu0
  %v1416 = vadd.f32 0.0, %v1415
  %v1417 = vpop.f32.mrb[0].mxu0
  %v1418 = vadd.f32 0.0, %v1417
  %v1419 = vpop.f32.mrb[0].mxu0
  %v1420 = vadd.f32 0.0, %v1419
  %1421 = vmatprep.mubr.bf16.mxu0 %v774
  %1422 = vmatmul.mubr.bf16.gmra.mrb[0].mxu0 %v773
  %v1423 = vpop.f32.mrb[0].mxu0
  %v1424 = vadd.f32 0.0, %v1423
  %v1425 = vpop.f32.mrb[0].mxu0
  %v1426 = vadd.f32 0.0, %v1425
  %v1427 = vpop.f32.mrb[0].mxu0
  %v1428 = vadd.f32 0.0, %v1427
  %v1429 = vpop.f32.mrb[0].mxu0
  %v1430 = vadd.f32 0.0, %v1429
  %1431 = vmatprep.mubr.bf16.mxu0 %v776
  %1432 = vmatmul.mubr.bf16.gmra.mrb[0].mxu0 %v775
  %v1433 = vpop.f32.mrb[0].mxu0
  %v1434 = vadd.f32 0.0, %v1433
  %v1435 = vpop.f32.mrb[0].mxu0
  %v1436 = vadd.f32 0.0, %v1435
  %v1437 = vpop.f32.mrb[0].mxu0
  %v1438 = vadd.f32 0.0, %v1437
  %v1439 = vpop.f32.mrb[0].mxu0
  %v1440 = vadd.f32 0.0, %v1439
  %1441 = vmatprep.mubr.bf16.mxu0 %v778
  %1442 = vmatmul.mubr.bf16.gmra.mrb[0].mxu0 %v777
  %v1443 = vpop.f32.mrb[0].mxu0
  %v1444 = vadd.f32 0.0, %v1443
  %v1445 = vpop.f32.mrb[0].mxu0
  %v1446 = vadd.f32 0.0, %v1445
  %v1447 = vpop.f32.mrb[0].mxu0
  %v1448 = vadd.f32 0.0, %v1447
  %v1449 = vpop.f32.mrb[0].mxu0
  %v1450 = vadd.f32 0.0, %v1449
  %1451 = vmatprep.mubr.bf16.mxu0 %v780
  %1452 = vmatmul.mubr.bf16.gmra.mrb[0].mxu0 %v779
  %v1453 = vpop.f32.mrb[0].mxu0
  %v1454 = vadd.f32 0.0, %v1453
  %v1455 = vpop.f32.mrb[0].mxu0
  %v1456 = vadd.f32 0.0, %v1455
  %v1457 = vpop.f32.mrb[0].mxu0
  %v1458 = vadd.f32 0.0, %v1457
  %v1459 = vpop.f32.mrb[0].mxu0
  %v1460 = vadd.f32 0.0, %v1459
  %1461 = vmatprep.mubr.bf16.mxu0 %v782
  %1462 = vmatmul.mubr.bf16.gmra.mrb[0].mxu0 %v781
  %v1463 = vpop.f32.mrb[0].mxu0
  %v1464 = vadd.f32 0.0, %v1463
  %v1465 = vpop.f32.mrb[0].mxu0
  %v1466 = vadd.f32 0.0, %v1465
  %v1467 = vpop.f32.mrb[0].mxu0
  %v1468 = vadd.f32 0.0, %v1467
  %v1469 = vpop.f32.mrb[0].mxu0
  %v1470 = vadd.f32 0.0, %v1469
  %1471 = vmatprep.mubr.bf16.mxu0 %v784
  %1472 = vmatmul.mubr.bf16.gmra.mrb[0].mxu0 %v783
  %v1473 = vpop.f32.mrb[0].mxu0
  %v1474 = vadd.f32 0.0, %v1473
  %v1475 = vpop.f32.mrb[0].mxu0
  %v1476 = vadd.f32 0.0, %v1475
  %v1477 = vpop.f32.mrb[0].mxu0
  %v1478 = vadd.f32 0.0, %v1477
  %v1479 = vpop.f32.mrb[0].mxu0
  %v1480 = vadd.f32 0.0, %v1479
  %1481 = vmatprep.mubr.bf16.mxu0 %v786
  %1482 = vmatmul.mubr.bf16.gmra.mrb[0].mxu0 %v785
  %v1483 = vpop.f32.mrb[0].mxu0
  %v1484 = vadd.f32 0.0, %v1483
  %v1485 = vpop.f32.mrb[0].mxu0
  %v1486 = vadd.f32 0.0, %v1485
  %v1487 = vpop.f32.mrb[0].mxu0
  %v1488 = vadd.f32 0.0, %v1487
  %v1489 = vpop.f32.mrb[0].mxu0
  %v1490 = vadd.f32 0.0, %v1489
  %1491 = vdwg.mxu0
  %1492 = vmatprep.subr.bf16.mxu0 %v196
  %1493 = vmatpush1.bf16.msra.mxu0 %v195
  %1494 = vmatprep.subr.bf16.mxu0 %v198
  %1495 = vmatpush1.bf16.msra.mxu0 %v197
  %1496 = vmatprep.subr.bf16.mxu0 %v200
  %1497 = vmatpush1.bf16.msra.mxu0 %v199
  %1498 = vmatprep.subr.bf16.mxu0 %v202
  %1499 = vmatpush1.bf16.msra.mxu0 %v201
  %1500 = vmatprep.subr.bf16.mxu0 %v204
  %1501 = vmatpush1.bf16.msra.mxu0 %v203
  %1502 = vmatprep.subr.bf16.mxu0 %v206
  %1503 = vmatpush1.bf16.msra.mxu0 %v205
  %1504 = vmatprep.subr.bf16.mxu0 %v208
  %1505 = vmatpush1.bf16.msra.mxu0 %v207
  %1506 = vmatprep.subr.bf16.mxu0 %v210
  %1507 = vmatpush1.bf16.msra.mxu0 %v209
  %1508 = vmatprep.subr.bf16.mxu0 %v212
  %1509 = vmatpush1.bf16.msra.mxu0 %v211
  %1510 = vmatprep.subr.bf16.mxu0 %v214
  %1511 = vmatpush1.bf16.msra.mxu0 %v213
  %1512 = vmatprep.subr.bf16.mxu0 %v216
  %1513 = vmatpush1.bf16.msra.mxu0 %v215
  %1514 = vmatprep.subr.bf16.mxu0 %v218
  %1515 = vmatpush1.bf16.msra.mxu0 %v217
  %1516 = vmatprep.subr.bf16.mxu0 %v220
  %1517 = vmatpush1.bf16.msra.mxu0 %v219
  %1518 = vmatprep.subr.bf16.mxu0 %v222
  %1519 = vmatpush1.bf16.msra.mxu0 %v221
  %1520 = vmatprep.subr.bf16.mxu0 %v224
  %1521 = vmatpush1.bf16.msra.mxu0 %v223
  %1522 = vmatprep.subr.bf16.mxu0 %v226
  %1523 = vmatpush1.bf16.msra.mxu0 %v225
  %1524 = vmatprep.mubr.bf16.mxu0 %v676
  %1525 = vmatmul.mubr.bf16.gmra.mrb[0].mxu0 %v675
  %v1526 = vpop.f32.mrb[0].mxu0
  %v1527 = vadd.f32 0.0, %v1526
  %v1528 = vpop.f32.mrb[0].mxu0
  %v1529 = vadd.f32 0.0, %v1528
  %v1530 = vpop.f32.mrb[0].mxu0
  %v1531 = vadd.f32 0.0, %v1530
  %v1532 = vpop.f32.mrb[0].mxu0
  %v1533 = vadd.f32 0.0, %v1532
  %1534 = vmatprep.mubr.bf16.mxu0 %v678
  %1535 = vmatmul.mubr.bf16.gmra.mrb[0].mxu0 %v677
  %v1536 = vpop.f32.mrb[0].mxu0
  %v1537 = vadd.f32 0.0, %v1536
  %v1538 = vpop.f32.mrb[0].mxu0
  %v1539 = vadd.f32 0.0, %v1538
  %v1540 = vpop.f32.mrb[0].mxu0
  %v1541 = vadd.f32 0.0, %v1540
  %v1542 = vpop.f32.mrb[0].mxu0
  %v1543 = vadd.f32 0.0, %v1542
  %1544 = vmatprep.mubr.bf16.mxu0 %v680
  %1545 = vmatmul.mubr.bf16.gmra.mrb[0].mxu0 %v679
  %v1546 = vpop.f32.mrb[0].mxu0
  %v1547 = vadd.f32 0.0, %v1546
  %v1548 = vpop.f32.mrb[0].mxu0
  %v1549 = vadd.f32 0.0, %v1548
  %v1550 = vpop.f32.mrb[0].mxu0
  %v1551 = vadd.f32 0.0, %v1550
  %v1552 = vpop.f32.mrb[0].mxu0
  %v1553 = vadd.f32 0.0, %v1552
  %1554 = vmatprep.mubr.bf16.mxu0 %v682
  %1555 = vmatmul.mubr.bf16.gmra.mrb[0].mxu0 %v681
  %v1556 = vpop.f32.mrb[0].mxu0
  %v1557 = vadd.f32 0.0, %v1556
  %v1558 = vpop.f32.mrb[0].mxu0
  %v1559 = vadd.f32 0.0, %v1558
  %v1560 = vpop.f32.mrb[0].mxu0
  %v1561 = vadd.f32 0.0, %v1560
  %v1562 = vpop.f32.mrb[0].mxu0
  %v1563 = vadd.f32 0.0, %v1562
  %1564 = vmatprep.mubr.bf16.mxu0 %v684
  %1565 = vmatmul.mubr.bf16.gmra.mrb[0].mxu0 %v683
  %v1566 = vpop.f32.mrb[0].mxu0
  %v1567 = vadd.f32 0.0, %v1566
  %v1568 = vpop.f32.mrb[0].mxu0
  %v1569 = vadd.f32 0.0, %v1568
  %v1570 = vpop.f32.mrb[0].mxu0
  %v1571 = vadd.f32 0.0, %v1570
  %v1572 = vpop.f32.mrb[0].mxu0
  %v1573 = vadd.f32 0.0, %v1572
  %1574 = vmatprep.mubr.bf16.mxu0 %v686
  %1575 = vmatmul.mubr.bf16.gmra.mrb[0].mxu0 %v685
  %v1576 = vpop.f32.mrb[0].mxu0
  %v1577 = vadd.f32 0.0, %v1576
  %v1578 = vpop.f32.mrb[0].mxu0
  %v1579 = vadd.f32 0.0, %v1578
  %v1580 = vpop.f32.mrb[0].mxu0
  %v1581 = vadd.f32 0.0, %v1580
  %v1582 = vpop.f32.mrb[0].mxu0
  %v1583 = vadd.f32 0.0, %v1582
  %1584 = vmatprep.mubr.bf16.mxu0 %v688
  %1585 = vmatmul.mubr.bf16.gmra.mrb[0].mxu0 %v687
  %v1586 = vpop.f32.mrb[0].mxu0
  %v1587 = vadd.f32 0.0, %v1586
  %v1588 = vpop.f32.mrb[0].mxu0
  %v1589 = vadd.f32 0.0, %v1588
  %v1590 = vpop.f32.mrb[0].mxu0
  %v1591 = vadd.f32 0.0, %v1590
  %v1592 = vpop.f32.mrb[0].mxu0
  %v1593 = vadd.f32 0.0, %v1592
  %1594 = vmatprep.mubr.bf16.mxu0 %v690
  %1595 = vmatmul.mubr.bf16.gmra.mrb[0].mxu0 %v689
  %v1596 = vpop.f32.mrb[0].mxu0
  %v1597 = vadd.f32 0.0, %v1596
  %v1598 = vpop.f32.mrb[0].mxu0
  %v1599 = vadd.f32 0.0, %v1598
  %v1600 = vpop.f32.mrb[0].mxu0
  %v1601 = vadd.f32 0.0, %v1600
  %v1602 = vpop.f32.mrb[0].mxu0
  %v1603 = vadd.f32 0.0, %v1602
  %1604 = vmatprep.mubr.bf16.mxu0 %v692
  %1605 = vmatmul.mubr.bf16.gmra.mrb[0].mxu0 %v691
  %v1606 = vpop.f32.mrb[0].mxu0
  %v1607 = vadd.f32 0.0, %v1606
  %v1608 = vpop.f32.mrb[0].mxu0
  %v1609 = vadd.f32 0.0, %v1608
  %v1610 = vpop.f32.mrb[0].mxu0
  %v1611 = vadd.f32 0.0, %v1610
  %v1612 = vpop.f32.mrb[0].mxu0
  %v1613 = vadd.f32 0.0, %v1612
  %1614 = vmatprep.mubr.bf16.mxu0 %v694
  %1615 = vmatmul.mubr.bf16.gmra.mrb[0].mxu0 %v693
  %v1616 = vpop.f32.mrb[0].mxu0
  %v1617 = vadd.f32 0.0, %v1616
  %v1618 = vpop.f32.mrb[0].mxu0
  %v1619 = vadd.f32 0.0, %v1618
  %v1620 = vpop.f32.mrb[0].mxu0
  %v1621 = vadd.f32 0.0, %v1620
  %v1622 = vpop.f32.mrb[0].mxu0
  %v1623 = vadd.f32 0.0, %v1622
  %1624 = vmatprep.mubr.bf16.mxu0 %v696
  %1625 = vmatmul.mubr.bf16.gmra.mrb[0].mxu0 %v695
  %v1626 = vpop.f32.mrb[0].mxu0
  %v1627 = vadd.f32 0.0, %v1626
  %v1628 = vpop.f32.mrb[0].mxu0
  %v1629 = vadd.f32 0.0, %v1628
  %v1630 = vpop.f32.mrb[0].mxu0
  %v1631 = vadd.f32 0.0, %v1630
  %v1632 = vpop.f32.mrb[0].mxu0
  %v1633 = vadd.f32 0.0, %v1632
  %1634 = vmatprep.mubr.bf16.mxu0 %v698
  %1635 = vmatmul.mubr.bf16.gmra.mrb[0].mxu0 %v697
  %v1636 = vpop.f32.mrb[0].mxu0
  %v1637 = vadd.f32 0.0, %v1636
  %v1638 = vpop.f32.mrb[0].mxu0
  %v1639 = vadd.f32 0.0, %v1638
  %v1640 = vpop.f32.mrb[0].mxu0
  %v1641 = vadd.f32 0.0, %v1640
  %v1642 = vpop.f32.mrb[0].mxu0
  %v1643 = vadd.f32 0.0, %v1642
  %1644 = vmatprep.mubr.bf16.mxu0 %v700
  %1645 = vmatmul.mubr.bf16.gmra.mrb[0].mxu0 %v699
  %v1646 = vpop.f32.mrb[0].mxu0
  %v1647 = vadd.f32 0.0, %v1646
  %v1648 = vpop.f32.mrb[0].mxu0
  %v1649 = vadd.f32 0.0, %v1648
  %v1650 = vpop.f32.mrb[0].mxu0
  %v1651 = vadd.f32 0.0, %v1650
  %v1652 = vpop.f32.mrb[0].mxu0
  %v1653 = vadd.f32 0.0, %v1652
  %1654 = vmatprep.mubr.bf16.mxu0 %v702
  %1655 = vmatmul.mubr.bf16.gmra.mrb[0].mxu0 %v701
  %v1656 = vpop.f32.mrb[0].mxu0
  %v1657 = vadd.f32 0.0, %v1656
  %v1658 = vpop.f32.mrb[0].mxu0
  %v1659 = vadd.f32 0.0, %v1658
  %v1660 = vpop.f32.mrb[0].mxu0
  %v1661 = vadd.f32 0.0, %v1660
  %v1662 = vpop.f32.mrb[0].mxu0
  %v1663 = vadd.f32 0.0, %v1662
  %1664 = vmatprep.mubr.bf16.mxu0 %v704
  %1665 = vmatmul.mubr.bf16.gmra.mrb[0].mxu0 %v703
  %v1666 = vpop.f32.mrb[0].mxu0
  %v1667 = vadd.f32 0.0, %v1666
  %v1668 = vpop.f32.mrb[0].mxu0
  %v1669 = vadd.f32 0.0, %v1668
  %v1670 = vpop.f32.mrb[0].mxu0
  %v1671 = vadd.f32 0.0, %v1670
  %v1672 = vpop.f32.mrb[0].mxu0
  %v1673 = vadd.f32 0.0, %v1672
  %1674 = vmatprep.mubr.bf16.mxu0 %v706
  %1675 = vmatmul.mubr.bf16.gmra.mrb[0].mxu0 %v705
  %v1676 = vpop.f32.mrb[0].mxu0
  %v1677 = vadd.f32 0.0, %v1676
  %v1678 = vpop.f32.mrb[0].mxu0
  %v1679 = vadd.f32 0.0, %v1678
  %v1680 = vpop.f32.mrb[0].mxu0
  %v1681 = vadd.f32 0.0, %v1680
  %v1682 = vpop.f32.mrb[0].mxu0
  %v1683 = vadd.f32 0.0, %v1682
  %1684 = vmatprep.mubr.bf16.mxu0 %v708
  %1685 = vmatmul.mubr.bf16.gmra.mrb[0].mxu0 %v707
  %v1686 = vpop.f32.mrb[0].mxu0
  %v1687 = vadd.f32 0.0, %v1686
  %v1688 = vpop.f32.mrb[0].mxu0
  %v1689 = vadd.f32 0.0, %v1688
  %v1690 = vpop.f32.mrb[0].mxu0
  %v1691 = vadd.f32 0.0, %v1690
  %v1692 = vpop.f32.mrb[0].mxu0
  %v1693 = vadd.f32 0.0, %v1692
  %1694 = vmatprep.mubr.bf16.mxu0 %v710
  %1695 = vmatmul.mubr.bf16.gmra.mrb[0].mxu0 %v709
  %v1696 = vpop.f32.mrb[0].mxu0
  %v1697 = vadd.f32 0.0, %v1696
  %v1698 = vpop.f32.mrb[0].mxu0
  %v1699 = vadd.f32 0.0, %v1698
  %v1700 = vpop.f32.mrb[0].mxu0
  %v1701 = vadd.f32 0.0, %v1700
  %v1702 = vpop.f32.mrb[0].mxu0
  %v1703 = vadd.f32 0.0, %v1702
  %1704 = vmatprep.mubr.bf16.mxu0 %v712
  %1705 = vmatmul.mubr.bf16.gmra.mrb[0].mxu0 %v711
  %v1706 = vpop.f32.mrb[0].mxu0
  %v1707 = vadd.f32 0.0, %v1706
  %v1708 = vpop.f32.mrb[0].mxu0
  %v1709 = vadd.f32 0.0, %v1708
  %v1710 = vpop.f32.mrb[0].mxu0
  %v1711 = vadd.f32 0.0, %v1710
  %v1712 = vpop.f32.mrb[0].mxu0
  %v1713 = vadd.f32 0.0, %v1712
  %1714 = vmatprep.mubr.bf16.mxu0 %v714
  %1715 = vmatmul.mubr.bf16.gmra.mrb[0].mxu0 %v713
  %v1716 = vpop.f32.mrb[0].mxu0
  %v1717 = vadd.f32 0.0, %v1716
  %v1718 = vpop.f32.mrb[0].mxu0
  %v1719 = vadd.f32 0.0, %v1718
  %v1720 = vpop.f32.mrb[0].mxu0
  %v1721 = vadd.f32 0.0, %v1720
  %v1722 = vpop.f32.mrb[0].mxu0
  %v1723 = vadd.f32 0.0, %v1722
  %1724 = vmatprep.mubr.bf16.mxu0 %v716
  %1725 = vmatmul.mubr.bf16.gmra.mrb[0].mxu0 %v715
  %v1726 = vpop.f32.mrb[0].mxu0
  %v1727 = vadd.f32 0.0, %v1726
  %v1728 = vpop.f32.mrb[0].mxu0
  %v1729 = vadd.f32 0.0, %v1728
  %v1730 = vpop.f32.mrb[0].mxu0
  %v1731 = vadd.f32 0.0, %v1730
  %v1732 = vpop.f32.mrb[0].mxu0
  %v1733 = vadd.f32 0.0, %v1732
  %1734 = vmatprep.mubr.bf16.mxu0 %v718
  %1735 = vmatmul.mubr.bf16.gmra.mrb[0].mxu0 %v717
  %v1736 = vpop.f32.mrb[0].mxu0
  %v1737 = vadd.f32 0.0, %v1736
  %v1738 = vpop.f32.mrb[0].mxu0
  %v1739 = vadd.f32 0.0, %v1738
  %v1740 = vpop.f32.mrb[0].mxu0
  %v1741 = vadd.f32 0.0, %v1740
  %v1742 = vpop.f32.mrb[0].mxu0
  %v1743 = vadd.f32 0.0, %v1742
  %1744 = vmatprep.mubr.bf16.mxu0 %v720
  %1745 = vmatmul.mubr.bf16.gmra.mrb[0].mxu0 %v719
  %v1746 = vpop.f32.mrb[0].mxu0
  %v1747 = vadd.f32 0.0, %v1746
  %v1748 = vpop.f32.mrb[0].mxu0
  %v1749 = vadd.f32 0.0, %v1748
  %v1750 = vpop.f32.mrb[0].mxu0
  %v1751 = vadd.f32 0.0, %v1750
  %v1752 = vpop.f32.mrb[0].mxu0
  %v1753 = vadd.f32 0.0, %v1752
  %1754 = vmatprep.mubr.bf16.mxu0 %v722
  %1755 = vmatmul.mubr.bf16.gmra.mrb[0].mxu0 %v721
  %v1756 = vpop.f32.mrb[0].mxu0
  %v1757 = vadd.f32 0.0, %v1756
  %v1758 = vpop.f32.mrb[0].mxu0
  %v1759 = vadd.f32 0.0, %v1758
  %v1760 = vpop.f32.mrb[0].mxu0
  %v1761 = vadd.f32 0.0, %v1760
  %v1762 = vpop.f32.mrb[0].mxu0
  %v1763 = vadd.f32 0.0, %v1762
  %1764 = vmatprep.mubr.bf16.mxu0 %v724
  %1765 = vmatmul.mubr.bf16.gmra.mrb[0].mxu0 %v723
  %v1766 = vpop.f32.mrb[0].mxu0
  %v1767 = vadd.f32 0.0, %v1766
  %v1768 = vpop.f32.mrb[0].mxu0
  %v1769 = vadd.f32 0.0, %v1768
  %v1770 = vpop.f32.mrb[0].mxu0
  %v1771 = vadd.f32 0.0, %v1770
  %v1772 = vpop.f32.mrb[0].mxu0
  %v1773 = vadd.f32 0.0, %v1772
  %1774 = vmatprep.mubr.bf16.mxu0 %v726
  %1775 = vmatmul.mubr.bf16.gmra.mrb[0].mxu0 %v725
  %v1776 = vpop.f32.mrb[0].mxu0
  %v1777 = vadd.f32 0.0, %v1776
  %v1778 = vpop.f32.mrb[0].mxu0
  %v1779 = vadd.f32 0.0, %v1778
  %v1780 = vpop.f32.mrb[0].mxu0
  %v1781 = vadd.f32 0.0, %v1780
  %v1782 = vpop.f32.mrb[0].mxu0
  %v1783 = vadd.f32 0.0, %v1782
  %1784 = vmatprep.mubr.bf16.mxu0 %v728
  %1785 = vmatmul.mubr.bf16.gmra.mrb[0].mxu0 %v727
  %v1786 = vpop.f32.mrb[0].mxu0
  %v1787 = vadd.f32 0.0, %v1786
  %v1788 = vpop.f32.mrb[0].mxu0
  %v1789 = vadd.f32 0.0, %v1788
  %v1790 = vpop.f32.mrb[0].mxu0
  %v1791 = vadd.f32 0.0, %v1790
  %v1792 = vpop.f32.mrb[0].mxu0
  %v1793 = vadd.f32 0.0, %v1792
  %1794 = vmatprep.mubr.bf16.mxu0 %v730
  %1795 = vmatmul.mubr.bf16.gmra.mrb[0].mxu0 %v729
  %v1796 = vpop.f32.mrb[0].mxu0
  %v1797 = vadd.f32 0.0, %v1796
  %v1798 = vpop.f32.mrb[0].mxu0
  %v1799 = vadd.f32 0.0, %v1798
  %v1800 = vpop.f32.mrb[0].mxu0
  %v1801 = vadd.f32 0.0, %v1800
  %v1802 = vpop.f32.mrb[0].mxu0
  %v1803 = vadd.f32 0.0, %v1802
  %1804 = vmatprep.mubr.bf16.mxu0 %v732
  %1805 = vmatmul.mubr.bf16.gmra.mrb[0].mxu0 %v731
  %v1806 = vpop.f32.mrb[0].mxu0
  %v1807 = vadd.f32 0.0, %v1806
  %v1808 = vpop.f32.mrb[0].mxu0
  %v1809 = vadd.f32 0.0, %v1808
  %v1810 = vpop.f32.mrb[0].mxu0
  %v1811 = vadd.f32 0.0, %v1810
  %v1812 = vpop.f32.mrb[0].mxu0
  %v1813 = vadd.f32 0.0, %v1812
  %1814 = vmatprep.mubr.bf16.mxu0 %v734
  %1815 = vmatmul.mubr.bf16.gmra.mrb[0].mxu0 %v733
  %v1816 = vpop.f32.mrb[0].mxu0
  %v1817 = vadd.f32 0.0, %v1816
  %v1818 = vpop.f32.mrb[0].mxu0
  %v1819 = vadd.f32 0.0, %v1818
  %v1820 = vpop.f32.mrb[0].mxu0
  %v1821 = vadd.f32 0.0, %v1820
  %v1822 = vpop.f32.mrb[0].mxu0
  %v1823 = vadd.f32 0.0, %v1822
  %1824 = vmatprep.mubr.bf16.mxu0 %v736
  %1825 = vmatmul.mubr.bf16.gmra.mrb[0].mxu0 %v735
  %v1826 = vpop.f32.mrb[0].mxu0
  %v1827 = vadd.f32 0.0, %v1826
  %v1828 = vpop.f32.mrb[0].mxu0
  %v1829 = vadd.f32 0.0, %v1828
  %v1830 = vpop.f32.mrb[0].mxu0
  %v1831 = vadd.f32 0.0, %v1830
  %v1832 = vpop.f32.mrb[0].mxu0
  %v1833 = vadd.f32 0.0, %v1832
  %1834 = vmatprep.mubr.bf16.mxu0 %v738
  %1835 = vmatmul.mubr.bf16.gmra.mrb[0].mxu0 %v737
  %v1836 = vpop.f32.mrb[0].mxu0
  %v1837 = vadd.f32 0.0, %v1836
  %v1838 = vpop.f32.mrb[0].mxu0
  %v1839 = vadd.f32 0.0, %v1838
  %v1840 = vpop.f32.mrb[0].mxu0
  %v1841 = vadd.f32 0.0, %v1840
  %v1842 = vpop.f32.mrb[0].mxu0
  %v1843 = vadd.f32 0.0, %v1842
  %1844 = vmatprep.mubr.bf16.mxu0 %v740
  %1845 = vmatmul.mubr.bf16.gmra.mrb[0].mxu0 %v739
  %v1846 = vpop.f32.mrb[0].mxu0
  %v1847 = vadd.f32 0.0, %v1846
  %v1848 = vpop.f32.mrb[0].mxu0
  %v1849 = vadd.f32 0.0, %v1848
  %v1850 = vpop.f32.mrb[0].mxu0
  %v1851 = vadd.f32 0.0, %v1850
  %v1852 = vpop.f32.mrb[0].mxu0
  %v1853 = vadd.f32 0.0, %v1852
  %1854 = vmatprep.mubr.bf16.mxu0 %v742
  %1855 = vmatmul.mubr.bf16.gmra.mrb[0].mxu0 %v741
  %v1856 = vpop.f32.mrb[0].mxu0
  %v1857 = vadd.f32 0.0, %v1856
  %v1858 = vpop.f32.mrb[0].mxu0
  %v1859 = vadd.f32 0.0, %v1858
  %v1860 = vpop.f32.mrb[0].mxu0
  %v1861 = vadd.f32 0.0, %v1860
  %v1862 = vpop.f32.mrb[0].mxu0
  %v1863 = vadd.f32 0.0, %v1862
  %1864 = vmatprep.mubr.bf16.mxu0 %v744
  %1865 = vmatmul.mubr.bf16.gmra.mrb[0].mxu0 %v743
  %v1866 = vpop.f32.mrb[0].mxu0
  %v1867 = vadd.f32 0.0, %v1866
  %v1868 = vpop.f32.mrb[0].mxu0
  %v1869 = vadd.f32 0.0, %v1868
  %v1870 = vpop.f32.mrb[0].mxu0
  %v1871 = vadd.f32 0.0, %v1870
  %v1872 = vpop.f32.mrb[0].mxu0
  %v1873 = vadd.f32 0.0, %v1872
  %1874 = vmatprep.mubr.bf16.mxu0 %v746
  %1875 = vmatmul.mubr.bf16.gmra.mrb[0].mxu0 %v745
  %v1876 = vpop.f32.mrb[0].mxu0
  %v1877 = vadd.f32 0.0, %v1876
  %v1878 = vpop.f32.mrb[0].mxu0
  %v1879 = vadd.f32 0.0, %v1878
  %v1880 = vpop.f32.mrb[0].mxu0
  %v1881 = vadd.f32 0.0, %v1880
  %v1882 = vpop.f32.mrb[0].mxu0
  %v1883 = vadd.f32 0.0, %v1882
  %1884 = vmatprep.mubr.bf16.mxu0 %v748
  %1885 = vmatmul.mubr.bf16.gmra.mrb[0].mxu0 %v747
  %v1886 = vpop.f32.mrb[0].mxu0
  %v1887 = vadd.f32 0.0, %v1886
  %v1888 = vpop.f32.mrb[0].mxu0
  %v1889 = vadd.f32 0.0, %v1888
  %v1890 = vpop.f32.mrb[0].mxu0
  %v1891 = vadd.f32 0.0, %v1890
  %v1892 = vpop.f32.mrb[0].mxu0
  %v1893 = vadd.f32 0.0, %v1892
  %1894 = vmatprep.mubr.bf16.mxu0 %v750
  %1895 = vmatmul.mubr.bf16.gmra.mrb[0].mxu0 %v749
  %v1896 = vpop.f32.mrb[0].mxu0
  %v1897 = vadd.f32 0.0, %v1896
  %v1898 = vpop.f32.mrb[0].mxu0
  %v1899 = vadd.f32 0.0, %v1898
  %v1900 = vpop.f32.mrb[0].mxu0
  %v1901 = vadd.f32 0.0, %v1900
  %v1902 = vpop.f32.mrb[0].mxu0
  %v1903 = vadd.f32 0.0, %v1902
  %1904 = vmatprep.mubr.bf16.mxu0 %v752
  %1905 = vmatmul.mubr.bf16.gmra.mrb[0].mxu0 %v751
  %v1906 = vpop.f32.mrb[0].mxu0
  %v1907 = vadd.f32 0.0, %v1906
  %v1908 = vpop.f32.mrb[0].mxu0
  %v1909 = vadd.f32 0.0, %v1908
  %v1910 = vpop.f32.mrb[0].mxu0
  %v1911 = vadd.f32 0.0, %v1910
  %v1912 = vpop.f32.mrb[0].mxu0
  %v1913 = vadd.f32 0.0, %v1912
  %1914 = vmatprep.mubr.bf16.mxu0 %v754
  %1915 = vmatmul.mubr.bf16.gmra.mrb[0].mxu0 %v753
  %v1916 = vpop.f32.mrb[0].mxu0
  %v1917 = vadd.f32 0.0, %v1916
  %v1918 = vpop.f32.mrb[0].mxu0
  %v1919 = vadd.f32 0.0, %v1918
  %v1920 = vpop.f32.mrb[0].mxu0
  %v1921 = vadd.f32 0.0, %v1920
  %v1922 = vpop.f32.mrb[0].mxu0
  %v1923 = vadd.f32 0.0, %v1922
  %1924 = vmatprep.mubr.bf16.mxu0 %v756
  %1925 = vmatmul.mubr.bf16.gmra.mrb[0].mxu0 %v755
  %v1926 = vpop.f32.mrb[0].mxu0
  %v1927 = vadd.f32 0.0, %v1926
  %v1928 = vpop.f32.mrb[0].mxu0
  %v1929 = vadd.f32 0.0, %v1928
  %v1930 = vpop.f32.mrb[0].mxu0
  %v1931 = vadd.f32 0.0, %v1930
  %v1932 = vpop.f32.mrb[0].mxu0
  %v1933 = vadd.f32 0.0, %v1932
  %1934 = vmatprep.mubr.bf16.mxu0 %v758
  %1935 = vmatmul.mubr.bf16.gmra.mrb[0].mxu0 %v757
  %v1936 = vpop.f32.mrb[0].mxu0
  %v1937 = vadd.f32 0.0, %v1936
  %v1938 = vpop.f32.mrb[0].mxu0
  %v1939 = vadd.f32 0.0, %v1938
  %v1940 = vpop.f32.mrb[0].mxu0
  %v1941 = vadd.f32 0.0, %v1940
  %v1942 = vpop.f32.mrb[0].mxu0
  %v1943 = vadd.f32 0.0, %v1942
  %1944 = vmatprep.mubr.bf16.mxu0 %v760
  %1945 = vmatmul.mubr.bf16.gmra.mrb[0].mxu0 %v759
  %v1946 = vpop.f32.mrb[0].mxu0
  %v1947 = vadd.f32 0.0, %v1946
  %v1948 = vpop.f32.mrb[0].mxu0
  %v1949 = vadd.f32 0.0, %v1948
  %v1950 = vpop.f32.mrb[0].mxu0
  %v1951 = vadd.f32 0.0, %v1950
  %v1952 = vpop.f32.mrb[0].mxu0
  %v1953 = vadd.f32 0.0, %v1952
  %1954 = vmatprep.mubr.bf16.mxu0 %v762
  %1955 = vmatmul.mubr.bf16.gmra.mrb[0].mxu0 %v761
  %v1956 = vpop.f32.mrb[0].mxu0
  %v1957 = vadd.f32 0.0, %v1956
  %v1958 = vpop.f32.mrb[0].mxu0
  %v1959 = vadd.f32 0.0, %v1958
  %v1960 = vpop.f32.mrb[0].mxu0
  %v1961 = vadd.f32 0.0, %v1960
  %v1962 = vpop.f32.mrb[0].mxu0
  %v1963 = vadd.f32 0.0, %v1962
  %1964 = vmatprep.mubr.bf16.mxu0 %v764
  %1965 = vmatmul.mubr.bf16.gmra.mrb[0].mxu0 %v763
  %v1966 = vpop.f32.mrb[0].mxu0
  %v1967 = vadd.f32 0.0, %v1966
  %v1968 = vpop.f32.mrb[0].mxu0
  %v1969 = vadd.f32 0.0, %v1968
  %v1970 = vpop.f32.mrb[0].mxu0
  %v1971 = vadd.f32 0.0, %v1970
  %v1972 = vpop.f32.mrb[0].mxu0
  %v1973 = vadd.f32 0.0, %v1972
  %1974 = vmatprep.mubr.bf16.mxu0 %v766
  %1975 = vmatmul.mubr.bf16.gmra.mrb[0].mxu0 %v765
  %v1976 = vpop.f32.mrb[0].mxu0
  %v1977 = vadd.f32 0.0, %v1976
  %v1978 = vpop.f32.mrb[0].mxu0
  %v1979 = vadd.f32 0.0, %v1978
  %v1980 = vpop.f32.mrb[0].mxu0
  %v1981 = vadd.f32 0.0, %v1980
  %v1982 = vpop.f32.mrb[0].mxu0
  %v1983 = vadd.f32 0.0, %v1982
  %1984 = vmatprep.mubr.bf16.mxu0 %v768
  %1985 = vmatmul.mubr.bf16.gmra.mrb[0].mxu0 %v767
  %v1986 = vpop.f32.mrb[0].mxu0
  %v1987 = vadd.f32 0.0, %v1986
  %v1988 = vpop.f32.mrb[0].mxu0
  %v1989 = vadd.f32 0.0, %v1988
  %v1990 = vpop.f32.mrb[0].mxu0
  %v1991 = vadd.f32 0.0, %v1990
  %v1992 = vpop.f32.mrb[0].mxu0
  %v1993 = vadd.f32 0.0, %v1992
  %1994 = vmatprep.mubr.bf16.mxu0 %v770
  %1995 = vmatmul.mubr.bf16.gmra.mrb[0].mxu0 %v769
  %v1996 = vpop.f32.mrb[0].mxu0
  %v1997 = vadd.f32 0.0, %v1996
  %v1998 = vpop.f32.mrb[0].mxu0
  %v1999 = vadd.f32 0.0, %v1998
  %v2000 = vpop.f32.mrb[0].mxu0
  %v2001 = vadd.f32 0.0, %v2000
  %v2002 = vpop.f32.mrb[0].mxu0
  %v2003 = vadd.f32 0.0, %v2002
  %2004 = vmatprep.mubr.bf16.mxu0 %v772
  %2005 = vmatmul.mubr.bf16.gmra.mrb[0].mxu0 %v771
  %v2006 = vpop.f32.mrb[0].mxu0
  %v2007 = vadd.f32 0.0, %v2006
  %v2008 = vpop.f32.mrb[0].mxu0
  %v2009 = vadd.f32 0.0, %v2008
  %v2010 = vpop.f32.mrb[0].mxu0
  %v2011 = vadd.f32 0.0, %v2010
  %v2012 = vpop.f32.mrb[0].mxu0
  %v2013 = vadd.f32 0.0, %v2012
  %2014 = vmatprep.mubr.bf16.mxu0 %v774
  %2015 = vmatmul.mubr.bf16.gmra.mrb[0].mxu0 %v773
  %v2016 = vpop.f32.mrb[0].mxu0
  %v2017 = vadd.f32 0.0, %v2016
  %v2018 = vpop.f32.mrb[0].mxu0
  %v2019 = vadd.f32 0.0, %v2018
  %v2020 = vpop.f32.mrb[0].mxu0
  %v2021 = vadd.f32 0.0, %v2020
  %v2022 = vpop.f32.mrb[0].mxu0
  %v2023 = vadd.f32 0.0, %v2022
  %2024 = vmatprep.mubr.bf16.mxu0 %v776
  %2025 = vmatmul.mubr.bf16.gmra.mrb[0].mxu0 %v775
  %v2026 = vpop.f32.mrb[0].mxu0
  %v2027 = vadd.f32 0.0, %v2026
  %v2028 = vpop.f32.mrb[0].mxu0
  %v2029 = vadd.f32 0.0, %v2028
  %v2030 = vpop.f32.mrb[0].mxu0
  %v2031 = vadd.f32 0.0, %v2030
  %v2032 = vpop.f32.mrb[0].mxu0
  %v2033 = vadd.f32 0.0, %v2032
  %2034 = vmatprep.mubr.bf16.mxu0 %v778
  %2035 = vmatmul.mubr.bf16.gmra.mrb[0].mxu0 %v777
  %v2036 = vpop.f32.mrb[0].mxu0
  %v2037 = vadd.f32 0.0, %v2036
  %v2038 = vpop.f32.mrb[0].mxu0
  %v2039 = vadd.f32 0.0, %v2038
  %v2040 = vpop.f32.mrb[0].mxu0
  %v2041 = vadd.f32 0.0, %v2040
  %v2042 = vpop.f32.mrb[0].mxu0
  %v2043 = vadd.f32 0.0, %v2042
  %2044 = vmatprep.mubr.bf16.mxu0 %v780
  %2045 = vmatmul.mubr.bf16.gmra.mrb[0].mxu0 %v779
  %v2046 = vpop.f32.mrb[0].mxu0
  %v2047 = vadd.f32 0.0, %v2046
  %v2048 = vpop.f32.mrb[0].mxu0
  %v2049 = vadd.f32 0.0, %v2048
  %v2050 = vpop.f32.mrb[0].mxu0
  %v2051 = vadd.f32 0.0, %v2050
  %v2052 = vpop.f32.mrb[0].mxu0
  %v2053 = vadd.f32 0.0, %v2052
  %2054 = vmatprep.mubr.bf16.mxu0 %v782
  %2055 = vmatmul.mubr.bf16.gmra.mrb[0].mxu0 %v781
  %v2056 = vpop.f32.mrb[0].mxu0
  %v2057 = vadd.f32 0.0, %v2056
  %v2058 = vpop.f32.mrb[0].mxu0
  %v2059 = vadd.f32 0.0, %v2058
  %v2060 = vpop.f32.mrb[0].mxu0
  %v2061 = vadd.f32 0.0, %v2060
  %v2062 = vpop.f32.mrb[0].mxu0
  %v2063 = vadd.f32 0.0, %v2062
  %2064 = vmatprep.mubr.bf16.mxu0 %v784
  %2065 = vmatmul.mubr.bf16.gmra.mrb[0].mxu0 %v783
  %v2066 = vpop.f32.mrb[0].mxu0
  %v2067 = vadd.f32 0.0, %v2066
  %v2068 = vpop.f32.mrb[0].mxu0
  %v2069 = vadd.f32 0.0, %v2068
  %v2070 = vpop.f32.mrb[0].mxu0
  %v2071 = vadd.f32 0.0, %v2070
  %v2072 = vpop.f32.mrb[0].mxu0
  %v2073 = vadd.f32 0.0, %v2072
  %2074 = vmatprep.mubr.bf16.mxu0 %v786
  %2075 = vmatmul.mubr.bf16.gmra.mrb[0].mxu0 %v785
  %v2076 = vpop.f32.mrb[0].mxu0
  %v2077 = vadd.f32 0.0, %v2076
  %v2078 = vpop.f32.mrb[0].mxu0
  %v2079 = vadd.f32 0.0, %v2078
  %v2080 = vpop.f32.mrb[0].mxu0
  %v2081 = vadd.f32 0.0, %v2080
  %v2082 = vpop.f32.mrb[0].mxu0
  %v2083 = vadd.f32 0.0, %v2082
  %2084 = vdwg.mxu0
  %vm2085 = vcmp.ge.s32.totalorder %v30, 3
  %vm2086 = vcmp.ge.s32.totalorder %v31, 3
  %vm2087 = vcmp.ge.s32.totalorder %v32, 3
  %vm2088 = vcmp.ge.s32.totalorder %v33, 3
  %vm2089 = vcmp.lt.s32.totalorder %v30, 13
  %vm2090 = vcmp.lt.s32.totalorder %v31, 13
  %vm2091 = vcmp.lt.s32.totalorder %v32, 13
  %vm2092 = vcmp.lt.s32.totalorder %v33, 13
  %vm2093 = vcmp.ge.s32.totalorder %v22, 3
  %vm2094 = vcmp.ge.s32.totalorder %v23, 3
  %vm2095 = vcmp.ge.s32.totalorder %v24, 3
  %vm2096 = vcmp.ge.s32.totalorder %v25, 3
  %vm2097 = vcmp.lt.s32.totalorder %v22, 13
  %vm2098 = vcmp.lt.s32.totalorder %v23, 13
  %vm2099 = vcmp.lt.s32.totalorder %v24, 13
  %vm2100 = vcmp.lt.s32.totalorder %v25, 13
  %2101 = vrot.lane.b32.xlu0 %v954, 51
  %v2102 = vpop.permute.xlu0 %2101
  %2103 = vrot.lane.b32.xlu0 %v958, 51
  %v2104 = vpop.permute.xlu0 %2103
  %2105 = vrot.lane.b32.xlu0 %v964, 51
  %v2106 = vpop.permute.xlu0 %2105
  %2107 = vrot.lane.b32.xlu0 %v968, 51
  %v2108 = vpop.permute.xlu0 %2107
  %2109 = vrot.lane.b32.xlu0 %v956, 51
  %v2110 = vpop.permute.xlu0 %2109
  %2111 = vrot.lane.b32.xlu0 %v960, 51
  %v2112 = vpop.permute.xlu0 %2111
  %2113 = vrot.lane.b32.xlu0 %v966, 51
  %v2114 = vpop.permute.xlu0 %2113
  %2115 = vrot.lane.b32.xlu0 %v970, 51
  %v2116 = vpop.permute.xlu0 %2115
  %2117 = vrot.lane.b32.xlu0 %v1547, 51
  %v2118 = vpop.permute.xlu0 %2117
  %2119 = vrot.lane.b32.xlu0 %v1551, 51
  %v2120 = vpop.permute.xlu0 %2119
  %2121 = vrot.lane.b32.xlu0 %v1557, 51
  %v2122 = vpop.permute.xlu0 %2121
  %2123 = vrot.lane.b32.xlu0 %v1561, 51
  %v2124 = vpop.permute.xlu0 %2123
  %2125 = vrot.lane.b32.xlu0 %v1549, 51
  %v2126 = vpop.permute.xlu0 %2125
  %2127 = vrot.lane.b32.xlu0 %v1553, 51
  %v2128 = vpop.permute.xlu0 %2127
  %2129 = vrot.lane.b32.xlu0 %v1559, 51
  %v2130 = vpop.permute.xlu0 %2129
  %2131 = vrot.lane.b32.xlu0 %v1563, 51
  %v2132 = vpop.permute.xlu0 %2131
  %vm2133 = vcmp.lt.s32.totalorder %v18, 51
  %v2134 = vsel %vm2133, %v2118, %v2126
  %v2135 = vsel %vm2133, %v2120, %v2128
  %v2136 = vsel %vm2133, %v2122, %v2130
  %v2137 = vsel %vm2133, %v2124, %v2132
  %v2138 = vsel %vm2133, %v2110, %v2118
  %v2139 = vsel %vm2133, %v2112, %v2120
  %v2140 = vsel %vm2133, %v2114, %v2122
  %v2141 = vsel %vm2133, %v2116, %v2124
  %v2142 = vsel %vm2133, %v2102, %v2110
  %v2143 = vsel %vm2133, %v2104, %v2112
  %v2144 = vsel %vm2133, %v2106, %v2114
  %v2145 = vsel %vm2133, %v2108, %v2116
  %v2146 = vsel %vm2133, %v2126, %v2102
  %v2147 = vsel %vm2133, %v2128, %v2104
  %v2148 = vsel %vm2133, %v2130, %v2106
  %v2149 = vsel %vm2133, %v2132, %v2108
  %vm2150 = vmand %vm2085, %vm2093
  %vm2151 = vmand %vm2086, %vm2094
  %vm2152 = vmand %vm2087, %vm2095
  %vm2153 = vmand %vm2088, %vm2096
  %v2154 = vsel %vm2150, 1, 0
  %v2155 = vsel %vm2151, 1, 0
  %v2156 = vsel %vm2152, 1, 0
  %v2157 = vsel %vm2153, 1, 0
  %vm2158 = vcmp.eq.s32.totalorder %v2154, 1
  %vm2159 = vcmp.eq.s32.totalorder %v2155, 1
  %vm2160 = vcmp.eq.s32.totalorder %v2156, 1
  %vm2161 = vcmp.eq.s32.totalorder %v2157, 1
  %v2162 = vsel %vm2158, %v2146, 0.0
  %v2163 = vsel %vm2159, %v2142, 0.0
  %v2164 = vsel %vm2160, %v2138, 0.0
  %v2165 = vsel %vm2161, %v2134, 0.0
  %v2166 = vsel %vm2158, %v2147, 0.0
  %v2167 = vsel %vm2159, %v2143, 0.0
  %v2168 = vsel %vm2160, %v2139, 0.0
  %v2169 = vsel %vm2161, %v2135, 0.0
  %v2170 = vsel %vm2158, %v2148, 0.0
  %v2171 = vsel %vm2159, %v2144, 0.0
  %v2172 = vsel %vm2160, %v2140, 0.0
  %v2173 = vsel %vm2161, %v2136, 0.0
  %v2174 = vsel %vm2158, %v2149, 0.0
  %v2175 = vsel %vm2159, %v2145, 0.0
  %v2176 = vsel %vm2160, %v2141, 0.0
  %v2177 = vsel %vm2161, %v2137, 0.0
  %v2178 = vadd.f32 %v1034, %v2162
  %v2179 = vadd.f32 %v1036, %v2163
  %v2180 = vadd.f32 %v1627, %v2164
  %v2181 = vadd.f32 %v1629, %v2165
  %v2182 = vadd.f32 %v1038, %v2166
  %v2183 = vadd.f32 %v1040, %v2167
  %v2184 = vadd.f32 %v1631, %v2168
  %v2185 = vadd.f32 %v1633, %v2169
  %v2186 = vadd.f32 %v1044, %v2170
  %v2187 = vadd.f32 %v1046, %v2171
  %v2188 = vadd.f32 %v1637, %v2172
  %v2189 = vadd.f32 %v1639, %v2173
  %v2190 = vadd.f32 %v1048, %v2174
  %v2191 = vadd.f32 %v1050, %v2175
  %v2192 = vadd.f32 %v1641, %v2176
  %v2193 = vadd.f32 %v1643, %v2177
  %2194 = vrot.lane.b32.xlu0 %v974, 48
  %v2195 = vpop.permute.xlu0 %2194
  %2196 = vrot.lane.b32.xlu0 %v978, 48
  %v2197 = vpop.permute.xlu0 %2196
  %2198 = vrot.lane.b32.xlu0 %v984, 48
  %v2199 = vpop.permute.xlu0 %2198
  %2200 = vrot.lane.b32.xlu0 %v988, 48
  %v2201 = vpop.permute.xlu0 %2200
  %2202 = vrot.lane.b32.xlu0 %v976, 48
  %v2203 = vpop.permute.xlu0 %2202
  %2204 = vrot.lane.b32.xlu0 %v980, 48
  %v2205 = vpop.permute.xlu0 %2204
  %2206 = vrot.lane.b32.xlu0 %v986, 48
  %v2207 = vpop.permute.xlu0 %2206
  %2208 = vrot.lane.b32.xlu0 %v990, 48
  %v2209 = vpop.permute.xlu0 %2208
  %2210 = vrot.lane.b32.xlu0 %v1567, 48
  %v2211 = vpop.permute.xlu0 %2210
  %2212 = vrot.lane.b32.xlu0 %v1571, 48
  %v2213 = vpop.permute.xlu0 %2212
  %2214 = vrot.lane.b32.xlu0 %v1577, 48
  %v2215 = vpop.permute.xlu0 %2214
  %2216 = vrot.lane.b32.xlu0 %v1581, 48
  %v2217 = vpop.permute.xlu0 %2216
  %2218 = vrot.lane.b32.xlu0 %v1569, 48
  %v2219 = vpop.permute.xlu0 %2218
  %2220 = vrot.lane.b32.xlu0 %v1573, 48
  %v2221 = vpop.permute.xlu0 %2220
  %2222 = vrot.lane.b32.xlu0 %v1579, 48
  %v2223 = vpop.permute.xlu0 %2222
  %2224 = vrot.lane.b32.xlu0 %v1583, 48
  %v2225 = vpop.permute.xlu0 %2224
  %vm2226 = vcmp.lt.s32.totalorder %v18, 48
  %v2227 = vsel %vm2226, %v2211, %v2219
  %v2228 = vsel %vm2226, %v2213, %v2221
  %v2229 = vsel %vm2226, %v2215, %v2223
  %v2230 = vsel %vm2226, %v2217, %v2225
  %v2231 = vsel %vm2226, %v2203, %v2211
  %v2232 = vsel %vm2226, %v2205, %v2213
  %v2233 = vsel %vm2226, %v2207, %v2215
  %v2234 = vsel %vm2226, %v2209, %v2217
  %v2235 = vsel %vm2226, %v2195, %v2203
  %v2236 = vsel %vm2226, %v2197, %v2205
  %v2237 = vsel %vm2226, %v2199, %v2207
  %v2238 = vsel %vm2226, %v2201, %v2209
  %v2239 = vsel %vm2226, %v2219, %v2195
  %v2240 = vsel %vm2226, %v2221, %v2197
  %v2241 = vsel %vm2226, %v2223, %v2199
  %v2242 = vsel %vm2226, %v2225, %v2201
  %v2243 = vsel %vm2085, 1, 0
  %v2244 = vsel %vm2086, 1, 0
  %v2245 = vsel %vm2087, 1, 0
  %v2246 = vsel %vm2088, 1, 0
  %vm2247 = vcmp.eq.s32.totalorder %v2243, 1
  %vm2248 = vcmp.eq.s32.totalorder %v2244, 1
  %vm2249 = vcmp.eq.s32.totalorder %v2245, 1
  %vm2250 = vcmp.eq.s32.totalorder %v2246, 1
  %v2251 = vsel %vm2247, %v2239, 0.0
  %v2252 = vsel %vm2248, %v2235, 0.0
  %v2253 = vsel %vm2249, %v2231, 0.0
  %v2254 = vsel %vm2250, %v2227, 0.0
  %v2255 = vsel %vm2247, %v2240, 0.0
  %v2256 = vsel %vm2248, %v2236, 0.0
  %v2257 = vsel %vm2249, %v2232, 0.0
  %v2258 = vsel %vm2250, %v2228, 0.0
  %v2259 = vsel %vm2247, %v2241, 0.0
  %v2260 = vsel %vm2248, %v2237, 0.0
  %v2261 = vsel %vm2249, %v2233, 0.0
  %v2262 = vsel %vm2250, %v2229, 0.0
  %v2263 = vsel %vm2247, %v2242, 0.0
  %v2264 = vsel %vm2248, %v2238, 0.0
  %v2265 = vsel %vm2249, %v2234, 0.0
  %v2266 = vsel %vm2250, %v2230, 0.0
  %v2267 = vadd.f32 %v2178, %v2251
  %v2268 = vadd.f32 %v2179, %v2252
  %v2269 = vadd.f32 %v2180, %v2253
  %v2270 = vadd.f32 %v2181, %v2254
  %v2271 = vadd.f32 %v2182, %v2255
  %v2272 = vadd.f32 %v2183, %v2256
  %v2273 = vadd.f32 %v2184, %v2257
  %v2274 = vadd.f32 %v2185, %v2258
  %v2275 = vadd.f32 %v2186, %v2259
  %v2276 = vadd.f32 %v2187, %v2260
  %v2277 = vadd.f32 %v2188, %v2261
  %v2278 = vadd.f32 %v2189, %v2262
  %v2279 = vadd.f32 %v2190, %v2263
  %v2280 = vadd.f32 %v2191, %v2264
  %v2281 = vadd.f32 %v2192, %v2265
  %v2282 = vadd.f32 %v2193, %v2266
  %2283 = vrot.lane.b32.xlu0 %v994, 45
  %v2284 = vpop.permute.xlu0 %2283
  %2285 = vrot.lane.b32.xlu0 %v998, 45
  %v2286 = vpop.permute.xlu0 %2285
  %2287 = vrot.lane.b32.xlu0 %v1004, 45
  %v2288 = vpop.permute.xlu0 %2287
  %2289 = vrot.lane.b32.xlu0 %v1008, 45
  %v2290 = vpop.permute.xlu0 %2289
  %2291 = vrot.lane.b32.xlu0 %v996, 45
  %v2292 = vpop.permute.xlu0 %2291
  %2293 = vrot.lane.b32.xlu0 %v1000, 45
  %v2294 = vpop.permute.xlu0 %2293
  %2295 = vrot.lane.b32.xlu0 %v1006, 45
  %v2296 = vpop.permute.xlu0 %2295
  %2297 = vrot.lane.b32.xlu0 %v1010, 45
  %v2298 = vpop.permute.xlu0 %2297
  %2299 = vrot.lane.b32.xlu0 %v1587, 45
  %v2300 = vpop.permute.xlu0 %2299
  %2301 = vrot.lane.b32.xlu0 %v1591, 45
  %v2302 = vpop.permute.xlu0 %2301
  %2303 = vrot.lane.b32.xlu0 %v1597, 45
  %v2304 = vpop.permute.xlu0 %2303
  %2305 = vrot.lane.b32.xlu0 %v1601, 45
  %v2306 = vpop.permute.xlu0 %2305
  %2307 = vrot.lane.b32.xlu0 %v1589, 45
  %v2308 = vpop.permute.xlu0 %2307
  %2309 = vrot.lane.b32.xlu0 %v1593, 45
  %v2310 = vpop.permute.xlu0 %2309
  %2311 = vrot.lane.b32.xlu0 %v1599, 45
  %v2312 = vpop.permute.xlu0 %2311
  %2313 = vrot.lane.b32.xlu0 %v1603, 45
  %v2314 = vpop.permute.xlu0 %2313
  %vm2315 = vcmp.lt.s32.totalorder %v18, 45
  %v2316 = vsel %vm2315, %v2300, %v2308
  %v2317 = vsel %vm2315, %v2302, %v2310
  %v2318 = vsel %vm2315, %v2304, %v2312
  %v2319 = vsel %vm2315, %v2306, %v2314
  %v2320 = vsel %vm2315, %v2292, %v2300
  %v2321 = vsel %vm2315, %v2294, %v2302
  %v2322 = vsel %vm2315, %v2296, %v2304
  %v2323 = vsel %vm2315, %v2298, %v2306
  %v2324 = vsel %vm2315, %v2284, %v2292
  %v2325 = vsel %vm2315, %v2286, %v2294
  %v2326 = vsel %vm2315, %v2288, %v2296
  %v2327 = vsel %vm2315, %v2290, %v2298
  %v2328 = vsel %vm2315, %v2308, %v2284
  %v2329 = vsel %vm2315, %v2310, %v2286
  %v2330 = vsel %vm2315, %v2312, %v2288
  %v2331 = vsel %vm2315, %v2314, %v2290
  %vm2332 = vmand %vm2085, %vm2097
  %vm2333 = vmand %vm2086, %vm2098
  %vm2334 = vmand %vm2087, %vm2099
  %vm2335 = vmand %vm2088, %vm2100
  %v2336 = vsel %vm2332, 1, 0
  %v2337 = vsel %vm2333, 1, 0
  %v2338 = vsel %vm2334, 1, 0
  %v2339 = vsel %vm2335, 1, 0
  %vm2340 = vcmp.eq.s32.totalorder %v2336, 1
  %vm2341 = vcmp.eq.s32.totalorder %v2337, 1
  %vm2342 = vcmp.eq.s32.totalorder %v2338, 1
  %vm2343 = vcmp.eq.s32.totalorder %v2339, 1
  %v2344 = vsel %vm2340, %v2328, 0.0
  %v2345 = vsel %vm2341, %v2324, 0.0
  %v2346 = vsel %vm2342, %v2320, 0.0
  %v2347 = vsel %vm2343, %v2316, 0.0
  %v2348 = vsel %vm2340, %v2329, 0.0
  %v2349 = vsel %vm2341, %v2325, 0.0
  %v2350 = vsel %vm2342, %v2321, 0.0
  %v2351 = vsel %vm2343, %v2317, 0.0
  %v2352 = vsel %vm2340, %v2330, 0.0
  %v2353 = vsel %vm2341, %v2326, 0.0
  %v2354 = vsel %vm2342, %v2322, 0.0
  %v2355 = vsel %vm2343, %v2318, 0.0
  %v2356 = vsel %vm2340, %v2331, 0.0
  %v2357 = vsel %vm2341, %v2327, 0.0
  %v2358 = vsel %vm2342, %v2323, 0.0
  %v2359 = vsel %vm2343, %v2319, 0.0
  %v2360 = vadd.f32 %v2267, %v2344
  %v2361 = vadd.f32 %v2268, %v2345
  %v2362 = vadd.f32 %v2269, %v2346
  %v2363 = vadd.f32 %v2270, %v2347
  %v2364 = vadd.f32 %v2271, %v2348
  %v2365 = vadd.f32 %v2272, %v2349
  %v2366 = vadd.f32 %v2273, %v2350
  %v2367 = vadd.f32 %v2274, %v2351
  %v2368 = vadd.f32 %v2275, %v2352
  %v2369 = vadd.f32 %v2276, %v2353
  %v2370 = vadd.f32 %v2277, %v2354
  %v2371 = vadd.f32 %v2278, %v2355
  %v2372 = vadd.f32 %v2279, %v2356
  %v2373 = vadd.f32 %v2280, %v2357
  %v2374 = vadd.f32 %v2281, %v2358
  %v2375 = vadd.f32 %v2282, %v2359
  %2376 = vrot.lane.b32.xlu0 %v1014, 3
  %v2377 = vpop.permute.xlu0 %2376
  %2378 = vrot.lane.b32.xlu0 %v1018, 3
  %v2379 = vpop.permute.xlu0 %2378
  %2380 = vrot.lane.b32.xlu0 %v1024, 3
  %v2381 = vpop.permute.xlu0 %2380
  %2382 = vrot.lane.b32.xlu0 %v1028, 3
  %v2383 = vpop.permute.xlu0 %2382
  %2384 = vrot.lane.b32.xlu0 %v1016, 3
  %v2385 = vpop.permute.xlu0 %2384
  %2386 = vrot.lane.b32.xlu0 %v1020, 3
  %v2387 = vpop.permute.xlu0 %2386
  %2388 = vrot.lane.b32.xlu0 %v1026, 3
  %v2389 = vpop.permute.xlu0 %2388
  %2390 = vrot.lane.b32.xlu0 %v1030, 3
  %v2391 = vpop.permute.xlu0 %2390
  %2392 = vrot.lane.b32.xlu0 %v1607, 3
  %v2393 = vpop.permute.xlu0 %2392
  %2394 = vrot.lane.b32.xlu0 %v1611, 3
  %v2395 = vpop.permute.xlu0 %2394
  %2396 = vrot.lane.b32.xlu0 %v1617, 3
  %v2397 = vpop.permute.xlu0 %2396
  %2398 = vrot.lane.b32.xlu0 %v1621, 3
  %v2399 = vpop.permute.xlu0 %2398
  %2400 = vrot.lane.b32.xlu0 %v1609, 3
  %v2401 = vpop.permute.xlu0 %2400
  %2402 = vrot.lane.b32.xlu0 %v1613, 3
  %v2403 = vpop.permute.xlu0 %2402
  %2404 = vrot.lane.b32.xlu0 %v1619, 3
  %v2405 = vpop.permute.xlu0 %2404
  %2406 = vrot.lane.b32.xlu0 %v1623, 3
  %v2407 = vpop.permute.xlu0 %2406
  %vm2408 = vcmp.lt.s32.totalorder %v18, 3
  %v2409 = vsel %vm2408, %v2393, %v2401
  %v2410 = vsel %vm2408, %v2395, %v2403
  %v2411 = vsel %vm2408, %v2397, %v2405
  %v2412 = vsel %vm2408, %v2399, %v2407
  %v2413 = vsel %vm2408, %v2385, %v2393
  %v2414 = vsel %vm2408, %v2387, %v2395
  %v2415 = vsel %vm2408, %v2389, %v2397
  %v2416 = vsel %vm2408, %v2391, %v2399
  %v2417 = vsel %vm2408, %v2377, %v2385
  %v2418 = vsel %vm2408, %v2379, %v2387
  %v2419 = vsel %vm2408, %v2381, %v2389
  %v2420 = vsel %vm2408, %v2383, %v2391
  %v2421 = vsel %vm2408, %v2401, %v2377
  %v2422 = vsel %vm2408, %v2403, %v2379
  %v2423 = vsel %vm2408, %v2405, %v2381
  %v2424 = vsel %vm2408, %v2407, %v2383
  %v2425 = vsel %vm2093, 1, 0
  %v2426 = vsel %vm2094, 1, 0
  %v2427 = vsel %vm2095, 1, 0
  %v2428 = vsel %vm2096, 1, 0
  %vm2429 = vcmp.eq.s32.totalorder %v2425, 1
  %vm2430 = vcmp.eq.s32.totalorder %v2426, 1
  %vm2431 = vcmp.eq.s32.totalorder %v2427, 1
  %vm2432 = vcmp.eq.s32.totalorder %v2428, 1
  %v2433 = vsel %vm2429, %v2421, 0.0
  %v2434 = vsel %vm2430, %v2417, 0.0
  %v2435 = vsel %vm2431, %v2413, 0.0
  %v2436 = vsel %vm2432, %v2409, 0.0
  %v2437 = vsel %vm2429, %v2422, 0.0
  %v2438 = vsel %vm2430, %v2418, 0.0
  %v2439 = vsel %vm2431, %v2414, 0.0
  %v2440 = vsel %vm2432, %v2410, 0.0
  %v2441 = vsel %vm2429, %v2423, 0.0
  %v2442 = vsel %vm2430, %v2419, 0.0
  %v2443 = vsel %vm2431, %v2415, 0.0
  %v2444 = vsel %vm2432, %v2411, 0.0
  %v2445 = vsel %vm2429, %v2424, 0.0
  %v2446 = vsel %vm2430, %v2420, 0.0
  %v2447 = vsel %vm2431, %v2416, 0.0
  %v2448 = vsel %vm2432, %v2412, 0.0
  %v2449 = vadd.f32 %v2360, %v2433
  %v2450 = vadd.f32 %v2361, %v2434
  %v2451 = vadd.f32 %v2362, %v2435
  %v2452 = vadd.f32 %v2363, %v2436
  %v2453 = vadd.f32 %v2364, %v2437
  %v2454 = vadd.f32 %v2365, %v2438
  %v2455 = vadd.f32 %v2366, %v2439
  %v2456 = vadd.f32 %v2367, %v2440
  %v2457 = vadd.f32 %v2368, %v2441
  %v2458 = vadd.f32 %v2369, %v2442
  %v2459 = vadd.f32 %v2370, %v2443
  %v2460 = vadd.f32 %v2371, %v2444
  %v2461 = vadd.f32 %v2372, %v2445
  %v2462 = vadd.f32 %v2373, %v2446
  %v2463 = vadd.f32 %v2374, %v2447
  %v2464 = vadd.f32 %v2375, %v2448
  %2465 = vrot.lane.b32.xlu0 %v1054, 125
  %v2466 = vpop.permute.xlu0 %2465
  %2467 = vrot.lane.b32.xlu0 %v1058, 125
  %v2468 = vpop.permute.xlu0 %2467
  %2469 = vrot.lane.b32.xlu0 %v1064, 125
  %v2470 = vpop.permute.xlu0 %2469
  %2471 = vrot.lane.b32.xlu0 %v1068, 125
  %v2472 = vpop.permute.xlu0 %2471
  %2473 = vrot.lane.b32.xlu0 %v1056, 125
  %v2474 = vpop.permute.xlu0 %2473
  %2475 = vrot.lane.b32.xlu0 %v1060, 125
  %v2476 = vpop.permute.xlu0 %2475
  %2477 = vrot.lane.b32.xlu0 %v1066, 125
  %v2478 = vpop.permute.xlu0 %2477
  %2479 = vrot.lane.b32.xlu0 %v1070, 125
  %v2480 = vpop.permute.xlu0 %2479
  %2481 = vrot.lane.b32.xlu0 %v1647, 125
  %v2482 = vpop.permute.xlu0 %2481
  %2483 = vrot.lane.b32.xlu0 %v1651, 125
  %v2484 = vpop.permute.xlu0 %2483
  %2485 = vrot.lane.b32.xlu0 %v1657, 125
  %v2486 = vpop.permute.xlu0 %2485
  %2487 = vrot.lane.b32.xlu0 %v1661, 125
  %v2488 = vpop.permute.xlu0 %2487
  %2489 = vrot.lane.b32.xlu0 %v1649, 125
  %v2490 = vpop.permute.xlu0 %2489
  %2491 = vrot.lane.b32.xlu0 %v1653, 125
  %v2492 = vpop.permute.xlu0 %2491
  %2493 = vrot.lane.b32.xlu0 %v1659, 125
  %v2494 = vpop.permute.xlu0 %2493
  %2495 = vrot.lane.b32.xlu0 %v1663, 125
  %v2496 = vpop.permute.xlu0 %2495
  %vm2497 = vcmp.lt.s32.totalorder %v18, 125
  %v2498 = vsel %vm2497, %v2482, %v2490
  %v2499 = vsel %vm2497, %v2484, %v2492
  %v2500 = vsel %vm2497, %v2486, %v2494
  %v2501 = vsel %vm2497, %v2488, %v2496
  %v2502 = vsel %vm2497, %v2474, %v2482
  %v2503 = vsel %vm2497, %v2476, %v2484
  %v2504 = vsel %vm2497, %v2478, %v2486
  %v2505 = vsel %vm2497, %v2480, %v2488
  %v2506 = vsel %vm2497, %v2466, %v2474
  %v2507 = vsel %vm2497, %v2468, %v2476
  %v2508 = vsel %vm2497, %v2470, %v2478
  %v2509 = vsel %vm2497, %v2472, %v2480
  %v2510 = vsel %vm2497, %v2490, %v2466
  %v2511 = vsel %vm2497, %v2492, %v2468
  %v2512 = vsel %vm2497, %v2494, %v2470
  %v2513 = vsel %vm2497, %v2496, %v2472
  %v2514 = vsel %vm2097, 1, 0
  %v2515 = vsel %vm2098, 1, 0
  %v2516 = vsel %vm2099, 1, 0
  %v2517 = vsel %vm2100, 1, 0
  %vm2518 = vcmp.eq.s32.totalorder %v2514, 1
  %vm2519 = vcmp.eq.s32.totalorder %v2515, 1
  %vm2520 = vcmp.eq.s32.totalorder %v2516, 1
  %vm2521 = vcmp.eq.s32.totalorder %v2517, 1
  %v2522 = vsel %vm2518, %v2506, 0.0
  %v2523 = vsel %vm2519, %v2502, 0.0
  %v2524 = vsel %vm2520, %v2498, 0.0
  %v2525 = vsel %vm2521, %v2510, 0.0
  %v2526 = vsel %vm2518, %v2507, 0.0
  %v2527 = vsel %vm2519, %v2503, 0.0
  %v2528 = vsel %vm2520, %v2499, 0.0
  %v2529 = vsel %vm2521, %v2511, 0.0
  %v2530 = vsel %vm2518, %v2508, 0.0
  %v2531 = vsel %vm2519, %v2504, 0.0
  %v2532 = vsel %vm2520, %v2500, 0.0
  %v2533 = vsel %vm2521, %v2512, 0.0
  %v2534 = vsel %vm2518, %v2509, 0.0
  %v2535 = vsel %vm2519, %v2505, 0.0
  %v2536 = vsel %vm2520, %v2501, 0.0
  %v2537 = vsel %vm2521, %v2513, 0.0
  %v2538 = vadd.f32 %v2449, %v2522
  %v2539 = vadd.f32 %v2450, %v2523
  %v2540 = vadd.f32 %v2451, %v2524
  %v2541 = vadd.f32 %v2452, %v2525
  %v2542 = vadd.f32 %v2453, %v2526
  %v2543 = vadd.f32 %v2454, %v2527
  %v2544 = vadd.f32 %v2455, %v2528
  %v2545 = vadd.f32 %v2456, %v2529
  %v2546 = vadd.f32 %v2457, %v2530
  %v2547 = vadd.f32 %v2458, %v2531
  %v2548 = vadd.f32 %v2459, %v2532
  %v2549 = vadd.f32 %v2460, %v2533
  %v2550 = vadd.f32 %v2461, %v2534
  %v2551 = vadd.f32 %v2462, %v2535
  %v2552 = vadd.f32 %v2463, %v2536
  %v2553 = vadd.f32 %v2464, %v2537
  %2554 = vrot.lane.b32.xlu0 %v1074, 83
  %v2555 = vpop.permute.xlu0 %2554
  %2556 = vrot.lane.b32.xlu0 %v1078, 83
  %v2557 = vpop.permute.xlu0 %2556
  %2558 = vrot.lane.b32.xlu0 %v1084, 83
  %v2559 = vpop.permute.xlu0 %2558
  %2560 = vrot.lane.b32.xlu0 %v1088, 83
  %v2561 = vpop.permute.xlu0 %2560
  %2562 = vrot.lane.b32.xlu0 %v1076, 83
  %v2563 = vpop.permute.xlu0 %2562
  %2564 = vrot.lane.b32.xlu0 %v1080, 83
  %v2565 = vpop.permute.xlu0 %2564
  %2566 = vrot.lane.b32.xlu0 %v1086, 83
  %v2567 = vpop.permute.xlu0 %2566
  %2568 = vrot.lane.b32.xlu0 %v1090, 83
  %v2569 = vpop.permute.xlu0 %2568
  %2570 = vrot.lane.b32.xlu0 %v1667, 83
  %v2571 = vpop.permute.xlu0 %2570
  %2572 = vrot.lane.b32.xlu0 %v1671, 83
  %v2573 = vpop.permute.xlu0 %2572
  %2574 = vrot.lane.b32.xlu0 %v1677, 83
  %v2575 = vpop.permute.xlu0 %2574
  %2576 = vrot.lane.b32.xlu0 %v1681, 83
  %v2577 = vpop.permute.xlu0 %2576
  %2578 = vrot.lane.b32.xlu0 %v1669, 83
  %v2579 = vpop.permute.xlu0 %2578
  %2580 = vrot.lane.b32.xlu0 %v1673, 83
  %v2581 = vpop.permute.xlu0 %2580
  %2582 = vrot.lane.b32.xlu0 %v1679, 83
  %v2583 = vpop.permute.xlu0 %2582
  %2584 = vrot.lane.b32.xlu0 %v1683, 83
  %v2585 = vpop.permute.xlu0 %2584
  %vm2586 = vcmp.lt.s32.totalorder %v18, 83
  %v2587 = vsel %vm2586, %v2571, %v2579
  %v2588 = vsel %vm2586, %v2573, %v2581
  %v2589 = vsel %vm2586, %v2575, %v2583
  %v2590 = vsel %vm2586, %v2577, %v2585
  %v2591 = vsel %vm2586, %v2563, %v2571
  %v2592 = vsel %vm2586, %v2565, %v2573
  %v2593 = vsel %vm2586, %v2567, %v2575
  %v2594 = vsel %vm2586, %v2569, %v2577
  %v2595 = vsel %vm2586, %v2555, %v2563
  %v2596 = vsel %vm2586, %v2557, %v2565
  %v2597 = vsel %vm2586, %v2559, %v2567
  %v2598 = vsel %vm2586, %v2561, %v2569
  %v2599 = vsel %vm2586, %v2579, %v2555
  %v2600 = vsel %vm2586, %v2581, %v2557
  %v2601 = vsel %vm2586, %v2583, %v2559
  %v2602 = vsel %vm2586, %v2585, %v2561
  %vm2603 = vmand %vm2089, %vm2093
  %vm2604 = vmand %vm2090, %vm2094
  %vm2605 = vmand %vm2091, %vm2095
  %vm2606 = vmand %vm2092, %vm2096
  %v2607 = vsel %vm2603, 1, 0
  %v2608 = vsel %vm2604, 1, 0
  %v2609 = vsel %vm2605, 1, 0
  %v2610 = vsel %vm2606, 1, 0
  %vm2611 = vcmp.eq.s32.totalorder %v2607, 1
  %vm2612 = vcmp.eq.s32.totalorder %v2608, 1
  %vm2613 = vcmp.eq.s32.totalorder %v2609, 1
  %vm2614 = vcmp.eq.s32.totalorder %v2610, 1
  %v2615 = vsel %vm2611, %v2595, 0.0
  %v2616 = vsel %vm2612, %v2591, 0.0
  %v2617 = vsel %vm2613, %v2587, 0.0
  %v2618 = vsel %vm2614, %v2599, 0.0
  %v2619 = vsel %vm2611, %v2596, 0.0
  %v2620 = vsel %vm2612, %v2592, 0.0
  %v2621 = vsel %vm2613, %v2588, 0.0
  %v2622 = vsel %vm2614, %v2600, 0.0
  %v2623 = vsel %vm2611, %v2597, 0.0
  %v2624 = vsel %vm2612, %v2593, 0.0
  %v2625 = vsel %vm2613, %v2589, 0.0
  %v2626 = vsel %vm2614, %v2601, 0.0
  %v2627 = vsel %vm2611, %v2598, 0.0
  %v2628 = vsel %vm2612, %v2594, 0.0
  %v2629 = vsel %vm2613, %v2590, 0.0
  %v2630 = vsel %vm2614, %v2602, 0.0
  %v2631 = vadd.f32 %v2538, %v2615
  %v2632 = vadd.f32 %v2539, %v2616
  %v2633 = vadd.f32 %v2540, %v2617
  %v2634 = vadd.f32 %v2541, %v2618
  %v2635 = vadd.f32 %v2542, %v2619
  %v2636 = vadd.f32 %v2543, %v2620
  %v2637 = vadd.f32 %v2544, %v2621
  %v2638 = vadd.f32 %v2545, %v2622
  %v2639 = vadd.f32 %v2546, %v2623
  %v2640 = vadd.f32 %v2547, %v2624
  %v2641 = vadd.f32 %v2548, %v2625
  %v2642 = vadd.f32 %v2549, %v2626
  %v2643 = vadd.f32 %v2550, %v2627
  %v2644 = vadd.f32 %v2551, %v2628
  %v2645 = vadd.f32 %v2552, %v2629
  %v2646 = vadd.f32 %v2553, %v2630
  %2647 = vrot.lane.b32.xlu0 %v1094, 80
  %v2648 = vpop.permute.xlu0 %2647
  %2649 = vrot.lane.b32.xlu0 %v1098, 80
  %v2650 = vpop.permute.xlu0 %2649
  %2651 = vrot.lane.b32.xlu0 %v1104, 80
  %v2652 = vpop.permute.xlu0 %2651
  %2653 = vrot.lane.b32.xlu0 %v1108, 80
  %v2654 = vpop.permute.xlu0 %2653
  %2655 = vrot.lane.b32.xlu0 %v1096, 80
  %v2656 = vpop.permute.xlu0 %2655
  %2657 = vrot.lane.b32.xlu0 %v1100, 80
  %v2658 = vpop.permute.xlu0 %2657
  %2659 = vrot.lane.b32.xlu0 %v1106, 80
  %v2660 = vpop.permute.xlu0 %2659
  %2661 = vrot.lane.b32.xlu0 %v1110, 80
  %v2662 = vpop.permute.xlu0 %2661
  %2663 = vrot.lane.b32.xlu0 %v1687, 80
  %v2664 = vpop.permute.xlu0 %2663
  %2665 = vrot.lane.b32.xlu0 %v1691, 80
  %v2666 = vpop.permute.xlu0 %2665
  %2667 = vrot.lane.b32.xlu0 %v1697, 80
  %v2668 = vpop.permute.xlu0 %2667
  %2669 = vrot.lane.b32.xlu0 %v1701, 80
  %v2670 = vpop.permute.xlu0 %2669
  %2671 = vrot.lane.b32.xlu0 %v1689, 80
  %v2672 = vpop.permute.xlu0 %2671
  %2673 = vrot.lane.b32.xlu0 %v1693, 80
  %v2674 = vpop.permute.xlu0 %2673
  %2675 = vrot.lane.b32.xlu0 %v1699, 80
  %v2676 = vpop.permute.xlu0 %2675
  %2677 = vrot.lane.b32.xlu0 %v1703, 80
  %v2678 = vpop.permute.xlu0 %2677
  %vm2679 = vcmp.lt.s32.totalorder %v18, 80
  %v2680 = vsel %vm2679, %v2664, %v2672
  %v2681 = vsel %vm2679, %v2666, %v2674
  %v2682 = vsel %vm2679, %v2668, %v2676
  %v2683 = vsel %vm2679, %v2670, %v2678
  %v2684 = vsel %vm2679, %v2656, %v2664
  %v2685 = vsel %vm2679, %v2658, %v2666
  %v2686 = vsel %vm2679, %v2660, %v2668
  %v2687 = vsel %vm2679, %v2662, %v2670
  %v2688 = vsel %vm2679, %v2648, %v2656
  %v2689 = vsel %vm2679, %v2650, %v2658
  %v2690 = vsel %vm2679, %v2652, %v2660
  %v2691 = vsel %vm2679, %v2654, %v2662
  %v2692 = vsel %vm2679, %v2672, %v2648
  %v2693 = vsel %vm2679, %v2674, %v2650
  %v2694 = vsel %vm2679, %v2676, %v2652
  %v2695 = vsel %vm2679, %v2678, %v2654
  %v2696 = vsel %vm2089, 1, 0
  %v2697 = vsel %vm2090, 1, 0
  %v2698 = vsel %vm2091, 1, 0
  %v2699 = vsel %vm2092, 1, 0
  %vm2700 = vcmp.eq.s32.totalorder %v2696, 1
  %vm2701 = vcmp.eq.s32.totalorder %v2697, 1
  %vm2702 = vcmp.eq.s32.totalorder %v2698, 1
  %vm2703 = vcmp.eq.s32.totalorder %v2699, 1
  %v2704 = vsel %vm2700, %v2688, 0.0
  %v2705 = vsel %vm2701, %v2684, 0.0
  %v2706 = vsel %vm2702, %v2680, 0.0
  %v2707 = vsel %vm2703, %v2692, 0.0
  %v2708 = vsel %vm2700, %v2689, 0.0
  %v2709 = vsel %vm2701, %v2685, 0.0
  %v2710 = vsel %vm2702, %v2681, 0.0
  %v2711 = vsel %vm2703, %v2693, 0.0
  %v2712 = vsel %vm2700, %v2690, 0.0
  %v2713 = vsel %vm2701, %v2686, 0.0
  %v2714 = vsel %vm2702, %v2682, 0.0
  %v2715 = vsel %vm2703, %v2694, 0.0
  %v2716 = vsel %vm2700, %v2691, 0.0
  %v2717 = vsel %vm2701, %v2687, 0.0
  %v2718 = vsel %vm2702, %v2683, 0.0
  %v2719 = vsel %vm2703, %v2695, 0.0
  %v2720 = vadd.f32 %v2631, %v2704
  %v2721 = vadd.f32 %v2632, %v2705
  %v2722 = vadd.f32 %v2633, %v2706
  %v2723 = vadd.f32 %v2634, %v2707
  %v2724 = vadd.f32 %v2635, %v2708
  %v2725 = vadd.f32 %v2636, %v2709
  %v2726 = vadd.f32 %v2637, %v2710
  %v2727 = vadd.f32 %v2638, %v2711
  %v2728 = vadd.f32 %v2639, %v2712
  %v2729 = vadd.f32 %v2640, %v2713
  %v2730 = vadd.f32 %v2641, %v2714
  %v2731 = vadd.f32 %v2642, %v2715
  %v2732 = vadd.f32 %v2643, %v2716
  %v2733 = vadd.f32 %v2644, %v2717
  %v2734 = vadd.f32 %v2645, %v2718
  %v2735 = vadd.f32 %v2646, %v2719
  %2736 = vrot.lane.b32.xlu0 %v1114, 77
  %v2737 = vpop.permute.xlu0 %2736
  %2738 = vrot.lane.b32.xlu0 %v1118, 77
  %v2739 = vpop.permute.xlu0 %2738
  %2740 = vrot.lane.b32.xlu0 %v1124, 77
  %v2741 = vpop.permute.xlu0 %2740
  %2742 = vrot.lane.b32.xlu0 %v1128, 77
  %v2743 = vpop.permute.xlu0 %2742
  %2744 = vrot.lane.b32.xlu0 %v1116, 77
  %v2745 = vpop.permute.xlu0 %2744
  %2746 = vrot.lane.b32.xlu0 %v1120, 77
  %v2747 = vpop.permute.xlu0 %2746
  %2748 = vrot.lane.b32.xlu0 %v1126, 77
  %v2749 = vpop.permute.xlu0 %2748
  %2750 = vrot.lane.b32.xlu0 %v1130, 77
  %v2751 = vpop.permute.xlu0 %2750
  %2752 = vrot.lane.b32.xlu0 %v1707, 77
  %v2753 = vpop.permute.xlu0 %2752
  %2754 = vrot.lane.b32.xlu0 %v1711, 77
  %v2755 = vpop.permute.xlu0 %2754
  %2756 = vrot.lane.b32.xlu0 %v1717, 77
  %v2757 = vpop.permute.xlu0 %2756
  %2758 = vrot.lane.b32.xlu0 %v1721, 77
  %v2759 = vpop.permute.xlu0 %2758
  %2760 = vrot.lane.b32.xlu0 %v1709, 77
  %v2761 = vpop.permute.xlu0 %2760
  %2762 = vrot.lane.b32.xlu0 %v1713, 77
  %v2763 = vpop.permute.xlu0 %2762
  %2764 = vrot.lane.b32.xlu0 %v1719, 77
  %v2765 = vpop.permute.xlu0 %2764
  %2766 = vrot.lane.b32.xlu0 %v1723, 77
  %v2767 = vpop.permute.xlu0 %2766
  %vm2768 = vcmp.lt.s32.totalorder %v18, 77
  %v2769 = vsel %vm2768, %v2753, %v2761
  %v2770 = vsel %vm2768, %v2755, %v2763
  %v2771 = vsel %vm2768, %v2757, %v2765
  %v2772 = vsel %vm2768, %v2759, %v2767
  %v2773 = vsel %vm2768, %v2745, %v2753
  %v2774 = vsel %vm2768, %v2747, %v2755
  %v2775 = vsel %vm2768, %v2749, %v2757
  %v2776 = vsel %vm2768, %v2751, %v2759
  %v2777 = vsel %vm2768, %v2737, %v2745
  %v2778 = vsel %vm2768, %v2739, %v2747
  %v2779 = vsel %vm2768, %v2741, %v2749
  %v2780 = vsel %vm2768, %v2743, %v2751
  %v2781 = vsel %vm2768, %v2761, %v2737
  %v2782 = vsel %vm2768, %v2763, %v2739
  %v2783 = vsel %vm2768, %v2765, %v2741
  %v2784 = vsel %vm2768, %v2767, %v2743
  %vm2785 = vmand %vm2089, %vm2097
  %vm2786 = vmand %vm2090, %vm2098
  %vm2787 = vmand %vm2091, %vm2099
  %vm2788 = vmand %vm2092, %vm2100
  %v2789 = vsel %vm2785, 1, 0
  %v2790 = vsel %vm2786, 1, 0
  %v2791 = vsel %vm2787, 1, 0
  %v2792 = vsel %vm2788, 1, 0
  %vm2793 = vcmp.eq.s32.totalorder %v2789, 1
  %vm2794 = vcmp.eq.s32.totalorder %v2790, 1
  %vm2795 = vcmp.eq.s32.totalorder %v2791, 1
  %vm2796 = vcmp.eq.s32.totalorder %v2792, 1
  %v2797 = vsel %vm2793, %v2777, 0.0
  %v2798 = vsel %vm2794, %v2773, 0.0
  %v2799 = vsel %vm2795, %v2769, 0.0
  %v2800 = vsel %vm2796, %v2781, 0.0
  %v2801 = vsel %vm2793, %v2778, 0.0
  %v2802 = vsel %vm2794, %v2774, 0.0
  %v2803 = vsel %vm2795, %v2770, 0.0
  %v2804 = vsel %vm2796, %v2782, 0.0
  %v2805 = vsel %vm2793, %v2779, 0.0
  %v2806 = vsel %vm2794, %v2775, 0.0
  %v2807 = vsel %vm2795, %v2771, 0.0
  %v2808 = vsel %vm2796, %v2783, 0.0
  %v2809 = vsel %vm2793, %v2780, 0.0
  %v2810 = vsel %vm2794, %v2776, 0.0
  %v2811 = vsel %vm2795, %v2772, 0.0
  %v2812 = vsel %vm2796, %v2784, 0.0
  %v2813 = vadd.f32 %v2720, %v2797
  %v2814 = vadd.f32 %v2721, %v2798
  %v2815 = vadd.f32 %v2722, %v2799
  %v2816 = vadd.f32 %v2723, %v2800
  %v2817 = vadd.f32 %v2724, %v2801
  %v2818 = vadd.f32 %v2725, %v2802
  %v2819 = vadd.f32 %v2726, %v2803
  %v2820 = vadd.f32 %v2727, %v2804
  %v2821 = vadd.f32 %v2728, %v2805
  %v2822 = vadd.f32 %v2729, %v2806
  %v2823 = vadd.f32 %v2730, %v2807
  %v2824 = vadd.f32 %v2731, %v2808
  %v2825 = vadd.f32 %v2732, %v2809
  %v2826 = vadd.f32 %v2733, %v2810
  %v2827 = vadd.f32 %v2734, %v2811
  %v2828 = vadd.f32 %v2735, %v2812
  %vm2829 = vcmp.ge.s32.totalorder %v30, 5
  %vm2830 = vcmp.ge.s32.totalorder %v31, 5
  %vm2831 = vcmp.ge.s32.totalorder %v32, 5
  %vm2832 = vcmp.ge.s32.totalorder %v33, 5
  %vm2833 = vcmp.lt.s32.totalorder %v30, 11
  %vm2834 = vcmp.lt.s32.totalorder %v31, 11
  %vm2835 = vcmp.lt.s32.totalorder %v32, 11
  %vm2836 = vcmp.lt.s32.totalorder %v33, 11
  %vm2837 = vcmp.ge.s32.totalorder %v22, 5
  %vm2838 = vcmp.ge.s32.totalorder %v23, 5
  %vm2839 = vcmp.ge.s32.totalorder %v24, 5
  %vm2840 = vcmp.ge.s32.totalorder %v25, 5
  %vm2841 = vcmp.lt.s32.totalorder %v22, 11
  %vm2842 = vcmp.lt.s32.totalorder %v23, 11
  %vm2843 = vcmp.lt.s32.totalorder %v24, 11
  %vm2844 = vcmp.lt.s32.totalorder %v25, 11
  %2845 = vrot.lane.b32.xlu0 %v1134, 85
  %v2846 = vpop.permute.xlu0 %2845
  %2847 = vrot.lane.b32.xlu0 %v1138, 85
  %v2848 = vpop.permute.xlu0 %2847
  %2849 = vrot.lane.b32.xlu0 %v1144, 85
  %v2850 = vpop.permute.xlu0 %2849
  %2851 = vrot.lane.b32.xlu0 %v1148, 85
  %v2852 = vpop.permute.xlu0 %2851
  %2853 = vrot.lane.b32.xlu0 %v1136, 85
  %v2854 = vpop.permute.xlu0 %2853
  %2855 = vrot.lane.b32.xlu0 %v1140, 85
  %v2856 = vpop.permute.xlu0 %2855
  %2857 = vrot.lane.b32.xlu0 %v1146, 85
  %v2858 = vpop.permute.xlu0 %2857
  %2859 = vrot.lane.b32.xlu0 %v1150, 85
  %v2860 = vpop.permute.xlu0 %2859
  %2861 = vrot.lane.b32.xlu0 %v1727, 85
  %v2862 = vpop.permute.xlu0 %2861
  %2863 = vrot.lane.b32.xlu0 %v1731, 85
  %v2864 = vpop.permute.xlu0 %2863
  %2865 = vrot.lane.b32.xlu0 %v1737, 85
  %v2866 = vpop.permute.xlu0 %2865
  %2867 = vrot.lane.b32.xlu0 %v1741, 85
  %v2868 = vpop.permute.xlu0 %2867
  %2869 = vrot.lane.b32.xlu0 %v1729, 85
  %v2870 = vpop.permute.xlu0 %2869
  %2871 = vrot.lane.b32.xlu0 %v1733, 85
  %v2872 = vpop.permute.xlu0 %2871
  %2873 = vrot.lane.b32.xlu0 %v1739, 85
  %v2874 = vpop.permute.xlu0 %2873
  %2875 = vrot.lane.b32.xlu0 %v1743, 85
  %v2876 = vpop.permute.xlu0 %2875
  %vm2877 = vcmp.lt.s32.totalorder %v18, 85
  %v2878 = vsel %vm2877, %v2862, %v2870
  %v2879 = vsel %vm2877, %v2864, %v2872
  %v2880 = vsel %vm2877, %v2866, %v2874
  %v2881 = vsel %vm2877, %v2868, %v2876
  %v2882 = vsel %vm2877, %v2854, %v2862
  %v2883 = vsel %vm2877, %v2856, %v2864
  %v2884 = vsel %vm2877, %v2858, %v2866
  %v2885 = vsel %vm2877, %v2860, %v2868
  %v2886 = vsel %vm2877, %v2846, %v2854
  %v2887 = vsel %vm2877, %v2848, %v2856
  %v2888 = vsel %vm2877, %v2850, %v2858
  %v2889 = vsel %vm2877, %v2852, %v2860
  %v2890 = vsel %vm2877, %v2870, %v2846
  %v2891 = vsel %vm2877, %v2872, %v2848
  %v2892 = vsel %vm2877, %v2874, %v2850
  %v2893 = vsel %vm2877, %v2876, %v2852
  %vm2894 = vmand %vm2829, %vm2837
  %vm2895 = vmand %vm2830, %vm2838
  %vm2896 = vmand %vm2831, %vm2839
  %vm2897 = vmand %vm2832, %vm2840
  %v2898 = vsel %vm2894, 1, 0
  %v2899 = vsel %vm2895, 1, 0
  %v2900 = vsel %vm2896, 1, 0
  %v2901 = vsel %vm2897, 1, 0
  %vm2902 = vcmp.eq.s32.totalorder %v2898, 1
  %vm2903 = vcmp.eq.s32.totalorder %v2899, 1
  %vm2904 = vcmp.eq.s32.totalorder %v2900, 1
  %vm2905 = vcmp.eq.s32.totalorder %v2901, 1
  %v2906 = vsel %vm2902, %v2890, 0.0
  %v2907 = vsel %vm2903, %v2886, 0.0
  %v2908 = vsel %vm2904, %v2882, 0.0
  %v2909 = vsel %vm2905, %v2878, 0.0
  %v2910 = vsel %vm2902, %v2891, 0.0
  %v2911 = vsel %vm2903, %v2887, 0.0
  %v2912 = vsel %vm2904, %v2883, 0.0
  %v2913 = vsel %vm2905, %v2879, 0.0
  %v2914 = vsel %vm2902, %v2892, 0.0
  %v2915 = vsel %vm2903, %v2888, 0.0
  %v2916 = vsel %vm2904, %v2884, 0.0
  %v2917 = vsel %vm2905, %v2880, 0.0
  %v2918 = vsel %vm2902, %v2893, 0.0
  %v2919 = vsel %vm2903, %v2889, 0.0
  %v2920 = vsel %vm2904, %v2885, 0.0
  %v2921 = vsel %vm2905, %v2881, 0.0
  %v2922 = vadd.f32 %v1214, %v2906
  %v2923 = vadd.f32 %v1216, %v2907
  %v2924 = vadd.f32 %v1807, %v2908
  %v2925 = vadd.f32 %v1809, %v2909
  %v2926 = vadd.f32 %v1218, %v2910
  %v2927 = vadd.f32 %v1220, %v2911
  %v2928 = vadd.f32 %v1811, %v2912
  %v2929 = vadd.f32 %v1813, %v2913
  %v2930 = vadd.f32 %v1224, %v2914
  %v2931 = vadd.f32 %v1226, %v2915
  %v2932 = vadd.f32 %v1817, %v2916
  %v2933 = vadd.f32 %v1819, %v2917
  %v2934 = vadd.f32 %v1228, %v2918
  %v2935 = vadd.f32 %v1230, %v2919
  %v2936 = vadd.f32 %v1821, %v2920
  %v2937 = vadd.f32 %v1823, %v2921
  %2938 = vrot.lane.b32.xlu0 %v1154, 80
  %v2939 = vpop.permute.xlu0 %2938
  %2940 = vrot.lane.b32.xlu0 %v1158, 80
  %v2941 = vpop.permute.xlu0 %2940
  %2942 = vrot.lane.b32.xlu0 %v1164, 80
  %v2943 = vpop.permute.xlu0 %2942
  %2944 = vrot.lane.b32.xlu0 %v1168, 80
  %v2945 = vpop.permute.xlu0 %2944
  %2946 = vrot.lane.b32.xlu0 %v1156, 80
  %v2947 = vpop.permute.xlu0 %2946
  %2948 = vrot.lane.b32.xlu0 %v1160, 80
  %v2949 = vpop.permute.xlu0 %2948
  %2950 = vrot.lane.b32.xlu0 %v1166, 80
  %v2951 = vpop.permute.xlu0 %2950
  %2952 = vrot.lane.b32.xlu0 %v1170, 80
  %v2953 = vpop.permute.xlu0 %2952
  %2954 = vrot.lane.b32.xlu0 %v1747, 80
  %v2955 = vpop.permute.xlu0 %2954
  %2956 = vrot.lane.b32.xlu0 %v1751, 80
  %v2957 = vpop.permute.xlu0 %2956
  %2958 = vrot.lane.b32.xlu0 %v1757, 80
  %v2959 = vpop.permute.xlu0 %2958
  %2960 = vrot.lane.b32.xlu0 %v1761, 80
  %v2961 = vpop.permute.xlu0 %2960
  %2962 = vrot.lane.b32.xlu0 %v1749, 80
  %v2963 = vpop.permute.xlu0 %2962
  %2964 = vrot.lane.b32.xlu0 %v1753, 80
  %v2965 = vpop.permute.xlu0 %2964
  %2966 = vrot.lane.b32.xlu0 %v1759, 80
  %v2967 = vpop.permute.xlu0 %2966
  %2968 = vrot.lane.b32.xlu0 %v1763, 80
  %v2969 = vpop.permute.xlu0 %2968
  %v2970 = vsel %vm2679, %v2955, %v2963
  %v2971 = vsel %vm2679, %v2957, %v2965
  %v2972 = vsel %vm2679, %v2959, %v2967
  %v2973 = vsel %vm2679, %v2961, %v2969
  %v2974 = vsel %vm2679, %v2947, %v2955
  %v2975 = vsel %vm2679, %v2949, %v2957
  %v2976 = vsel %vm2679, %v2951, %v2959
  %v2977 = vsel %vm2679, %v2953, %v2961
  %v2978 = vsel %vm2679, %v2939, %v2947
  %v2979 = vsel %vm2679, %v2941, %v2949
  %v2980 = vsel %vm2679, %v2943, %v2951
  %v2981 = vsel %vm2679, %v2945, %v2953
  %v2982 = vsel %vm2679, %v2963, %v2939
  %v2983 = vsel %vm2679, %v2965, %v2941
  %v2984 = vsel %vm2679, %v2967, %v2943
  %v2985 = vsel %vm2679, %v2969, %v2945
  %v2986 = vsel %vm2829, 1, 0
  %v2987 = vsel %vm2830, 1, 0
  %v2988 = vsel %vm2831, 1, 0
  %v2989 = vsel %vm2832, 1, 0
  %vm2990 = vcmp.eq.s32.totalorder %v2986, 1
  %vm2991 = vcmp.eq.s32.totalorder %v2987, 1
  %vm2992 = vcmp.eq.s32.totalorder %v2988, 1
  %vm2993 = vcmp.eq.s32.totalorder %v2989, 1
  %v2994 = vsel %vm2990, %v2982, 0.0
  %v2995 = vsel %vm2991, %v2978, 0.0
  %v2996 = vsel %vm2992, %v2974, 0.0
  %v2997 = vsel %vm2993, %v2970, 0.0
  %v2998 = vsel %vm2990, %v2983, 0.0
  %v2999 = vsel %vm2991, %v2979, 0.0
  %v3000 = vsel %vm2992, %v2975, 0.0
  %v3001 = vsel %vm2993, %v2971, 0.0
  %v3002 = vsel %vm2990, %v2984, 0.0
  %v3003 = vsel %vm2991, %v2980, 0.0
  %v3004 = vsel %vm2992, %v2976, 0.0
  %v3005 = vsel %vm2993, %v2972, 0.0
  %v3006 = vsel %vm2990, %v2985, 0.0
  %v3007 = vsel %vm2991, %v2981, 0.0
  %v3008 = vsel %vm2992, %v2977, 0.0
  %v3009 = vsel %vm2993, %v2973, 0.0
  %v3010 = vadd.f32 %v2922, %v2994
  %v3011 = vadd.f32 %v2923, %v2995
  %v3012 = vadd.f32 %v2924, %v2996
  %v3013 = vadd.f32 %v2925, %v2997
  %v3014 = vadd.f32 %v2926, %v2998
  %v3015 = vadd.f32 %v2927, %v2999
  %v3016 = vadd.f32 %v2928, %v3000
  %v3017 = vadd.f32 %v2929, %v3001
  %v3018 = vadd.f32 %v2930, %v3002
  %v3019 = vadd.f32 %v2931, %v3003
  %v3020 = vadd.f32 %v2932, %v3004
  %v3021 = vadd.f32 %v2933, %v3005
  %v3022 = vadd.f32 %v2934, %v3006
  %v3023 = vadd.f32 %v2935, %v3007
  %v3024 = vadd.f32 %v2936, %v3008
  %v3025 = vadd.f32 %v2937, %v3009
  %3026 = vrot.lane.b32.xlu0 %v1174, 75
  %v3027 = vpop.permute.xlu0 %3026
  %3028 = vrot.lane.b32.xlu0 %v1178, 75
  %v3029 = vpop.permute.xlu0 %3028
  %3030 = vrot.lane.b32.xlu0 %v1184, 75
  %v3031 = vpop.permute.xlu0 %3030
  %3032 = vrot.lane.b32.xlu0 %v1188, 75
  %v3033 = vpop.permute.xlu0 %3032
  %3034 = vrot.lane.b32.xlu0 %v1176, 75
  %v3035 = vpop.permute.xlu0 %3034
  %3036 = vrot.lane.b32.xlu0 %v1180, 75
  %v3037 = vpop.permute.xlu0 %3036
  %3038 = vrot.lane.b32.xlu0 %v1186, 75
  %v3039 = vpop.permute.xlu0 %3038
  %3040 = vrot.lane.b32.xlu0 %v1190, 75
  %v3041 = vpop.permute.xlu0 %3040
  %3042 = vrot.lane.b32.xlu0 %v1767, 75
  %v3043 = vpop.permute.xlu0 %3042
  %3044 = vrot.lane.b32.xlu0 %v1771, 75
  %v3045 = vpop.permute.xlu0 %3044
  %3046 = vrot.lane.b32.xlu0 %v1777, 75
  %v3047 = vpop.permute.xlu0 %3046
  %3048 = vrot.lane.b32.xlu0 %v1781, 75
  %v3049 = vpop.permute.xlu0 %3048
  %3050 = vrot.lane.b32.xlu0 %v1769, 75
  %v3051 = vpop.permute.xlu0 %3050
  %3052 = vrot.lane.b32.xlu0 %v1773, 75
  %v3053 = vpop.permute.xlu0 %3052
  %3054 = vrot.lane.b32.xlu0 %v1779, 75
  %v3055 = vpop.permute.xlu0 %3054
  %3056 = vrot.lane.b32.xlu0 %v1783, 75
  %v3057 = vpop.permute.xlu0 %3056
  %vm3058 = vcmp.lt.s32.totalorder %v18, 75
  %v3059 = vsel %vm3058, %v3043, %v3051
  %v3060 = vsel %vm3058, %v3045, %v3053
  %v3061 = vsel %vm3058, %v3047, %v3055
  %v3062 = vsel %vm3058, %v3049, %v3057
  %v3063 = vsel %vm3058, %v3035, %v3043
  %v3064 = vsel %vm3058, %v3037, %v3045
  %v3065 = vsel %vm3058, %v3039, %v3047
  %v3066 = vsel %vm3058, %v3041, %v3049
  %v3067 = vsel %vm3058, %v3027, %v3035
  %v3068 = vsel %vm3058, %v3029, %v3037
  %v3069 = vsel %vm3058, %v3031, %v3039
  %v3070 = vsel %vm3058, %v3033, %v3041
  %v3071 = vsel %vm3058, %v3051, %v3027
  %v3072 = vsel %vm3058, %v3053, %v3029
  %v3073 = vsel %vm3058, %v3055, %v3031
  %v3074 = vsel %vm3058, %v3057, %v3033
  %vm3075 = vmand %vm2829, %vm2841
  %vm3076 = vmand %vm2830, %vm2842
  %vm3077 = vmand %vm2831, %vm2843
  %vm3078 = vmand %vm2832, %vm2844
  %v3079 = vsel %vm3075, 1, 0
  %v3080 = vsel %vm3076, 1, 0
  %v3081 = vsel %vm3077, 1, 0
  %v3082 = vsel %vm3078, 1, 0
  %vm3083 = vcmp.eq.s32.totalorder %v3079, 1
  %vm3084 = vcmp.eq.s32.totalorder %v3080, 1
  %vm3085 = vcmp.eq.s32.totalorder %v3081, 1
  %vm3086 = vcmp.eq.s32.totalorder %v3082, 1
  %v3087 = vsel %vm3083, %v3071, 0.0
  %v3088 = vsel %vm3084, %v3067, 0.0
  %v3089 = vsel %vm3085, %v3063, 0.0
  %v3090 = vsel %vm3086, %v3059, 0.0
  %v3091 = vsel %vm3083, %v3072, 0.0
  %v3092 = vsel %vm3084, %v3068, 0.0
  %v3093 = vsel %vm3085, %v3064, 0.0
  %v3094 = vsel %vm3086, %v3060, 0.0
  %v3095 = vsel %vm3083, %v3073, 0.0
  %v3096 = vsel %vm3084, %v3069, 0.0
  %v3097 = vsel %vm3085, %v3065, 0.0
  %v3098 = vsel %vm3086, %v3061, 0.0
  %v3099 = vsel %vm3083, %v3074, 0.0
  %v3100 = vsel %vm3084, %v3070, 0.0
  %v3101 = vsel %vm3085, %v3066, 0.0
  %v3102 = vsel %vm3086, %v3062, 0.0
  %v3103 = vadd.f32 %v3010, %v3087
  %v3104 = vadd.f32 %v3011, %v3088
  %v3105 = vadd.f32 %v3012, %v3089
  %v3106 = vadd.f32 %v3013, %v3090
  %v3107 = vadd.f32 %v3014, %v3091
  %v3108 = vadd.f32 %v3015, %v3092
  %v3109 = vadd.f32 %v3016, %v3093
  %v3110 = vadd.f32 %v3017, %v3094
  %v3111 = vadd.f32 %v3018, %v3095
  %v3112 = vadd.f32 %v3019, %v3096
  %v3113 = vadd.f32 %v3020, %v3097
  %v3114 = vadd.f32 %v3021, %v3098
  %v3115 = vadd.f32 %v3022, %v3099
  %v3116 = vadd.f32 %v3023, %v3100
  %v3117 = vadd.f32 %v3024, %v3101
  %v3118 = vadd.f32 %v3025, %v3102
  %3119 = vrot.lane.b32.xlu0 %v1194, 5
  %v3120 = vpop.permute.xlu0 %3119
  %3121 = vrot.lane.b32.xlu0 %v1198, 5
  %v3122 = vpop.permute.xlu0 %3121
  %3123 = vrot.lane.b32.xlu0 %v1204, 5
  %v3124 = vpop.permute.xlu0 %3123
  %3125 = vrot.lane.b32.xlu0 %v1208, 5
  %v3126 = vpop.permute.xlu0 %3125
  %3127 = vrot.lane.b32.xlu0 %v1196, 5
  %v3128 = vpop.permute.xlu0 %3127
  %3129 = vrot.lane.b32.xlu0 %v1200, 5
  %v3130 = vpop.permute.xlu0 %3129
  %3131 = vrot.lane.b32.xlu0 %v1206, 5
  %v3132 = vpop.permute.xlu0 %3131
  %3133 = vrot.lane.b32.xlu0 %v1210, 5
  %v3134 = vpop.permute.xlu0 %3133
  %3135 = vrot.lane.b32.xlu0 %v1787, 5
  %v3136 = vpop.permute.xlu0 %3135
  %3137 = vrot.lane.b32.xlu0 %v1791, 5
  %v3138 = vpop.permute.xlu0 %3137
  %3139 = vrot.lane.b32.xlu0 %v1797, 5
  %v3140 = vpop.permute.xlu0 %3139
  %3141 = vrot.lane.b32.xlu0 %v1801, 5
  %v3142 = vpop.permute.xlu0 %3141
  %3143 = vrot.lane.b32.xlu0 %v1789, 5
  %v3144 = vpop.permute.xlu0 %3143
  %3145 = vrot.lane.b32.xlu0 %v1793, 5
  %v3146 = vpop.permute.xlu0 %3145
  %3147 = vrot.lane.b32.xlu0 %v1799, 5
  %v3148 = vpop.permute.xlu0 %3147
  %3149 = vrot.lane.b32.xlu0 %v1803, 5
  %v3150 = vpop.permute.xlu0 %3149
  %vm3151 = vcmp.lt.s32.totalorder %v18, 5
  %v3152 = vsel %vm3151, %v3136, %v3144
  %v3153 = vsel %vm3151, %v3138, %v3146
  %v3154 = vsel %vm3151, %v3140, %v3148
  %v3155 = vsel %vm3151, %v3142, %v3150
  %v3156 = vsel %vm3151, %v3128, %v3136
  %v3157 = vsel %vm3151, %v3130, %v3138
  %v3158 = vsel %vm3151, %v3132, %v3140
  %v3159 = vsel %vm3151, %v3134, %v3142
  %v3160 = vsel %vm3151, %v3120, %v3128
  %v3161 = vsel %vm3151, %v3122, %v3130
  %v3162 = vsel %vm3151, %v3124, %v3132
  %v3163 = vsel %vm3151, %v3126, %v3134
  %v3164 = vsel %vm3151, %v3144, %v3120
  %v3165 = vsel %vm3151, %v3146, %v3122
  %v3166 = vsel %vm3151, %v3148, %v3124
  %v3167 = vsel %vm3151, %v3150, %v3126
  %v3168 = vsel %vm2837, 1, 0
  %v3169 = vsel %vm2838, 1, 0
  %v3170 = vsel %vm2839, 1, 0
  %v3171 = vsel %vm2840, 1, 0
  %vm3172 = vcmp.eq.s32.totalorder %v3168, 1
  %vm3173 = vcmp.eq.s32.totalorder %v3169, 1
  %vm3174 = vcmp.eq.s32.totalorder %v3170, 1
  %vm3175 = vcmp.eq.s32.totalorder %v3171, 1
  %v3176 = vsel %vm3172, %v3164, 0.0
  %v3177 = vsel %vm3173, %v3160, 0.0
  %v3178 = vsel %vm3174, %v3156, 0.0
  %v3179 = vsel %vm3175, %v3152, 0.0
  %v3180 = vsel %vm3172, %v3165, 0.0
  %v3181 = vsel %vm3173, %v3161, 0.0
  %v3182 = vsel %vm3174, %v3157, 0.0
  %v3183 = vsel %vm3175, %v3153, 0.0
  %v3184 = vsel %vm3172, %v3166, 0.0
  %v3185 = vsel %vm3173, %v3162, 0.0
  %v3186 = vsel %vm3174, %v3158, 0.0
  %v3187 = vsel %vm3175, %v3154, 0.0
  %v3188 = vsel %vm3172, %v3167, 0.0
  %v3189 = vsel %vm3173, %v3163, 0.0
  %v3190 = vsel %vm3174, %v3159, 0.0
  %v3191 = vsel %vm3175, %v3155, 0.0
  %v3192 = vadd.f32 %v3103, %v3176
  %v3193 = vadd.f32 %v3104, %v3177
  %v3194 = vadd.f32 %v3105, %v3178
  %v3195 = vadd.f32 %v3106, %v3179
  %v3196 = vadd.f32 %v3107, %v3180
  %v3197 = vadd.f32 %v3108, %v3181
  %v3198 = vadd.f32 %v3109, %v3182
  %v3199 = vadd.f32 %v3110, %v3183
  %v3200 = vadd.f32 %v3111, %v3184
  %v3201 = vadd.f32 %v3112, %v3185
  %v3202 = vadd.f32 %v3113, %v3186
  %v3203 = vadd.f32 %v3114, %v3187
  %v3204 = vadd.f32 %v3115, %v3188
  %v3205 = vadd.f32 %v3116, %v3189
  %v3206 = vadd.f32 %v3117, %v3190
  %v3207 = vadd.f32 %v3118, %v3191
  %3208 = vrot.lane.b32.xlu0 %v1234, 123
  %v3209 = vpop.permute.xlu0 %3208
  %3210 = vrot.lane.b32.xlu0 %v1238, 123
  %v3211 = vpop.permute.xlu0 %3210
  %3212 = vrot.lane.b32.xlu0 %v1244, 123
  %v3213 = vpop.permute.xlu0 %3212
  %3214 = vrot.lane.b32.xlu0 %v1248, 123
  %v3215 = vpop.permute.xlu0 %3214
  %3216 = vrot.lane.b32.xlu0 %v1236, 123
  %v3217 = vpop.permute.xlu0 %3216
  %3218 = vrot.lane.b32.xlu0 %v1240, 123
  %v3219 = vpop.permute.xlu0 %3218
  %3220 = vrot.lane.b32.xlu0 %v1246, 123
  %v3221 = vpop.permute.xlu0 %3220
  %3222 = vrot.lane.b32.xlu0 %v1250, 123
  %v3223 = vpop.permute.xlu0 %3222
  %3224 = vrot.lane.b32.xlu0 %v1827, 123
  %v3225 = vpop.permute.xlu0 %3224
  %3226 = vrot.lane.b32.xlu0 %v1831, 123
  %v3227 = vpop.permute.xlu0 %3226
  %3228 = vrot.lane.b32.xlu0 %v1837, 123
  %v3229 = vpop.permute.xlu0 %3228
  %3230 = vrot.lane.b32.xlu0 %v1841, 123
  %v3231 = vpop.permute.xlu0 %3230
  %3232 = vrot.lane.b32.xlu0 %v1829, 123
  %v3233 = vpop.permute.xlu0 %3232
  %3234 = vrot.lane.b32.xlu0 %v1833, 123
  %v3235 = vpop.permute.xlu0 %3234
  %3236 = vrot.lane.b32.xlu0 %v1839, 123
  %v3237 = vpop.permute.xlu0 %3236
  %3238 = vrot.lane.b32.xlu0 %v1843, 123
  %v3239 = vpop.permute.xlu0 %3238
  %vm3240 = vcmp.lt.s32.totalorder %v18, 123
  %v3241 = vsel %vm3240, %v3225, %v3233
  %v3242 = vsel %vm3240, %v3227, %v3235
  %v3243 = vsel %vm3240, %v3229, %v3237
  %v3244 = vsel %vm3240, %v3231, %v3239
  %v3245 = vsel %vm3240, %v3217, %v3225
  %v3246 = vsel %vm3240, %v3219, %v3227
  %v3247 = vsel %vm3240, %v3221, %v3229
  %v3248 = vsel %vm3240, %v3223, %v3231
  %v3249 = vsel %vm3240, %v3209, %v3217
  %v3250 = vsel %vm3240, %v3211, %v3219
  %v3251 = vsel %vm3240, %v3213, %v3221
  %v3252 = vsel %vm3240, %v3215, %v3223
  %v3253 = vsel %vm3240, %v3233, %v3209
  %v3254 = vsel %vm3240, %v3235, %v3211
  %v3255 = vsel %vm3240, %v3237, %v3213
  %v3256 = vsel %vm3240, %v3239, %v3215
  %v3257 = vsel %vm2841, 1, 0
  %v3258 = vsel %vm2842, 1, 0
  %v3259 = vsel %vm2843, 1, 0
  %v3260 = vsel %vm2844, 1, 0
  %vm3261 = vcmp.eq.s32.totalorder %v3257, 1
  %vm3262 = vcmp.eq.s32.totalorder %v3258, 1
  %vm3263 = vcmp.eq.s32.totalorder %v3259, 1
  %vm3264 = vcmp.eq.s32.totalorder %v3260, 1
  %v3265 = vsel %vm3261, %v3249, 0.0
  %v3266 = vsel %vm3262, %v3245, 0.0
  %v3267 = vsel %vm3263, %v3241, 0.0
  %v3268 = vsel %vm3264, %v3253, 0.0
  %v3269 = vsel %vm3261, %v3250, 0.0
  %v3270 = vsel %vm3262, %v3246, 0.0
  %v3271 = vsel %vm3263, %v3242, 0.0
  %v3272 = vsel %vm3264, %v3254, 0.0
  %v3273 = vsel %vm3261, %v3251, 0.0
  %v3274 = vsel %vm3262, %v3247, 0.0
  %v3275 = vsel %vm3263, %v3243, 0.0
  %v3276 = vsel %vm3264, %v3255, 0.0
  %v3277 = vsel %vm3261, %v3252, 0.0
  %v3278 = vsel %vm3262, %v3248, 0.0
  %v3279 = vsel %vm3263, %v3244, 0.0
  %v3280 = vsel %vm3264, %v3256, 0.0
  %v3281 = vadd.f32 %v3192, %v3265
  %v3282 = vadd.f32 %v3193, %v3266
  %v3283 = vadd.f32 %v3194, %v3267
  %v3284 = vadd.f32 %v3195, %v3268
  %v3285 = vadd.f32 %v3196, %v3269
  %v3286 = vadd.f32 %v3197, %v3270
  %v3287 = vadd.f32 %v3198, %v3271
  %v3288 = vadd.f32 %v3199, %v3272
  %v3289 = vadd.f32 %v3200, %v3273
  %v3290 = vadd.f32 %v3201, %v3274
  %v3291 = vadd.f32 %v3202, %v3275
  %v3292 = vadd.f32 %v3203, %v3276
  %v3293 = vadd.f32 %v3204, %v3277
  %v3294 = vadd.f32 %v3205, %v3278
  %v3295 = vadd.f32 %v3206, %v3279
  %v3296 = vadd.f32 %v3207, %v3280
  %3297 = vrot.lane.b32.xlu0 %v1254, 53
  %v3298 = vpop.permute.xlu0 %3297
  %3299 = vrot.lane.b32.xlu0 %v1258, 53
  %v3300 = vpop.permute.xlu0 %3299
  %3301 = vrot.lane.b32.xlu0 %v1264, 53
  %v3302 = vpop.permute.xlu0 %3301
  %3303 = vrot.lane.b32.xlu0 %v1268, 53
  %v3304 = vpop.permute.xlu0 %3303
  %3305 = vrot.lane.b32.xlu0 %v1256, 53
  %v3306 = vpop.permute.xlu0 %3305
  %3307 = vrot.lane.b32.xlu0 %v1260, 53
  %v3308 = vpop.permute.xlu0 %3307
  %3309 = vrot.lane.b32.xlu0 %v1266, 53
  %v3310 = vpop.permute.xlu0 %3309
  %3311 = vrot.lane.b32.xlu0 %v1270, 53
  %v3312 = vpop.permute.xlu0 %3311
  %3313 = vrot.lane.b32.xlu0 %v1847, 53
  %v3314 = vpop.permute.xlu0 %3313
  %3315 = vrot.lane.b32.xlu0 %v1851, 53
  %v3316 = vpop.permute.xlu0 %3315
  %3317 = vrot.lane.b32.xlu0 %v1857, 53
  %v3318 = vpop.permute.xlu0 %3317
  %3319 = vrot.lane.b32.xlu0 %v1861, 53
  %v3320 = vpop.permute.xlu0 %3319
  %3321 = vrot.lane.b32.xlu0 %v1849, 53
  %v3322 = vpop.permute.xlu0 %3321
  %3323 = vrot.lane.b32.xlu0 %v1853, 53
  %v3324 = vpop.permute.xlu0 %3323
  %3325 = vrot.lane.b32.xlu0 %v1859, 53
  %v3326 = vpop.permute.xlu0 %3325
  %3327 = vrot.lane.b32.xlu0 %v1863, 53
  %v3328 = vpop.permute.xlu0 %3327
  %vm3329 = vcmp.lt.s32.totalorder %v18, 53
  %v3330 = vsel %vm3329, %v3314, %v3322
  %v3331 = vsel %vm3329, %v3316, %v3324
  %v3332 = vsel %vm3329, %v3318, %v3326
  %v3333 = vsel %vm3329, %v3320, %v3328
  %v3334 = vsel %vm3329, %v3306, %v3314
  %v3335 = vsel %vm3329, %v3308, %v3316
  %v3336 = vsel %vm3329, %v3310, %v3318
  %v3337 = vsel %vm3329, %v3312, %v3320
  %v3338 = vsel %vm3329, %v3298, %v3306
  %v3339 = vsel %vm3329, %v3300, %v3308
  %v3340 = vsel %vm3329, %v3302, %v3310
  %v3341 = vsel %vm3329, %v3304, %v3312
  %v3342 = vsel %vm3329, %v3322, %v3298
  %v3343 = vsel %vm3329, %v3324, %v3300
  %v3344 = vsel %vm3329, %v3326, %v3302
  %v3345 = vsel %vm3329, %v3328, %v3304
  %vm3346 = vmand %vm2833, %vm2837
  %vm3347 = vmand %vm2834, %vm2838
  %vm3348 = vmand %vm2835, %vm2839
  %vm3349 = vmand %vm2836, %vm2840
  %v3350 = vsel %vm3346, 1, 0
  %v3351 = vsel %vm3347, 1, 0
  %v3352 = vsel %vm3348, 1, 0
  %v3353 = vsel %vm3349, 1, 0
  %vm3354 = vcmp.eq.s32.totalorder %v3350, 1
  %vm3355 = vcmp.eq.s32.totalorder %v3351, 1
  %vm3356 = vcmp.eq.s32.totalorder %v3352, 1
  %vm3357 = vcmp.eq.s32.totalorder %v3353, 1
  %v3358 = vsel %vm3354, %v3338, 0.0
  %v3359 = vsel %vm3355, %v3334, 0.0
  %v3360 = vsel %vm3356, %v3330, 0.0
  %v3361 = vsel %vm3357, %v3342, 0.0
  %v3362 = vsel %vm3354, %v3339, 0.0
  %v3363 = vsel %vm3355, %v3335, 0.0
  %v3364 = vsel %vm3356, %v3331, 0.0
  %v3365 = vsel %vm3357, %v3343, 0.0
  %v3366 = vsel %vm3354, %v3340, 0.0
  %v3367 = vsel %vm3355, %v3336, 0.0
  %v3368 = vsel %vm3356, %v3332, 0.0
  %v3369 = vsel %vm3357, %v3344, 0.0
  %v3370 = vsel %vm3354, %v3341, 0.0
  %v3371 = vsel %vm3355, %v3337, 0.0
  %v3372 = vsel %vm3356, %v3333, 0.0
  %v3373 = vsel %vm3357, %v3345, 0.0
  %v3374 = vadd.f32 %v3281, %v3358
  %v3375 = vadd.f32 %v3282, %v3359
  %v3376 = vadd.f32 %v3283, %v3360
  %v3377 = vadd.f32 %v3284, %v3361
  %v3378 = vadd.f32 %v3285, %v3362
  %v3379 = vadd.f32 %v3286, %v3363
  %v3380 = vadd.f32 %v3287, %v3364
  %v3381 = vadd.f32 %v3288, %v3365
  %v3382 = vadd.f32 %v3289, %v3366
  %v3383 = vadd.f32 %v3290, %v3367
  %v3384 = vadd.f32 %v3291, %v3368
  %v3385 = vadd.f32 %v3292, %v3369
  %v3386 = vadd.f32 %v3293, %v3370
  %v3387 = vadd.f32 %v3294, %v3371
  %v3388 = vadd.f32 %v3295, %v3372
  %v3389 = vadd.f32 %v3296, %v3373
  %3390 = vrot.lane.b32.xlu0 %v1274, 48
  %v3391 = vpop.permute.xlu0 %3390
  %3392 = vrot.lane.b32.xlu0 %v1278, 48
  %v3393 = vpop.permute.xlu0 %3392
  %3394 = vrot.lane.b32.xlu0 %v1284, 48
  %v3395 = vpop.permute.xlu0 %3394
  %3396 = vrot.lane.b32.xlu0 %v1288, 48
  %v3397 = vpop.permute.xlu0 %3396
  %3398 = vrot.lane.b32.xlu0 %v1276, 48
  %v3399 = vpop.permute.xlu0 %3398
  %3400 = vrot.lane.b32.xlu0 %v1280, 48
  %v3401 = vpop.permute.xlu0 %3400
  %3402 = vrot.lane.b32.xlu0 %v1286, 48
  %v3403 = vpop.permute.xlu0 %3402
  %3404 = vrot.lane.b32.xlu0 %v1290, 48
  %v3405 = vpop.permute.xlu0 %3404
  %3406 = vrot.lane.b32.xlu0 %v1867, 48
  %v3407 = vpop.permute.xlu0 %3406
  %3408 = vrot.lane.b32.xlu0 %v1871, 48
  %v3409 = vpop.permute.xlu0 %3408
  %3410 = vrot.lane.b32.xlu0 %v1877, 48
  %v3411 = vpop.permute.xlu0 %3410
  %3412 = vrot.lane.b32.xlu0 %v1881, 48
  %v3413 = vpop.permute.xlu0 %3412
  %3414 = vrot.lane.b32.xlu0 %v1869, 48
  %v3415 = vpop.permute.xlu0 %3414
  %3416 = vrot.lane.b32.xlu0 %v1873, 48
  %v3417 = vpop.permute.xlu0 %3416
  %3418 = vrot.lane.b32.xlu0 %v1879, 48
  %v3419 = vpop.permute.xlu0 %3418
  %3420 = vrot.lane.b32.xlu0 %v1883, 48
  %v3421 = vpop.permute.xlu0 %3420
  %v3422 = vsel %vm2226, %v3407, %v3415
  %v3423 = vsel %vm2226, %v3409, %v3417
  %v3424 = vsel %vm2226, %v3411, %v3419
  %v3425 = vsel %vm2226, %v3413, %v3421
  %v3426 = vsel %vm2226, %v3399, %v3407
  %v3427 = vsel %vm2226, %v3401, %v3409
  %v3428 = vsel %vm2226, %v3403, %v3411
  %v3429 = vsel %vm2226, %v3405, %v3413
  %v3430 = vsel %vm2226, %v3391, %v3399
  %v3431 = vsel %vm2226, %v3393, %v3401
  %v3432 = vsel %vm2226, %v3395, %v3403
  %v3433 = vsel %vm2226, %v3397, %v3405
  %v3434 = vsel %vm2226, %v3415, %v3391
  %v3435 = vsel %vm2226, %v3417, %v3393
  %v3436 = vsel %vm2226, %v3419, %v3395
  %v3437 = vsel %vm2226, %v3421, %v3397
  %v3438 = vsel %vm2833, 1, 0
  %v3439 = vsel %vm2834, 1, 0
  %v3440 = vsel %vm2835, 1, 0
  %v3441 = vsel %vm2836, 1, 0
  %vm3442 = vcmp.eq.s32.totalorder %v3438, 1
  %vm3443 = vcmp.eq.s32.totalorder %v3439, 1
  %vm3444 = vcmp.eq.s32.totalorder %v3440, 1
  %vm3445 = vcmp.eq.s32.totalorder %v3441, 1
  %v3446 = vsel %vm3442, %v3430, 0.0
  %v3447 = vsel %vm3443, %v3426, 0.0
  %v3448 = vsel %vm3444, %v3422, 0.0
  %v3449 = vsel %vm3445, %v3434, 0.0
  %v3450 = vsel %vm3442, %v3431, 0.0
  %v3451 = vsel %vm3443, %v3427, 0.0
  %v3452 = vsel %vm3444, %v3423, 0.0
  %v3453 = vsel %vm3445, %v3435, 0.0
  %v3454 = vsel %vm3442, %v3432, 0.0
  %v3455 = vsel %vm3443, %v3428, 0.0
  %v3456 = vsel %vm3444, %v3424, 0.0
  %v3457 = vsel %vm3445, %v3436, 0.0
  %v3458 = vsel %vm3442, %v3433, 0.0
  %v3459 = vsel %vm3443, %v3429, 0.0
  %v3460 = vsel %vm3444, %v3425, 0.0
  %v3461 = vsel %vm3445, %v3437, 0.0
  %v3462 = vadd.f32 %v3374, %v3446
  %v3463 = vadd.f32 %v3375, %v3447
  %v3464 = vadd.f32 %v3376, %v3448
  %v3465 = vadd.f32 %v3377, %v3449
  %v3466 = vadd.f32 %v3378, %v3450
  %v3467 = vadd.f32 %v3379, %v3451
  %v3468 = vadd.f32 %v3380, %v3452
  %v3469 = vadd.f32 %v3381, %v3453
  %v3470 = vadd.f32 %v3382, %v3454
  %v3471 = vadd.f32 %v3383, %v3455
  %v3472 = vadd.f32 %v3384, %v3456
  %v3473 = vadd.f32 %v3385, %v3457
  %v3474 = vadd.f32 %v3386, %v3458
  %v3475 = vadd.f32 %v3387, %v3459
  %v3476 = vadd.f32 %v3388, %v3460
  %v3477 = vadd.f32 %v3389, %v3461
  %3478 = vrot.lane.b32.xlu0 %v1294, 43
  %v3479 = vpop.permute.xlu0 %3478
  %3480 = vrot.lane.b32.xlu0 %v1298, 43
  %v3481 = vpop.permute.xlu0 %3480
  %3482 = vrot.lane.b32.xlu0 %v1304, 43
  %v3483 = vpop.permute.xlu0 %3482
  %3484 = vrot.lane.b32.xlu0 %v1308, 43
  %v3485 = vpop.permute.xlu0 %3484
  %3486 = vrot.lane.b32.xlu0 %v1296, 43
  %v3487 = vpop.permute.xlu0 %3486
  %3488 = vrot.lane.b32.xlu0 %v1300, 43
  %v3489 = vpop.permute.xlu0 %3488
  %3490 = vrot.lane.b32.xlu0 %v1306, 43
  %v3491 = vpop.permute.xlu0 %3490
  %3492 = vrot.lane.b32.xlu0 %v1310, 43
  %v3493 = vpop.permute.xlu0 %3492
  %3494 = vrot.lane.b32.xlu0 %v1887, 43
  %v3495 = vpop.permute.xlu0 %3494
  %3496 = vrot.lane.b32.xlu0 %v1891, 43
  %v3497 = vpop.permute.xlu0 %3496
  %3498 = vrot.lane.b32.xlu0 %v1897, 43
  %v3499 = vpop.permute.xlu0 %3498
  %3500 = vrot.lane.b32.xlu0 %v1901, 43
  %v3501 = vpop.permute.xlu0 %3500
  %3502 = vrot.lane.b32.xlu0 %v1889, 43
  %v3503 = vpop.permute.xlu0 %3502
  %3504 = vrot.lane.b32.xlu0 %v1893, 43
  %v3505 = vpop.permute.xlu0 %3504
  %3506 = vrot.lane.b32.xlu0 %v1899, 43
  %v3507 = vpop.permute.xlu0 %3506
  %3508 = vrot.lane.b32.xlu0 %v1903, 43
  %v3509 = vpop.permute.xlu0 %3508
  %vm3510 = vcmp.lt.s32.totalorder %v18, 43
  %v3511 = vsel %vm3510, %v3495, %v3503
  %v3512 = vsel %vm3510, %v3497, %v3505
  %v3513 = vsel %vm3510, %v3499, %v3507
  %v3514 = vsel %vm3510, %v3501, %v3509
  %v3515 = vsel %vm3510, %v3487, %v3495
  %v3516 = vsel %vm3510, %v3489, %v3497
  %v3517 = vsel %vm3510, %v3491, %v3499
  %v3518 = vsel %vm3510, %v3493, %v3501
  %v3519 = vsel %vm3510, %v3479, %v3487
  %v3520 = vsel %vm3510, %v3481, %v3489
  %v3521 = vsel %vm3510, %v3483, %v3491
  %v3522 = vsel %vm3510, %v3485, %v3493
  %v3523 = vsel %vm3510, %v3503, %v3479
  %v3524 = vsel %vm3510, %v3505, %v3481
  %v3525 = vsel %vm3510, %v3507, %v3483
  %v3526 = vsel %vm3510, %v3509, %v3485
  %vm3527 = vmand %vm2833, %vm2841
  %vm3528 = vmand %vm2834, %vm2842
  %vm3529 = vmand %vm2835, %vm2843
  %vm3530 = vmand %vm2836, %vm2844
  %v3531 = vsel %vm3527, 1, 0
  %v3532 = vsel %vm3528, 1, 0
  %v3533 = vsel %vm3529, 1, 0
  %v3534 = vsel %vm3530, 1, 0
  %vm3535 = vcmp.eq.s32.totalorder %v3531, 1
  %vm3536 = vcmp.eq.s32.totalorder %v3532, 1
  %vm3537 = vcmp.eq.s32.totalorder %v3533, 1
  %vm3538 = vcmp.eq.s32.totalorder %v3534, 1
  %v3539 = vsel %vm3535, %v3519, 0.0
  %v3540 = vsel %vm3536, %v3515, 0.0
  %v3541 = vsel %vm3537, %v3511, 0.0
  %v3542 = vsel %vm3538, %v3523, 0.0
  %v3543 = vsel %vm3535, %v3520, 0.0
  %v3544 = vsel %vm3536, %v3516, 0.0
  %v3545 = vsel %vm3537, %v3512, 0.0
  %v3546 = vsel %vm3538, %v3524, 0.0
  %v3547 = vsel %vm3535, %v3521, 0.0
  %v3548 = vsel %vm3536, %v3517, 0.0
  %v3549 = vsel %vm3537, %v3513, 0.0
  %v3550 = vsel %vm3538, %v3525, 0.0
  %v3551 = vsel %vm3535, %v3522, 0.0
  %v3552 = vsel %vm3536, %v3518, 0.0
  %v3553 = vsel %vm3537, %v3514, 0.0
  %v3554 = vsel %vm3538, %v3526, 0.0
  %v3555 = vadd.f32 %v3462, %v3539
  %v3556 = vadd.f32 %v3463, %v3540
  %v3557 = vadd.f32 %v3464, %v3541
  %v3558 = vadd.f32 %v3465, %v3542
  %v3559 = vadd.f32 %v3466, %v3543
  %v3560 = vadd.f32 %v3467, %v3544
  %v3561 = vadd.f32 %v3468, %v3545
  %v3562 = vadd.f32 %v3469, %v3546
  %v3563 = vadd.f32 %v3470, %v3547
  %v3564 = vadd.f32 %v3471, %v3548
  %v3565 = vadd.f32 %v3472, %v3549
  %v3566 = vadd.f32 %v3473, %v3550
  %v3567 = vadd.f32 %v3474, %v3551
  %v3568 = vadd.f32 %v3475, %v3552
  %v3569 = vadd.f32 %v3476, %v3553
  %v3570 = vadd.f32 %v3477, %v3554
  %vm3571 = vcmp.ge.s32.totalorder %v30, 7
  %vm3572 = vcmp.ge.s32.totalorder %v31, 7
  %vm3573 = vcmp.ge.s32.totalorder %v32, 7
  %vm3574 = vcmp.ge.s32.totalorder %v33, 7
  %vm3575 = vcmp.lt.s32.totalorder %v30, 9
  %vm3576 = vcmp.lt.s32.totalorder %v31, 9
  %vm3577 = vcmp.lt.s32.totalorder %v32, 9
  %vm3578 = vcmp.lt.s32.totalorder %v33, 9
  %vm3579 = vcmp.ge.s32.totalorder %v22, 7
  %vm3580 = vcmp.ge.s32.totalorder %v23, 7
  %vm3581 = vcmp.ge.s32.totalorder %v24, 7
  %vm3582 = vcmp.ge.s32.totalorder %v25, 7
  %vm3583 = vcmp.lt.s32.totalorder %v22, 9
  %vm3584 = vcmp.lt.s32.totalorder %v23, 9
  %vm3585 = vcmp.lt.s32.totalorder %v24, 9
  %vm3586 = vcmp.lt.s32.totalorder %v25, 9
  %3587 = vrot.lane.b32.xlu0 %v1314, 119
  %v3588 = vpop.permute.xlu0 %3587
  %3589 = vrot.lane.b32.xlu0 %v1318, 119
  %v3590 = vpop.permute.xlu0 %3589
  %3591 = vrot.lane.b32.xlu0 %v1324, 119
  %v3592 = vpop.permute.xlu0 %3591
  %3593 = vrot.lane.b32.xlu0 %v1328, 119
  %v3594 = vpop.permute.xlu0 %3593
  %3595 = vrot.lane.b32.xlu0 %v1316, 119
  %v3596 = vpop.permute.xlu0 %3595
  %3597 = vrot.lane.b32.xlu0 %v1320, 119
  %v3598 = vpop.permute.xlu0 %3597
  %3599 = vrot.lane.b32.xlu0 %v1326, 119
  %v3600 = vpop.permute.xlu0 %3599
  %3601 = vrot.lane.b32.xlu0 %v1330, 119
  %v3602 = vpop.permute.xlu0 %3601
  %3603 = vrot.lane.b32.xlu0 %v1907, 119
  %v3604 = vpop.permute.xlu0 %3603
  %3605 = vrot.lane.b32.xlu0 %v1911, 119
  %v3606 = vpop.permute.xlu0 %3605
  %3607 = vrot.lane.b32.xlu0 %v1917, 119
  %v3608 = vpop.permute.xlu0 %3607
  %3609 = vrot.lane.b32.xlu0 %v1921, 119
  %v3610 = vpop.permute.xlu0 %3609
  %3611 = vrot.lane.b32.xlu0 %v1909, 119
  %v3612 = vpop.permute.xlu0 %3611
  %3613 = vrot.lane.b32.xlu0 %v1913, 119
  %v3614 = vpop.permute.xlu0 %3613
  %3615 = vrot.lane.b32.xlu0 %v1919, 119
  %v3616 = vpop.permute.xlu0 %3615
  %3617 = vrot.lane.b32.xlu0 %v1923, 119
  %v3618 = vpop.permute.xlu0 %3617
  %vm3619 = vcmp.lt.s32.totalorder %v18, 119
  %v3620 = vsel %vm3619, %v3604, %v3612
  %v3621 = vsel %vm3619, %v3606, %v3614
  %v3622 = vsel %vm3619, %v3608, %v3616
  %v3623 = vsel %vm3619, %v3610, %v3618
  %v3624 = vsel %vm3619, %v3596, %v3604
  %v3625 = vsel %vm3619, %v3598, %v3606
  %v3626 = vsel %vm3619, %v3600, %v3608
  %v3627 = vsel %vm3619, %v3602, %v3610
  %v3628 = vsel %vm3619, %v3588, %v3596
  %v3629 = vsel %vm3619, %v3590, %v3598
  %v3630 = vsel %vm3619, %v3592, %v3600
  %v3631 = vsel %vm3619, %v3594, %v3602
  %v3632 = vsel %vm3619, %v3612, %v3588
  %v3633 = vsel %vm3619, %v3614, %v3590
  %v3634 = vsel %vm3619, %v3616, %v3592
  %v3635 = vsel %vm3619, %v3618, %v3594
  %vm3636 = vmand %vm3571, %vm3579
  %vm3637 = vmand %vm3572, %vm3580
  %vm3638 = vmand %vm3573, %vm3581
  %vm3639 = vmand %vm3574, %vm3582
  %v3640 = vsel %vm3636, 1, 0
  %v3641 = vsel %vm3637, 1, 0
  %v3642 = vsel %vm3638, 1, 0
  %v3643 = vsel %vm3639, 1, 0
  %vm3644 = vcmp.eq.s32.totalorder %v3640, 1
  %vm3645 = vcmp.eq.s32.totalorder %v3641, 1
  %vm3646 = vcmp.eq.s32.totalorder %v3642, 1
  %vm3647 = vcmp.eq.s32.totalorder %v3643, 1
  %v3648 = vsel %vm3644, %v3632, 0.0
  %v3649 = vsel %vm3645, %v3628, 0.0
  %v3650 = vsel %vm3646, %v3624, 0.0
  %v3651 = vsel %vm3647, %v3620, 0.0
  %v3652 = vsel %vm3644, %v3633, 0.0
  %v3653 = vsel %vm3645, %v3629, 0.0
  %v3654 = vsel %vm3646, %v3625, 0.0
  %v3655 = vsel %vm3647, %v3621, 0.0
  %v3656 = vsel %vm3644, %v3634, 0.0
  %v3657 = vsel %vm3645, %v3630, 0.0
  %v3658 = vsel %vm3646, %v3626, 0.0
  %v3659 = vsel %vm3647, %v3622, 0.0
  %v3660 = vsel %vm3644, %v3635, 0.0
  %v3661 = vsel %vm3645, %v3631, 0.0
  %v3662 = vsel %vm3646, %v3627, 0.0
  %v3663 = vsel %vm3647, %v3623, 0.0
  %v3664 = vadd.f32 %v1394, %v3648
  %v3665 = vadd.f32 %v1396, %v3649
  %v3666 = vadd.f32 %v1987, %v3650
  %v3667 = vadd.f32 %v1989, %v3651
  %v3668 = vadd.f32 %v1398, %v3652
  %v3669 = vadd.f32 %v1400, %v3653
  %v3670 = vadd.f32 %v1991, %v3654
  %v3671 = vadd.f32 %v1993, %v3655
  %v3672 = vadd.f32 %v1404, %v3656
  %v3673 = vadd.f32 %v1406, %v3657
  %v3674 = vadd.f32 %v1997, %v3658
  %v3675 = vadd.f32 %v1999, %v3659
  %v3676 = vadd.f32 %v1408, %v3660
  %v3677 = vadd.f32 %v1410, %v3661
  %v3678 = vadd.f32 %v2001, %v3662
  %v3679 = vadd.f32 %v2003, %v3663
  %3680 = vrot.lane.b32.xlu0 %v1334, 112
  %v3681 = vpop.permute.xlu0 %3680
  %3682 = vrot.lane.b32.xlu0 %v1338, 112
  %v3683 = vpop.permute.xlu0 %3682
  %3684 = vrot.lane.b32.xlu0 %v1344, 112
  %v3685 = vpop.permute.xlu0 %3684
  %3686 = vrot.lane.b32.xlu0 %v1348, 112
  %v3687 = vpop.permute.xlu0 %3686
  %3688 = vrot.lane.b32.xlu0 %v1336, 112
  %v3689 = vpop.permute.xlu0 %3688
  %3690 = vrot.lane.b32.xlu0 %v1340, 112
  %v3691 = vpop.permute.xlu0 %3690
  %3692 = vrot.lane.b32.xlu0 %v1346, 112
  %v3693 = vpop.permute.xlu0 %3692
  %3694 = vrot.lane.b32.xlu0 %v1350, 112
  %v3695 = vpop.permute.xlu0 %3694
  %3696 = vrot.lane.b32.xlu0 %v1927, 112
  %v3697 = vpop.permute.xlu0 %3696
  %3698 = vrot.lane.b32.xlu0 %v1931, 112
  %v3699 = vpop.permute.xlu0 %3698
  %3700 = vrot.lane.b32.xlu0 %v1937, 112
  %v3701 = vpop.permute.xlu0 %3700
  %3702 = vrot.lane.b32.xlu0 %v1941, 112
  %v3703 = vpop.permute.xlu0 %3702
  %3704 = vrot.lane.b32.xlu0 %v1929, 112
  %v3705 = vpop.permute.xlu0 %3704
  %3706 = vrot.lane.b32.xlu0 %v1933, 112
  %v3707 = vpop.permute.xlu0 %3706
  %3708 = vrot.lane.b32.xlu0 %v1939, 112
  %v3709 = vpop.permute.xlu0 %3708
  %3710 = vrot.lane.b32.xlu0 %v1943, 112
  %v3711 = vpop.permute.xlu0 %3710
  %vm3712 = vcmp.lt.s32.totalorder %v18, 112
  %v3713 = vsel %vm3712, %v3697, %v3705
  %v3714 = vsel %vm3712, %v3699, %v3707
  %v3715 = vsel %vm3712, %v3701, %v3709
  %v3716 = vsel %vm3712, %v3703, %v3711
  %v3717 = vsel %vm3712, %v3689, %v3697
  %v3718 = vsel %vm3712, %v3691, %v3699
  %v3719 = vsel %vm3712, %v3693, %v3701
  %v3720 = vsel %vm3712, %v3695, %v3703
  %v3721 = vsel %vm3712, %v3681, %v3689
  %v3722 = vsel %vm3712, %v3683, %v3691
  %v3723 = vsel %vm3712, %v3685, %v3693
  %v3724 = vsel %vm3712, %v3687, %v3695
  %v3725 = vsel %vm3712, %v3705, %v3681
  %v3726 = vsel %vm3712, %v3707, %v3683
  %v3727 = vsel %vm3712, %v3709, %v3685
  %v3728 = vsel %vm3712, %v3711, %v3687
  %v3729 = vsel %vm3571, 1, 0
  %v3730 = vsel %vm3572, 1, 0
  %v3731 = vsel %vm3573, 1, 0
  %v3732 = vsel %vm3574, 1, 0
  %vm3733 = vcmp.eq.s32.totalorder %v3729, 1
  %vm3734 = vcmp.eq.s32.totalorder %v3730, 1
  %vm3735 = vcmp.eq.s32.totalorder %v3731, 1
  %vm3736 = vcmp.eq.s32.totalorder %v3732, 1
  %v3737 = vsel %vm3733, %v3725, 0.0
  %v3738 = vsel %vm3734, %v3721, 0.0
  %v3739 = vsel %vm3735, %v3717, 0.0
  %v3740 = vsel %vm3736, %v3713, 0.0
  %v3741 = vsel %vm3733, %v3726, 0.0
  %v3742 = vsel %vm3734, %v3722, 0.0
  %v3743 = vsel %vm3735, %v3718, 0.0
  %v3744 = vsel %vm3736, %v3714, 0.0
  %v3745 = vsel %vm3733, %v3727, 0.0
  %v3746 = vsel %vm3734, %v3723, 0.0
  %v3747 = vsel %vm3735, %v3719, 0.0
  %v3748 = vsel %vm3736, %v3715, 0.0
  %v3749 = vsel %vm3733, %v3728, 0.0
  %v3750 = vsel %vm3734, %v3724, 0.0
  %v3751 = vsel %vm3735, %v3720, 0.0
  %v3752 = vsel %vm3736, %v3716, 0.0
  %v3753 = vadd.f32 %v3664, %v3737
  %v3754 = vadd.f32 %v3665, %v3738
  %v3755 = vadd.f32 %v3666, %v3739
  %v3756 = vadd.f32 %v3667, %v3740
  %v3757 = vadd.f32 %v3668, %v3741
  %v3758 = vadd.f32 %v3669, %v3742
  %v3759 = vadd.f32 %v3670, %v3743
  %v3760 = vadd.f32 %v3671, %v3744
  %v3761 = vadd.f32 %v3672, %v3745
  %v3762 = vadd.f32 %v3673, %v3746
  %v3763 = vadd.f32 %v3674, %v3747
  %v3764 = vadd.f32 %v3675, %v3748
  %v3765 = vadd.f32 %v3676, %v3749
  %v3766 = vadd.f32 %v3677, %v3750
  %v3767 = vadd.f32 %v3678, %v3751
  %v3768 = vadd.f32 %v3679, %v3752
  %3769 = vrot.lane.b32.xlu0 %v1354, 105
  %v3770 = vpop.permute.xlu0 %3769
  %3771 = vrot.lane.b32.xlu0 %v1358, 105
  %v3772 = vpop.permute.xlu0 %3771
  %3773 = vrot.lane.b32.xlu0 %v1364, 105
  %v3774 = vpop.permute.xlu0 %3773
  %3775 = vrot.lane.b32.xlu0 %v1368, 105
  %v3776 = vpop.permute.xlu0 %3775
  %3777 = vrot.lane.b32.xlu0 %v1356, 105
  %v3778 = vpop.permute.xlu0 %3777
  %3779 = vrot.lane.b32.xlu0 %v1360, 105
  %v3780 = vpop.permute.xlu0 %3779
  %3781 = vrot.lane.b32.xlu0 %v1366, 105
  %v3782 = vpop.permute.xlu0 %3781
  %3783 = vrot.lane.b32.xlu0 %v1370, 105
  %v3784 = vpop.permute.xlu0 %3783
  %3785 = vrot.lane.b32.xlu0 %v1947, 105
  %v3786 = vpop.permute.xlu0 %3785
  %3787 = vrot.lane.b32.xlu0 %v1951, 105
  %v3788 = vpop.permute.xlu0 %3787
  %3789 = vrot.lane.b32.xlu0 %v1957, 105
  %v3790 = vpop.permute.xlu0 %3789
  %3791 = vrot.lane.b32.xlu0 %v1961, 105
  %v3792 = vpop.permute.xlu0 %3791
  %3793 = vrot.lane.b32.xlu0 %v1949, 105
  %v3794 = vpop.permute.xlu0 %3793
  %3795 = vrot.lane.b32.xlu0 %v1953, 105
  %v3796 = vpop.permute.xlu0 %3795
  %3797 = vrot.lane.b32.xlu0 %v1959, 105
  %v3798 = vpop.permute.xlu0 %3797
  %3799 = vrot.lane.b32.xlu0 %v1963, 105
  %v3800 = vpop.permute.xlu0 %3799
  %vm3801 = vcmp.lt.s32.totalorder %v18, 105
  %v3802 = vsel %vm3801, %v3786, %v3794
  %v3803 = vsel %vm3801, %v3788, %v3796
  %v3804 = vsel %vm3801, %v3790, %v3798
  %v3805 = vsel %vm3801, %v3792, %v3800
  %v3806 = vsel %vm3801, %v3778, %v3786
  %v3807 = vsel %vm3801, %v3780, %v3788
  %v3808 = vsel %vm3801, %v3782, %v3790
  %v3809 = vsel %vm3801, %v3784, %v3792
  %v3810 = vsel %vm3801, %v3770, %v3778
  %v3811 = vsel %vm3801, %v3772, %v3780
  %v3812 = vsel %vm3801, %v3774, %v3782
  %v3813 = vsel %vm3801, %v3776, %v3784
  %v3814 = vsel %vm3801, %v3794, %v3770
  %v3815 = vsel %vm3801, %v3796, %v3772
  %v3816 = vsel %vm3801, %v3798, %v3774
  %v3817 = vsel %vm3801, %v3800, %v3776
  %vm3818 = vmand %vm3571, %vm3583
  %vm3819 = vmand %vm3572, %vm3584
  %vm3820 = vmand %vm3573, %vm3585
  %vm3821 = vmand %vm3574, %vm3586
  %v3822 = vsel %vm3818, 1, 0
  %v3823 = vsel %vm3819, 1, 0
  %v3824 = vsel %vm3820, 1, 0
  %v3825 = vsel %vm3821, 1, 0
  %vm3826 = vcmp.eq.s32.totalorder %v3822, 1
  %vm3827 = vcmp.eq.s32.totalorder %v3823, 1
  %vm3828 = vcmp.eq.s32.totalorder %v3824, 1
  %vm3829 = vcmp.eq.s32.totalorder %v3825, 1
  %v3830 = vsel %vm3826, %v3814, 0.0
  %v3831 = vsel %vm3827, %v3810, 0.0
  %v3832 = vsel %vm3828, %v3806, 0.0
  %v3833 = vsel %vm3829, %v3802, 0.0
  %v3834 = vsel %vm3826, %v3815, 0.0
  %v3835 = vsel %vm3827, %v3811, 0.0
  %v3836 = vsel %vm3828, %v3807, 0.0
  %v3837 = vsel %vm3829, %v3803, 0.0
  %v3838 = vsel %vm3826, %v3816, 0.0
  %v3839 = vsel %vm3827, %v3812, 0.0
  %v3840 = vsel %vm3828, %v3808, 0.0
  %v3841 = vsel %vm3829, %v3804, 0.0
  %v3842 = vsel %vm3826, %v3817, 0.0
  %v3843 = vsel %vm3827, %v3813, 0.0
  %v3844 = vsel %vm3828, %v3809, 0.0
  %v3845 = vsel %vm3829, %v3805, 0.0
  %v3846 = vadd.f32 %v3753, %v3830
  %v3847 = vadd.f32 %v3754, %v3831
  %v3848 = vadd.f32 %v3755, %v3832
  %v3849 = vadd.f32 %v3756, %v3833
  %v3850 = vadd.f32 %v3757, %v3834
  %v3851 = vadd.f32 %v3758, %v3835
  %v3852 = vadd.f32 %v3759, %v3836
  %v3853 = vadd.f32 %v3760, %v3837
  %v3854 = vadd.f32 %v3761, %v3838
  %v3855 = vadd.f32 %v3762, %v3839
  %v3856 = vadd.f32 %v3763, %v3840
  %v3857 = vadd.f32 %v3764, %v3841
  %v3858 = vadd.f32 %v3765, %v3842
  %v3859 = vadd.f32 %v3766, %v3843
  %v3860 = vadd.f32 %v3767, %v3844
  %v3861 = vadd.f32 %v3768, %v3845
  %3862 = vrot.lane.b32.xlu0 %v1374, 7
  %v3863 = vpop.permute.xlu0 %3862
  %3864 = vrot.lane.b32.xlu0 %v1378, 7
  %v3865 = vpop.permute.xlu0 %3864
  %3866 = vrot.lane.b32.xlu0 %v1384, 7
  %v3867 = vpop.permute.xlu0 %3866
  %3868 = vrot.lane.b32.xlu0 %v1388, 7
  %v3869 = vpop.permute.xlu0 %3868
  %3870 = vrot.lane.b32.xlu0 %v1376, 7
  %v3871 = vpop.permute.xlu0 %3870
  %3872 = vrot.lane.b32.xlu0 %v1380, 7
  %v3873 = vpop.permute.xlu0 %3872
  %3874 = vrot.lane.b32.xlu0 %v1386, 7
  %v3875 = vpop.permute.xlu0 %3874
  %3876 = vrot.lane.b32.xlu0 %v1390, 7
  %v3877 = vpop.permute.xlu0 %3876
  %3878 = vrot.lane.b32.xlu0 %v1967, 7
  %v3879 = vpop.permute.xlu0 %3878
  %3880 = vrot.lane.b32.xlu0 %v1971, 7
  %v3881 = vpop.permute.xlu0 %3880
  %3882 = vrot.lane.b32.xlu0 %v1977, 7
  %v3883 = vpop.permute.xlu0 %3882
  %3884 = vrot.lane.b32.xlu0 %v1981, 7
  %v3885 = vpop.permute.xlu0 %3884
  %3886 = vrot.lane.b32.xlu0 %v1969, 7
  %v3887 = vpop.permute.xlu0 %3886
  %3888 = vrot.lane.b32.xlu0 %v1973, 7
  %v3889 = vpop.permute.xlu0 %3888
  %3890 = vrot.lane.b32.xlu0 %v1979, 7
  %v3891 = vpop.permute.xlu0 %3890
  %3892 = vrot.lane.b32.xlu0 %v1983, 7
  %v3893 = vpop.permute.xlu0 %3892
  %vm3894 = vcmp.lt.s32.totalorder %v18, 7
  %v3895 = vsel %vm3894, %v3879, %v3887
  %v3896 = vsel %vm3894, %v3881, %v3889
  %v3897 = vsel %vm3894, %v3883, %v3891
  %v3898 = vsel %vm3894, %v3885, %v3893
  %v3899 = vsel %vm3894, %v3871, %v3879
  %v3900 = vsel %vm3894, %v3873, %v3881
  %v3901 = vsel %vm3894, %v3875, %v3883
  %v3902 = vsel %vm3894, %v3877, %v3885
  %v3903 = vsel %vm3894, %v3863, %v3871
  %v3904 = vsel %vm3894, %v3865, %v3873
  %v3905 = vsel %vm3894, %v3867, %v3875
  %v3906 = vsel %vm3894, %v3869, %v3877
  %v3907 = vsel %vm3894, %v3887, %v3863
  %v3908 = vsel %vm3894, %v3889, %v3865
  %v3909 = vsel %vm3894, %v3891, %v3867
  %v3910 = vsel %vm3894, %v3893, %v3869
  %v3911 = vsel %vm3579, 1, 0
  %v3912 = vsel %vm3580, 1, 0
  %v3913 = vsel %vm3581, 1, 0
  %v3914 = vsel %vm3582, 1, 0
  %vm3915 = vcmp.eq.s32.totalorder %v3911, 1
  %vm3916 = vcmp.eq.s32.totalorder %v3912, 1
  %vm3917 = vcmp.eq.s32.totalorder %v3913, 1
  %vm3918 = vcmp.eq.s32.totalorder %v3914, 1
  %v3919 = vsel %vm3915, %v3907, 0.0
  %v3920 = vsel %vm3916, %v3903, 0.0
  %v3921 = vsel %vm3917, %v3899, 0.0
  %v3922 = vsel %vm3918, %v3895, 0.0
  %v3923 = vsel %vm3915, %v3908, 0.0
  %v3924 = vsel %vm3916, %v3904, 0.0
  %v3925 = vsel %vm3917, %v3900, 0.0
  %v3926 = vsel %vm3918, %v3896, 0.0
  %v3927 = vsel %vm3915, %v3909, 0.0
  %v3928 = vsel %vm3916, %v3905, 0.0
  %v3929 = vsel %vm3917, %v3901, 0.0
  %v3930 = vsel %vm3918, %v3897, 0.0
  %v3931 = vsel %vm3915, %v3910, 0.0
  %v3932 = vsel %vm3916, %v3906, 0.0
  %v3933 = vsel %vm3917, %v3902, 0.0
  %v3934 = vsel %vm3918, %v3898, 0.0
  %v3935 = vadd.f32 %v3846, %v3919
  %v3936 = vadd.f32 %v3847, %v3920
  %v3937 = vadd.f32 %v3848, %v3921
  %v3938 = vadd.f32 %v3849, %v3922
  %v3939 = vadd.f32 %v3850, %v3923
  %v3940 = vadd.f32 %v3851, %v3924
  %v3941 = vadd.f32 %v3852, %v3925
  %v3942 = vadd.f32 %v3853, %v3926
  %v3943 = vadd.f32 %v3854, %v3927
  %v3944 = vadd.f32 %v3855, %v3928
  %v3945 = vadd.f32 %v3856, %v3929
  %v3946 = vadd.f32 %v3857, %v3930
  %v3947 = vadd.f32 %v3858, %v3931
  %v3948 = vadd.f32 %v3859, %v3932
  %v3949 = vadd.f32 %v3860, %v3933
  %v3950 = vadd.f32 %v3861, %v3934
  %3951 = vrot.lane.b32.xlu0 %v1414, 121
  %v3952 = vpop.permute.xlu0 %3951
  %3953 = vrot.lane.b32.xlu0 %v1418, 121
  %v3954 = vpop.permute.xlu0 %3953
  %3955 = vrot.lane.b32.xlu0 %v1424, 121
  %v3956 = vpop.permute.xlu0 %3955
  %3957 = vrot.lane.b32.xlu0 %v1428, 121
  %v3958 = vpop.permute.xlu0 %3957
  %3959 = vrot.lane.b32.xlu0 %v1416, 121
  %v3960 = vpop.permute.xlu0 %3959
  %3961 = vrot.lane.b32.xlu0 %v1420, 121
  %v3962 = vpop.permute.xlu0 %3961
  %3963 = vrot.lane.b32.xlu0 %v1426, 121
  %v3964 = vpop.permute.xlu0 %3963
  %3965 = vrot.lane.b32.xlu0 %v1430, 121
  %v3966 = vpop.permute.xlu0 %3965
  %3967 = vrot.lane.b32.xlu0 %v2007, 121
  %v3968 = vpop.permute.xlu0 %3967
  %3969 = vrot.lane.b32.xlu0 %v2011, 121
  %v3970 = vpop.permute.xlu0 %3969
  %3971 = vrot.lane.b32.xlu0 %v2017, 121
  %v3972 = vpop.permute.xlu0 %3971
  %3973 = vrot.lane.b32.xlu0 %v2021, 121
  %v3974 = vpop.permute.xlu0 %3973
  %3975 = vrot.lane.b32.xlu0 %v2009, 121
  %v3976 = vpop.permute.xlu0 %3975
  %3977 = vrot.lane.b32.xlu0 %v2013, 121
  %v3978 = vpop.permute.xlu0 %3977
  %3979 = vrot.lane.b32.xlu0 %v2019, 121
  %v3980 = vpop.permute.xlu0 %3979
  %3981 = vrot.lane.b32.xlu0 %v2023, 121
  %v3982 = vpop.permute.xlu0 %3981
  %vm3983 = vcmp.lt.s32.totalorder %v18, 121
  %v3984 = vsel %vm3983, %v3968, %v3976
  %v3985 = vsel %vm3983, %v3970, %v3978
  %v3986 = vsel %vm3983, %v3972, %v3980
  %v3987 = vsel %vm3983, %v3974, %v3982
  %v3988 = vsel %vm3983, %v3960, %v3968
  %v3989 = vsel %vm3983, %v3962, %v3970
  %v3990 = vsel %vm3983, %v3964, %v3972
  %v3991 = vsel %vm3983, %v3966, %v3974
  %v3992 = vsel %vm3983, %v3952, %v3960
  %v3993 = vsel %vm3983, %v3954, %v3962
  %v3994 = vsel %vm3983, %v3956, %v3964
  %v3995 = vsel %vm3983, %v3958, %v3966
  %v3996 = vsel %vm3983, %v3976, %v3952
  %v3997 = vsel %vm3983, %v3978, %v3954
  %v3998 = vsel %vm3983, %v3980, %v3956
  %v3999 = vsel %vm3983, %v3982, %v3958
  %v4000 = vsel %vm3583, 1, 0
  %v4001 = vsel %vm3584, 1, 0
  %v4002 = vsel %vm3585, 1, 0
  %v4003 = vsel %vm3586, 1, 0
  %vm4004 = vcmp.eq.s32.totalorder %v4000, 1
  %vm4005 = vcmp.eq.s32.totalorder %v4001, 1
  %vm4006 = vcmp.eq.s32.totalorder %v4002, 1
  %vm4007 = vcmp.eq.s32.totalorder %v4003, 1
  %v4008 = vsel %vm4004, %v3992, 0.0
  %v4009 = vsel %vm4005, %v3988, 0.0
  %v4010 = vsel %vm4006, %v3984, 0.0
  %v4011 = vsel %vm4007, %v3996, 0.0
  %v4012 = vsel %vm4004, %v3993, 0.0
  %v4013 = vsel %vm4005, %v3989, 0.0
  %v4014 = vsel %vm4006, %v3985, 0.0
  %v4015 = vsel %vm4007, %v3997, 0.0
  %v4016 = vsel %vm4004, %v3994, 0.0
  %v4017 = vsel %vm4005, %v3990, 0.0
  %v4018 = vsel %vm4006, %v3986, 0.0
  %v4019 = vsel %vm4007, %v3998, 0.0
  %v4020 = vsel %vm4004, %v3995, 0.0
  %v4021 = vsel %vm4005, %v3991, 0.0
  %v4022 = vsel %vm4006, %v3987, 0.0
  %v4023 = vsel %vm4007, %v3999, 0.0
  %v4024 = vadd.f32 %v3935, %v4008
  %v4025 = vadd.f32 %v3936, %v4009
  %v4026 = vadd.f32 %v3937, %v4010
  %v4027 = vadd.f32 %v3938, %v4011
  %v4028 = vadd.f32 %v3939, %v4012
  %v4029 = vadd.f32 %v3940, %v4013
  %v4030 = vadd.f32 %v3941, %v4014
  %v4031 = vadd.f32 %v3942, %v4015
  %v4032 = vadd.f32 %v3943, %v4016
  %v4033 = vadd.f32 %v3944, %v4017
  %v4034 = vadd.f32 %v3945, %v4018
  %v4035 = vadd.f32 %v3946, %v4019
  %v4036 = vadd.f32 %v3947, %v4020
  %v4037 = vadd.f32 %v3948, %v4021
  %v4038 = vadd.f32 %v3949, %v4022
  %v4039 = vadd.f32 %v3950, %v4023
  %4040 = vrot.lane.b32.xlu0 %v1434, 23
  %v4041 = vpop.permute.xlu0 %4040
  %4042 = vrot.lane.b32.xlu0 %v1438, 23
  %v4043 = vpop.permute.xlu0 %4042
  %4044 = vrot.lane.b32.xlu0 %v1444, 23
  %v4045 = vpop.permute.xlu0 %4044
  %4046 = vrot.lane.b32.xlu0 %v1448, 23
  %v4047 = vpop.permute.xlu0 %4046
  %4048 = vrot.lane.b32.xlu0 %v1436, 23
  %v4049 = vpop.permute.xlu0 %4048
  %4050 = vrot.lane.b32.xlu0 %v1440, 23
  %v4051 = vpop.permute.xlu0 %4050
  %4052 = vrot.lane.b32.xlu0 %v1446, 23
  %v4053 = vpop.permute.xlu0 %4052
  %4054 = vrot.lane.b32.xlu0 %v1450, 23
  %v4055 = vpop.permute.xlu0 %4054
  %4056 = vrot.lane.b32.xlu0 %v2027, 23
  %v4057 = vpop.permute.xlu0 %4056
  %4058 = vrot.lane.b32.xlu0 %v2031, 23
  %v4059 = vpop.permute.xlu0 %4058
  %4060 = vrot.lane.b32.xlu0 %v2037, 23
  %v4061 = vpop.permute.xlu0 %4060
  %4062 = vrot.lane.b32.xlu0 %v2041, 23
  %v4063 = vpop.permute.xlu0 %4062
  %4064 = vrot.lane.b32.xlu0 %v2029, 23
  %v4065 = vpop.permute.xlu0 %4064
  %4066 = vrot.lane.b32.xlu0 %v2033, 23
  %v4067 = vpop.permute.xlu0 %4066
  %4068 = vrot.lane.b32.xlu0 %v2039, 23
  %v4069 = vpop.permute.xlu0 %4068
  %4070 = vrot.lane.b32.xlu0 %v2043, 23
  %v4071 = vpop.permute.xlu0 %4070
  %vm4072 = vcmp.lt.s32.totalorder %v18, 23
  %v4073 = vsel %vm4072, %v4057, %v4065
  %v4074 = vsel %vm4072, %v4059, %v4067
  %v4075 = vsel %vm4072, %v4061, %v4069
  %v4076 = vsel %vm4072, %v4063, %v4071
  %v4077 = vsel %vm4072, %v4049, %v4057
  %v4078 = vsel %vm4072, %v4051, %v4059
  %v4079 = vsel %vm4072, %v4053, %v4061
  %v4080 = vsel %vm4072, %v4055, %v4063
  %v4081 = vsel %vm4072, %v4041, %v4049
  %v4082 = vsel %vm4072, %v4043, %v4051
  %v4083 = vsel %vm4072, %v4045, %v4053
  %v4084 = vsel %vm4072, %v4047, %v4055
  %v4085 = vsel %vm4072, %v4065, %v4041
  %v4086 = vsel %vm4072, %v4067, %v4043
  %v4087 = vsel %vm4072, %v4069, %v4045
  %v4088 = vsel %vm4072, %v4071, %v4047
  %vm4089 = vmand %vm3575, %vm3579
  %vm4090 = vmand %vm3576, %vm3580
  %vm4091 = vmand %vm3577, %vm3581
  %vm4092 = vmand %vm3578, %vm3582
  %v4093 = vsel %vm4089, 1, 0
  %v4094 = vsel %vm4090, 1, 0
  %v4095 = vsel %vm4091, 1, 0
  %v4096 = vsel %vm4092, 1, 0
  %vm4097 = vcmp.eq.s32.totalorder %v4093, 1
  %vm4098 = vcmp.eq.s32.totalorder %v4094, 1
  %vm4099 = vcmp.eq.s32.totalorder %v4095, 1
  %vm4100 = vcmp.eq.s32.totalorder %v4096, 1
  %v4101 = vsel %vm4097, %v4081, 0.0
  %v4102 = vsel %vm4098, %v4077, 0.0
  %v4103 = vsel %vm4099, %v4073, 0.0
  %v4104 = vsel %vm4100, %v4085, 0.0
  %v4105 = vsel %vm4097, %v4082, 0.0
  %v4106 = vsel %vm4098, %v4078, 0.0
  %v4107 = vsel %vm4099, %v4074, 0.0
  %v4108 = vsel %vm4100, %v4086, 0.0
  %v4109 = vsel %vm4097, %v4083, 0.0
  %v4110 = vsel %vm4098, %v4079, 0.0
  %v4111 = vsel %vm4099, %v4075, 0.0
  %v4112 = vsel %vm4100, %v4087, 0.0
  %v4113 = vsel %vm4097, %v4084, 0.0
  %v4114 = vsel %vm4098, %v4080, 0.0
  %v4115 = vsel %vm4099, %v4076, 0.0
  %v4116 = vsel %vm4100, %v4088, 0.0
  %v4117 = vadd.f32 %v4024, %v4101
  %v4118 = vadd.f32 %v4025, %v4102
  %v4119 = vadd.f32 %v4026, %v4103
  %v4120 = vadd.f32 %v4027, %v4104
  %v4121 = vadd.f32 %v4028, %v4105
  %v4122 = vadd.f32 %v4029, %v4106
  %v4123 = vadd.f32 %v4030, %v4107
  %v4124 = vadd.f32 %v4031, %v4108
  %v4125 = vadd.f32 %v4032, %v4109
  %v4126 = vadd.f32 %v4033, %v4110
  %v4127 = vadd.f32 %v4034, %v4111
  %v4128 = vadd.f32 %v4035, %v4112
  %v4129 = vadd.f32 %v4036, %v4113
  %v4130 = vadd.f32 %v4037, %v4114
  %v4131 = vadd.f32 %v4038, %v4115
  %v4132 = vadd.f32 %v4039, %v4116
  %4133 = vrot.lane.b32.xlu0 %v1454, 16
  %v4134 = vpop.permute.xlu0 %4133
  %4135 = vrot.lane.b32.xlu0 %v1458, 16
  %v4136 = vpop.permute.xlu0 %4135
  %4137 = vrot.lane.b32.xlu0 %v1464, 16
  %v4138 = vpop.permute.xlu0 %4137
  %4139 = vrot.lane.b32.xlu0 %v1468, 16
  %v4140 = vpop.permute.xlu0 %4139
  %4141 = vrot.lane.b32.xlu0 %v1456, 16
  %v4142 = vpop.permute.xlu0 %4141
  %4143 = vrot.lane.b32.xlu0 %v1460, 16
  %v4144 = vpop.permute.xlu0 %4143
  %4145 = vrot.lane.b32.xlu0 %v1466, 16
  %v4146 = vpop.permute.xlu0 %4145
  %4147 = vrot.lane.b32.xlu0 %v1470, 16
  %v4148 = vpop.permute.xlu0 %4147
  %4149 = vrot.lane.b32.xlu0 %v2047, 16
  %v4150 = vpop.permute.xlu0 %4149
  %4151 = vrot.lane.b32.xlu0 %v2051, 16
  %v4152 = vpop.permute.xlu0 %4151
  %4153 = vrot.lane.b32.xlu0 %v2057, 16
  %v4154 = vpop.permute.xlu0 %4153
  %4155 = vrot.lane.b32.xlu0 %v2061, 16
  %v4156 = vpop.permute.xlu0 %4155
  %4157 = vrot.lane.b32.xlu0 %v2049, 16
  %v4158 = vpop.permute.xlu0 %4157
  %4159 = vrot.lane.b32.xlu0 %v2053, 16
  %v4160 = vpop.permute.xlu0 %4159
  %4161 = vrot.lane.b32.xlu0 %v2059, 16
  %v4162 = vpop.permute.xlu0 %4161
  %4163 = vrot.lane.b32.xlu0 %v2063, 16
  %v4164 = vpop.permute.xlu0 %4163
  %vm4165 = vcmp.lt.s32.totalorder %v18, 16
  %v4166 = vsel %vm4165, %v4150, %v4158
  %v4167 = vsel %vm4165, %v4152, %v4160
  %v4168 = vsel %vm4165, %v4154, %v4162
  %v4169 = vsel %vm4165, %v4156, %v4164
  %v4170 = vsel %vm4165, %v4142, %v4150
  %v4171 = vsel %vm4165, %v4144, %v4152
  %v4172 = vsel %vm4165, %v4146, %v4154
  %v4173 = vsel %vm4165, %v4148, %v4156
  %v4174 = vsel %vm4165, %v4134, %v4142
  %v4175 = vsel %vm4165, %v4136, %v4144
  %v4176 = vsel %vm4165, %v4138, %v4146
  %v4177 = vsel %vm4165, %v4140, %v4148
  %v4178 = vsel %vm4165, %v4158, %v4134
  %v4179 = vsel %vm4165, %v4160, %v4136
  %v4180 = vsel %vm4165, %v4162, %v4138
  %v4181 = vsel %vm4165, %v4164, %v4140
  %v4182 = vsel %vm3575, 1, 0
  %v4183 = vsel %vm3576, 1, 0
  %v4184 = vsel %vm3577, 1, 0
  %v4185 = vsel %vm3578, 1, 0
  %vm4186 = vcmp.eq.s32.totalorder %v4182, 1
  %vm4187 = vcmp.eq.s32.totalorder %v4183, 1
  %vm4188 = vcmp.eq.s32.totalorder %v4184, 1
  %vm4189 = vcmp.eq.s32.totalorder %v4185, 1
  %v4190 = vsel %vm4186, %v4174, 0.0
  %v4191 = vsel %vm4187, %v4170, 0.0
  %v4192 = vsel %vm4188, %v4166, 0.0
  %v4193 = vsel %vm4189, %v4178, 0.0
  %v4194 = vsel %vm4186, %v4175, 0.0
  %v4195 = vsel %vm4187, %v4171, 0.0
  %v4196 = vsel %vm4188, %v4167, 0.0
  %v4197 = vsel %vm4189, %v4179, 0.0
  %v4198 = vsel %vm4186, %v4176, 0.0
  %v4199 = vsel %vm4187, %v4172, 0.0
  %v4200 = vsel %vm4188, %v4168, 0.0
  %v4201 = vsel %vm4189, %v4180, 0.0
  %v4202 = vsel %vm4186, %v4177, 0.0
  %v4203 = vsel %vm4187, %v4173, 0.0
  %v4204 = vsel %vm4188, %v4169, 0.0
  %v4205 = vsel %vm4189, %v4181, 0.0
  %v4206 = vadd.f32 %v4117, %v4190
  %v4207 = vadd.f32 %v4118, %v4191
  %v4208 = vadd.f32 %v4119, %v4192
  %v4209 = vadd.f32 %v4120, %v4193
  %v4210 = vadd.f32 %v4121, %v4194
  %v4211 = vadd.f32 %v4122, %v4195
  %v4212 = vadd.f32 %v4123, %v4196
  %v4213 = vadd.f32 %v4124, %v4197
  %v4214 = vadd.f32 %v4125, %v4198
  %v4215 = vadd.f32 %v4126, %v4199
  %v4216 = vadd.f32 %v4127, %v4200
  %v4217 = vadd.f32 %v4128, %v4201
  %v4218 = vadd.f32 %v4129, %v4202
  %v4219 = vadd.f32 %v4130, %v4203
  %v4220 = vadd.f32 %v4131, %v4204
  %v4221 = vadd.f32 %v4132, %v4205
  %4222 = vrot.lane.b32.xlu0 %v1474, 9
  %v4223 = vpop.permute.xlu0 %4222
  %4224 = vrot.lane.b32.xlu0 %v1478, 9
  %v4225 = vpop.permute.xlu0 %4224
  %4226 = vrot.lane.b32.xlu0 %v1484, 9
  %v4227 = vpop.permute.xlu0 %4226
  %4228 = vrot.lane.b32.xlu0 %v1488, 9
  %v4229 = vpop.permute.xlu0 %4228
  %4230 = vrot.lane.b32.xlu0 %v1476, 9
  %v4231 = vpop.permute.xlu0 %4230
  %4232 = vrot.lane.b32.xlu0 %v1480, 9
  %v4233 = vpop.permute.xlu0 %4232
  %4234 = vrot.lane.b32.xlu0 %v1486, 9
  %v4235 = vpop.permute.xlu0 %4234
  %4236 = vrot.lane.b32.xlu0 %v1490, 9
  %v4237 = vpop.permute.xlu0 %4236
  %4238 = vrot.lane.b32.xlu0 %v2067, 9
  %v4239 = vpop.permute.xlu0 %4238
  %4240 = vrot.lane.b32.xlu0 %v2071, 9
  %v4241 = vpop.permute.xlu0 %4240
  %4242 = vrot.lane.b32.xlu0 %v2077, 9
  %v4243 = vpop.permute.xlu0 %4242
  %4244 = vrot.lane.b32.xlu0 %v2081, 9
  %v4245 = vpop.permute.xlu0 %4244
  %4246 = vrot.lane.b32.xlu0 %v2069, 9
  %v4247 = vpop.permute.xlu0 %4246
  %4248 = vrot.lane.b32.xlu0 %v2073, 9
  %v4249 = vpop.permute.xlu0 %4248
  %4250 = vrot.lane.b32.xlu0 %v2079, 9
  %v4251 = vpop.permute.xlu0 %4250
  %4252 = vrot.lane.b32.xlu0 %v2083, 9
  %v4253 = vpop.permute.xlu0 %4252
  %vm4254 = vcmp.lt.s32.totalorder %v18, 9
  %v4255 = vsel %vm4254, %v4239, %v4247
  %v4256 = vsel %vm4254, %v4241, %v4249
  %v4257 = vsel %vm4254, %v4243, %v4251
  %v4258 = vsel %vm4254, %v4245, %v4253
  %v4259 = vsel %vm4254, %v4231, %v4239
  %v4260 = vsel %vm4254, %v4233, %v4241
  %v4261 = vsel %vm4254, %v4235, %v4243
  %v4262 = vsel %vm4254, %v4237, %v4245
  %v4263 = vsel %vm4254, %v4223, %v4231
  %v4264 = vsel %vm4254, %v4225, %v4233
  %v4265 = vsel %vm4254, %v4227, %v4235
  %v4266 = vsel %vm4254, %v4229, %v4237
  %v4267 = vsel %vm4254, %v4247, %v4223
  %v4268 = vsel %vm4254, %v4249, %v4225
  %v4269 = vsel %vm4254, %v4251, %v4227
  %v4270 = vsel %vm4254, %v4253, %v4229
  %vm4271 = vmand %vm3575, %vm3583
  %vm4272 = vmand %vm3576, %vm3584
  %vm4273 = vmand %vm3577, %vm3585
  %vm4274 = vmand %vm3578, %vm3586
  %v4275 = vsel %vm4271, 1, 0
  %v4276 = vsel %vm4272, 1, 0
  %v4277 = vsel %vm4273, 1, 0
  %v4278 = vsel %vm4274, 1, 0
  %vm4279 = vcmp.eq.s32.totalorder %v4275, 1
  %vm4280 = vcmp.eq.s32.totalorder %v4276, 1
  %vm4281 = vcmp.eq.s32.totalorder %v4277, 1
  %vm4282 = vcmp.eq.s32.totalorder %v4278, 1
  %v4283 = vsel %vm4279, %v4263, 0.0
  %v4284 = vsel %vm4280, %v4259, 0.0
  %v4285 = vsel %vm4281, %v4255, 0.0
  %v4286 = vsel %vm4282, %v4267, 0.0
  %v4287 = vsel %vm4279, %v4264, 0.0
  %v4288 = vsel %vm4280, %v4260, 0.0
  %v4289 = vsel %vm4281, %v4256, 0.0
  %v4290 = vsel %vm4282, %v4268, 0.0
  %v4291 = vsel %vm4279, %v4265, 0.0
  %v4292 = vsel %vm4280, %v4261, 0.0
  %v4293 = vsel %vm4281, %v4257, 0.0
  %v4294 = vsel %vm4282, %v4269, 0.0
  %v4295 = vsel %vm4279, %v4266, 0.0
  %v4296 = vsel %vm4280, %v4262, 0.0
  %v4297 = vsel %vm4281, %v4258, 0.0
  %v4298 = vsel %vm4282, %v4270, 0.0
  %v4299 = vadd.f32 %v4206, %v4283
  %v4300 = vadd.f32 %v4207, %v4284
  %v4301 = vadd.f32 %v4208, %v4285
  %v4302 = vadd.f32 %v4209, %v4286
  %v4303 = vadd.f32 %v4210, %v4287
  %v4304 = vadd.f32 %v4211, %v4288
  %v4305 = vadd.f32 %v4212, %v4289
  %v4306 = vadd.f32 %v4213, %v4290
  %v4307 = vadd.f32 %v4214, %v4291
  %v4308 = vadd.f32 %v4215, %v4292
  %v4309 = vadd.f32 %v4216, %v4293
  %v4310 = vadd.f32 %v4217, %v4294
  %v4311 = vadd.f32 %v4218, %v4295
  %v4312 = vadd.f32 %v4219, %v4296
  %v4313 = vadd.f32 %v4220, %v4297
  %v4314 = vadd.f32 %v4221, %v4298
  %v4315 = vadd.f32 %v934, %v936
  %v4316 = vadd.f32 %v4315, %v1527
  %v4317 = vadd.f32 %v4316, %v1529
  %4318 = vadd.xlane.f32.xlu0 %v4317
  %v4319 = vpop.xlane.xlu0 %4318
  %v4320 = vadd.f32 %v938, %v940
  %v4321 = vadd.f32 %v4320, %v1531
  %v4322 = vadd.f32 %v4321, %v1533
  %4323 = vadd.xlane.f32.xlu0 %v4322
  %v4324 = vpop.xlane.xlu0 %4323
  %v4325 = vadd.f32 %v944, %v946
  %v4326 = vadd.f32 %v4325, %v1537
  %v4327 = vadd.f32 %v4326, %v1539
  %4328 = vadd.xlane.f32.xlu0 %v4327
  %v4329 = vpop.xlane.xlu0 %4328
  %v4330 = vadd.f32 %v948, %v950
  %v4331 = vadd.f32 %v4330, %v1541
  %v4332 = vadd.f32 %v4331, %v1543
  %4333 = vadd.xlane.f32.xlu0 %v4332
  %v4334 = vpop.xlane.xlu0 %4333
  %v4335 = vadd.f32 %v2813, %v2814
  %v4336 = vadd.f32 %v4335, %v2815
  %v4337 = vadd.f32 %v4336, %v2816
  %4338 = vadd.xlane.f32.xlu0 %v4337
  %v4339 = vpop.xlane.xlu0 %4338
  %v4340 = vadd.f32 %v2817, %v2818
  %v4341 = vadd.f32 %v4340, %v2819
  %v4342 = vadd.f32 %v4341, %v2820
  %4343 = vadd.xlane.f32.xlu0 %v4342
  %v4344 = vpop.xlane.xlu0 %4343
  %v4345 = vadd.f32 %v2821, %v2822
  %v4346 = vadd.f32 %v4345, %v2823
  %v4347 = vadd.f32 %v4346, %v2824
  %4348 = vadd.xlane.f32.xlu0 %v4347
  %v4349 = vpop.xlane.xlu0 %4348
  %v4350 = vadd.f32 %v2825, %v2826
  %v4351 = vadd.f32 %v4350, %v2827
  %v4352 = vadd.f32 %v4351, %v2828
  %4353 = vadd.xlane.f32.xlu0 %v4352
  %v4354 = vpop.xlane.xlu0 %4353
  %v4355 = vadd.f32 %v3555, %v3556
  %v4356 = vadd.f32 %v4355, %v3557
  %v4357 = vadd.f32 %v4356, %v3558
  %4358 = vadd.xlane.f32.xlu0 %v4357
  %v4359 = vpop.xlane.xlu0 %4358
  %v4360 = vadd.f32 %v3559, %v3560
  %v4361 = vadd.f32 %v4360, %v3561
  %v4362 = vadd.f32 %v4361, %v3562
  %4363 = vadd.xlane.f32.xlu0 %v4362
  %v4364 = vpop.xlane.xlu0 %4363
  %v4365 = vadd.f32 %v3563, %v3564
  %v4366 = vadd.f32 %v4365, %v3565
  %v4367 = vadd.f32 %v4366, %v3566
  %4368 = vadd.xlane.f32.xlu0 %v4367
  %v4369 = vpop.xlane.xlu0 %4368
  %v4370 = vadd.f32 %v3567, %v3568
  %v4371 = vadd.f32 %v4370, %v3569
  %v4372 = vadd.f32 %v4371, %v3570
  %4373 = vadd.xlane.f32.xlu0 %v4372
  %v4374 = vpop.xlane.xlu0 %4373
  %v4375 = vadd.f32 %v4299, %v4300
  %v4376 = vadd.f32 %v4375, %v4301
  %v4377 = vadd.f32 %v4376, %v4302
  %4378 = vadd.xlane.f32.xlu0 %v4377
  %v4379 = vpop.xlane.xlu0 %4378
  %v4380 = vadd.f32 %v4303, %v4304
  %v4381 = vadd.f32 %v4380, %v4305
  %v4382 = vadd.f32 %v4381, %v4306
  %4383 = vadd.xlane.f32.xlu0 %v4382
  %v4384 = vpop.xlane.xlu0 %4383
  %v4385 = vadd.f32 %v4307, %v4308
  %v4386 = vadd.f32 %v4385, %v4309
  %v4387 = vadd.f32 %v4386, %v4310
  %4388 = vadd.xlane.f32.xlu0 %v4387
  %v4389 = vpop.xlane.xlu0 %4388
  %v4390 = vadd.f32 %v4311, %v4312
  %v4391 = vadd.f32 %v4390, %v4313
  %v4392 = vadd.f32 %v4391, %v4314
  %4393 = vadd.xlane.f32.xlu0 %v4392
  %v4394 = vpop.xlane.xlu0 %4393
  %v4395 = vmul.f32 %v4319, 0.001953125
  %v4396 = vmul.f32 %v4324, 0.001953125
  %v4397 = vmul.f32 %v4329, 0.001953125
  %v4398 = vmul.f32 %v4334, 0.001953125
  %v4399 = vmul.f32 %v4339, 0.001953125
  %v4400 = vmul.f32 %v4344, 0.001953125
  %v4401 = vmul.f32 %v4349, 0.001953125
  %v4402 = vmul.f32 %v4354, 0.001953125
  %v4403 = vmul.f32 %v4359, 0.001953125
  %v4404 = vmul.f32 %v4364, 0.001953125
  %v4405 = vmul.f32 %v4369, 0.001953125
  %v4406 = vmul.f32 %v4374, 0.001953125
  %v4407 = vmul.f32 %v4379, 0.001953125
  %v4408 = vmul.f32 %v4384, 0.001953125
  %v4409 = vmul.f32 %v4389, 0.001953125
  %v4410 = vmul.f32 %v4394, 0.001953125
  %v4411 = vmul.f32 %v934, %v934
  %v4412 = vmul.f32 %v936, %v936
  %v4413 = vmul.f32 %v1527, %v1527
  %v4414 = vmul.f32 %v1529, %v1529
  %v4415 = vmul.f32 %v938, %v938
  %v4416 = vmul.f32 %v940, %v940
  %v4417 = vmul.f32 %v1531, %v1531
  %v4418 = vmul.f32 %v1533, %v1533
  %v4419 = vmul.f32 %v944, %v944
  %v4420 = vmul.f32 %v946, %v946
  %v4421 = vmul.f32 %v1537, %v1537
  %v4422 = vmul.f32 %v1539, %v1539
  %v4423 = vmul.f32 %v948, %v948
  %v4424 = vmul.f32 %v950, %v950
  %v4425 = vmul.f32 %v1541, %v1541
  %v4426 = vmul.f32 %v1543, %v1543
  %v4427 = vmul.f32 %v2813, %v2813
  %v4428 = vmul.f32 %v2814, %v2814
  %v4429 = vmul.f32 %v2815, %v2815
  %v4430 = vmul.f32 %v2816, %v2816
  %v4431 = vmul.f32 %v2817, %v2817
  %v4432 = vmul.f32 %v2818, %v2818
  %v4433 = vmul.f32 %v2819, %v2819
  %v4434 = vmul.f32 %v2820, %v2820
  %v4435 = vmul.f32 %v2821, %v2821
  %v4436 = vmul.f32 %v2822, %v2822
  %v4437 = vmul.f32 %v2823, %v2823
  %v4438 = vmul.f32 %v2824, %v2824
  %v4439 = vmul.f32 %v2825, %v2825
  %v4440 = vmul.f32 %v2826, %v2826
  %v4441 = vmul.f32 %v2827, %v2827
  %v4442 = vmul.f32 %v2828, %v2828
  %v4443 = vmul.f32 %v3555, %v3555
  %v4444 = vmul.f32 %v3556, %v3556
  %v4445 = vmul.f32 %v3557, %v3557
  %v4446 = vmul.f32 %v3558, %v3558
  %v4447 = vmul.f32 %v3559, %v3559
  %v4448 = vmul.f32 %v3560, %v3560
  %v4449 = vmul.f32 %v3561, %v3561
  %v4450 = vmul.f32 %v3562, %v3562
  %v4451 = vmul.f32 %v3563, %v3563
  %v4452 = vmul.f32 %v3564, %v3564
  %v4453 = vmul.f32 %v3565, %v3565
  %v4454 = vmul.f32 %v3566, %v3566
  %v4455 = vmul.f32 %v3567, %v3567
  %v4456 = vmul.f32 %v3568, %v3568
  %v4457 = vmul.f32 %v3569, %v3569
  %v4458 = vmul.f32 %v3570, %v3570
  %v4459 = vmul.f32 %v4299, %v4299
  %v4460 = vmul.f32 %v4300, %v4300
  %v4461 = vmul.f32 %v4301, %v4301
  %v4462 = vmul.f32 %v4302, %v4302
  %v4463 = vmul.f32 %v4303, %v4303
  %v4464 = vmul.f32 %v4304, %v4304
  %v4465 = vmul.f32 %v4305, %v4305
  %v4466 = vmul.f32 %v4306, %v4306
  %v4467 = vmul.f32 %v4307, %v4307
  %v4468 = vmul.f32 %v4308, %v4308
  %v4469 = vmul.f32 %v4309, %v4309
  %v4470 = vmul.f32 %v4310, %v4310
  %v4471 = vmul.f32 %v4311, %v4311
  %v4472 = vmul.f32 %v4312, %v4312
  %v4473 = vmul.f32 %v4313, %v4313
  %v4474 = vmul.f32 %v4314, %v4314
  %v4475 = vadd.f32 %v4411, %v4412
  %v4476 = vadd.f32 %v4475, %v4413
  %v4477 = vadd.f32 %v4476, %v4414
  %4478 = vadd.xlane.f32.xlu0 %v4477
  %v4479 = vpop.xlane.xlu0 %4478
  %v4480 = vadd.f32 %v4415, %v4416
  %v4481 = vadd.f32 %v4480, %v4417
  %v4482 = vadd.f32 %v4481, %v4418
  %4483 = vadd.xlane.f32.xlu0 %v4482
  %v4484 = vpop.xlane.xlu0 %4483
  %v4485 = vadd.f32 %v4419, %v4420
  %v4486 = vadd.f32 %v4485, %v4421
  %v4487 = vadd.f32 %v4486, %v4422
  %4488 = vadd.xlane.f32.xlu0 %v4487
  %v4489 = vpop.xlane.xlu0 %4488
  %v4490 = vadd.f32 %v4423, %v4424
  %v4491 = vadd.f32 %v4490, %v4425
  %v4492 = vadd.f32 %v4491, %v4426
  %4493 = vadd.xlane.f32.xlu0 %v4492
  %v4494 = vpop.xlane.xlu0 %4493
  %v4495 = vadd.f32 %v4427, %v4428
  %v4496 = vadd.f32 %v4495, %v4429
  %v4497 = vadd.f32 %v4496, %v4430
  %4498 = vadd.xlane.f32.xlu0 %v4497
  %v4499 = vpop.xlane.xlu0 %4498
  %v4500 = vadd.f32 %v4431, %v4432
  %v4501 = vadd.f32 %v4500, %v4433
  %v4502 = vadd.f32 %v4501, %v4434
  %4503 = vadd.xlane.f32.xlu0 %v4502
  %v4504 = vpop.xlane.xlu0 %4503
  %v4505 = vadd.f32 %v4435, %v4436
  %v4506 = vadd.f32 %v4505, %v4437
  %v4507 = vadd.f32 %v4506, %v4438
  %4508 = vadd.xlane.f32.xlu0 %v4507
  %v4509 = vpop.xlane.xlu0 %4508
  %v4510 = vadd.f32 %v4439, %v4440
  %v4511 = vadd.f32 %v4510, %v4441
  %v4512 = vadd.f32 %v4511, %v4442
  %4513 = vadd.xlane.f32.xlu0 %v4512
  %v4514 = vpop.xlane.xlu0 %4513
  %v4515 = vadd.f32 %v4443, %v4444
  %v4516 = vadd.f32 %v4515, %v4445
  %v4517 = vadd.f32 %v4516, %v4446
  %4518 = vadd.xlane.f32.xlu0 %v4517
  %v4519 = vpop.xlane.xlu0 %4518
  %v4520 = vadd.f32 %v4447, %v4448
  %v4521 = vadd.f32 %v4520, %v4449
  %v4522 = vadd.f32 %v4521, %v4450
  %4523 = vadd.xlane.f32.xlu0 %v4522
  %v4524 = vpop.xlane.xlu0 %4523
  %v4525 = vadd.f32 %v4451, %v4452
  %v4526 = vadd.f32 %v4525, %v4453
  %v4527 = vadd.f32 %v4526, %v4454
  %4528 = vadd.xlane.f32.xlu0 %v4527
  %v4529 = vpop.xlane.xlu0 %4528
  %v4530 = vadd.f32 %v4455, %v4456
  %v4531 = vadd.f32 %v4530, %v4457
  %v4532 = vadd.f32 %v4531, %v4458
  %4533 = vadd.xlane.f32.xlu0 %v4532
  %v4534 = vpop.xlane.xlu0 %4533
  %v4535 = vadd.f32 %v4459, %v4460
  %v4536 = vadd.f32 %v4535, %v4461
  %v4537 = vadd.f32 %v4536, %v4462
  %4538 = vadd.xlane.f32.xlu0 %v4537
  %v4539 = vpop.xlane.xlu0 %4538
  %v4540 = vadd.f32 %v4463, %v4464
  %v4541 = vadd.f32 %v4540, %v4465
  %v4542 = vadd.f32 %v4541, %v4466
  %4543 = vadd.xlane.f32.xlu0 %v4542
  %v4544 = vpop.xlane.xlu0 %4543
  %v4545 = vadd.f32 %v4467, %v4468
  %v4546 = vadd.f32 %v4545, %v4469
  %v4547 = vadd.f32 %v4546, %v4470
  %4548 = vadd.xlane.f32.xlu0 %v4547
  %v4549 = vpop.xlane.xlu0 %4548
  %v4550 = vadd.f32 %v4471, %v4472
  %v4551 = vadd.f32 %v4550, %v4473
  %v4552 = vadd.f32 %v4551, %v4474
  %4553 = vadd.xlane.f32.xlu0 %v4552
  %v4554 = vpop.xlane.xlu0 %4553
  %v4555 = vmul.f32 %v4479, 0.001953125
  %v4556 = vmul.f32 %v4484, 0.001953125
  %v4557 = vmul.f32 %v4489, 0.001953125
  %v4558 = vmul.f32 %v4494, 0.001953125
  %v4559 = vmul.f32 %v4499, 0.001953125
  %v4560 = vmul.f32 %v4504, 0.001953125
  %v4561 = vmul.f32 %v4509, 0.001953125
  %v4562 = vmul.f32 %v4514, 0.001953125
  %v4563 = vmul.f32 %v4519, 0.001953125
  %v4564 = vmul.f32 %v4524, 0.001953125
  %v4565 = vmul.f32 %v4529, 0.001953125
  %v4566 = vmul.f32 %v4534, 0.001953125
  %v4567 = vmul.f32 %v4539, 0.001953125
  %v4568 = vmul.f32 %v4544, 0.001953125
  %v4569 = vmul.f32 %v4549, 0.001953125
  %v4570 = vmul.f32 %v4554, 0.001953125
  %v4571 = vmul.f32 %v4395, %v4395
  %v4572 = vmul.f32 %v4396, %v4396
  %v4573 = vmul.f32 %v4397, %v4397
  %v4574 = vmul.f32 %v4398, %v4398
  %v4575 = vmul.f32 %v4399, %v4399
  %v4576 = vmul.f32 %v4400, %v4400
  %v4577 = vmul.f32 %v4401, %v4401
  %v4578 = vmul.f32 %v4402, %v4402
  %v4579 = vmul.f32 %v4403, %v4403
  %v4580 = vmul.f32 %v4404, %v4404
  %v4581 = vmul.f32 %v4405, %v4405
  %v4582 = vmul.f32 %v4406, %v4406
  %v4583 = vmul.f32 %v4407, %v4407
  %v4584 = vmul.f32 %v4408, %v4408
  %v4585 = vmul.f32 %v4409, %v4409
  %v4586 = vmul.f32 %v4410, %v4410
  %v4587 = vsub.f32 %v4555, %v4571
  %v4588 = vsub.f32 %v4556, %v4572
  %v4589 = vsub.f32 %v4557, %v4573
  %v4590 = vsub.f32 %v4558, %v4574
  %v4591 = vsub.f32 %v4559, %v4575
  %v4592 = vsub.f32 %v4560, %v4576
  %v4593 = vsub.f32 %v4561, %v4577
  %v4594 = vsub.f32 %v4562, %v4578
  %v4595 = vsub.f32 %v4563, %v4579
  %v4596 = vsub.f32 %v4564, %v4580
  %v4597 = vsub.f32 %v4565, %v4581
  %v4598 = vsub.f32 %v4566, %v4582
  %v4599 = vsub.f32 %v4567, %v4583
  %v4600 = vsub.f32 %v4568, %v4584
  %v4601 = vsub.f32 %v4569, %v4585
  %v4602 = vsub.f32 %v4570, %v4586
  %v4603 = vld [vmem:[%s2] sm:$0xff]
  %v4604 = vld [vmem:[%s2 + $0x8] sm:$0xff]
  %v4605 = vld [vmem:[%s2 + $0x10] sm:$0xff]
  %v4606 = vld [vmem:[%s2 + $0x18] sm:$0xff]
  %v4607 = vld [vmem:[%s2 + $0x20] sm:$0xff]
  %v4608 = vld [vmem:[%s2 + $0x28] sm:$0xff]
  %v4609 = vld [vmem:[%s2 + $0x30] sm:$0xff]
  %v4610 = vld [vmem:[%s2 + $0x38] sm:$0xff]
  %v4611 = vld [vmem:[%s2 + $0x40] sm:$0xff]
  %v4612 = vld [vmem:[%s2 + $0x48] sm:$0xff]
  %v4613 = vld [vmem:[%s2 + $0x50] sm:$0xff]
  %v4614 = vld [vmem:[%s2 + $0x58] sm:$0xff]
  %v4615 = vld [vmem:[%s2 + $0x60] sm:$0xff]
  %v4616 = vld [vmem:[%s2 + $0x68] sm:$0xff]
  %v4617 = vld [vmem:[%s2 + $0x70] sm:$0xff]
  %v4618 = vld [vmem:[%s2 + $0x78] sm:$0xff]
  %v4619 = vadd.f32 %v4587, 1e-05
  %v4620 = vadd.f32 %v4588, 1e-05
  %v4621 = vadd.f32 %v4589, 1e-05
  %v4622 = vadd.f32 %v4590, 1e-05
  %v4623 = vadd.f32 %v4591, 1e-05
  %v4624 = vadd.f32 %v4592, 1e-05
  %v4625 = vadd.f32 %v4593, 1e-05
  %v4626 = vadd.f32 %v4594, 1e-05
  %v4627 = vadd.f32 %v4595, 1e-05
  %v4628 = vadd.f32 %v4596, 1e-05
  %v4629 = vadd.f32 %v4597, 1e-05
  %v4630 = vadd.f32 %v4598, 1e-05
  %v4631 = vadd.f32 %v4599, 1e-05
  %v4632 = vadd.f32 %v4600, 1e-05
  %v4633 = vadd.f32 %v4601, 1e-05
  %v4634 = vadd.f32 %v4602, 1e-05
  %v4635 = vrsqrt.pop %v4619
  %v4636 = vrsqrt.pop %v4620
  %v4637 = vrsqrt.pop %v4621
  %v4638 = vrsqrt.pop %v4622
  %v4639 = vrsqrt.pop %v4623
  %v4640 = vrsqrt.pop %v4624
  %v4641 = vrsqrt.pop %v4625
  %v4642 = vrsqrt.pop %v4626
  %v4643 = vrsqrt.pop %v4627
  %v4644 = vrsqrt.pop %v4628
  %v4645 = vrsqrt.pop %v4629
  %v4646 = vrsqrt.pop %v4630
  %v4647 = vrsqrt.pop %v4631
  %v4648 = vrsqrt.pop %v4632
  %v4649 = vrsqrt.pop %v4633
  %v4650 = vrsqrt.pop %v4634
  %v4651 = vmul.f32 %v4603, %v4635
  %v4652 = vmul.f32 %v4604, %v4636
  %v4653 = vmul.f32 %v4605, %v4637
  %v4654 = vmul.f32 %v4606, %v4638
  %v4655 = vmul.f32 %v4607, %v4639
  %v4656 = vmul.f32 %v4608, %v4640
  %v4657 = vmul.f32 %v4609, %v4641
  %v4658 = vmul.f32 %v4610, %v4642
  %v4659 = vmul.f32 %v4611, %v4643
  %v4660 = vmul.f32 %v4612, %v4644
  %v4661 = vmul.f32 %v4613, %v4645
  %v4662 = vmul.f32 %v4614, %v4646
  %v4663 = vmul.f32 %v4615, %v4647
  %v4664 = vmul.f32 %v4616, %v4648
  %v4665 = vmul.f32 %v4617, %v4649
  %v4666 = vmul.f32 %v4618, %v4650
  %v4667 = vld [vmem:[%s3] sm:$0xff]
  %v4668 = vld [vmem:[%s3 + $0x8] sm:$0xff]
  %v4669 = vld [vmem:[%s3 + $0x10] sm:$0xff]
  %v4670 = vld [vmem:[%s3 + $0x18] sm:$0xff]
  %v4671 = vld [vmem:[%s3 + $0x20] sm:$0xff]
  %v4672 = vld [vmem:[%s3 + $0x28] sm:$0xff]
  %v4673 = vld [vmem:[%s3 + $0x30] sm:$0xff]
  %v4674 = vld [vmem:[%s3 + $0x38] sm:$0xff]
  %v4675 = vld [vmem:[%s3 + $0x40] sm:$0xff]
  %v4676 = vld [vmem:[%s3 + $0x48] sm:$0xff]
  %v4677 = vld [vmem:[%s3 + $0x50] sm:$0xff]
  %v4678 = vld [vmem:[%s3 + $0x58] sm:$0xff]
  %v4679 = vld [vmem:[%s3 + $0x60] sm:$0xff]
  %v4680 = vld [vmem:[%s3 + $0x68] sm:$0xff]
  %v4681 = vld [vmem:[%s3 + $0x70] sm:$0xff]
  %v4682 = vld [vmem:[%s3 + $0x78] sm:$0xff]
  %v4683 = vmul.f32 %v4395, %v4651
  %v4684 = vmul.f32 %v4396, %v4652
  %v4685 = vmul.f32 %v4397, %v4653
  %v4686 = vmul.f32 %v4398, %v4654
  %v4687 = vmul.f32 %v4399, %v4655
  %v4688 = vmul.f32 %v4400, %v4656
  %v4689 = vmul.f32 %v4401, %v4657
  %v4690 = vmul.f32 %v4402, %v4658
  %v4691 = vmul.f32 %v4403, %v4659
  %v4692 = vmul.f32 %v4404, %v4660
  %v4693 = vmul.f32 %v4405, %v4661
  %v4694 = vmul.f32 %v4406, %v4662
  %v4695 = vmul.f32 %v4407, %v4663
  %v4696 = vmul.f32 %v4408, %v4664
  %v4697 = vmul.f32 %v4409, %v4665
  %v4698 = vmul.f32 %v4410, %v4666
  %v4699 = vsub.f32 %v4667, %v4683
  %v4700 = vsub.f32 %v4668, %v4684
  %v4701 = vsub.f32 %v4669, %v4685
  %v4702 = vsub.f32 %v4670, %v4686
  %v4703 = vsub.f32 %v4671, %v4687
  %v4704 = vsub.f32 %v4672, %v4688
  %v4705 = vsub.f32 %v4673, %v4689
  %v4706 = vsub.f32 %v4674, %v4690
  %v4707 = vsub.f32 %v4675, %v4691
  %v4708 = vsub.f32 %v4676, %v4692
  %v4709 = vsub.f32 %v4677, %v4693
  %v4710 = vsub.f32 %v4678, %v4694
  %v4711 = vsub.f32 %v4679, %v4695
  %v4712 = vsub.f32 %v4680, %v4696
  %v4713 = vsub.f32 %v4681, %v4697
  %v4714 = vsub.f32 %v4682, %v4698
  %4716 = vset.pattern.permute.xlu0 0
  %4717 = vperm.xlu0 %4716, %v4651
  %v4718 = vpop.permute.xlu0 %4717
  %4721 = vset.pattern.permute.xlu0 0
  %4722 = vperm.xlu0 %4721, %v4652
  %v4723 = vpop.permute.xlu0 %4722
  %4726 = vset.pattern.permute.xlu0 0
  %4727 = vperm.xlu0 %4726, %v4653
  %v4728 = vpop.permute.xlu0 %4727
  %4731 = vset.pattern.permute.xlu0 0
  %4732 = vperm.xlu0 %4731, %v4654
  %v4733 = vpop.permute.xlu0 %4732
  %4736 = vset.pattern.permute.xlu0 0
  %4737 = vperm.xlu0 %4736, %v4655
  %v4738 = vpop.permute.xlu0 %4737
  %4741 = vset.pattern.permute.xlu0 0
  %4742 = vperm.xlu0 %4741, %v4656
  %v4743 = vpop.permute.xlu0 %4742
  %4746 = vset.pattern.permute.xlu0 0
  %4747 = vperm.xlu0 %4746, %v4657
  %v4748 = vpop.permute.xlu0 %4747
  %4751 = vset.pattern.permute.xlu0 0
  %4752 = vperm.xlu0 %4751, %v4658
  %v4753 = vpop.permute.xlu0 %4752
  %4756 = vset.pattern.permute.xlu0 0
  %4757 = vperm.xlu0 %4756, %v4659
  %v4758 = vpop.permute.xlu0 %4757
  %4761 = vset.pattern.permute.xlu0 0
  %4762 = vperm.xlu0 %4761, %v4660
  %v4763 = vpop.permute.xlu0 %4762
  %4766 = vset.pattern.permute.xlu0 0
  %4767 = vperm.xlu0 %4766, %v4661
  %v4768 = vpop.permute.xlu0 %4767
  %4771 = vset.pattern.permute.xlu0 0
  %4772 = vperm.xlu0 %4771, %v4662
  %v4773 = vpop.permute.xlu0 %4772
  %4776 = vset.pattern.permute.xlu0 0
  %4777 = vperm.xlu0 %4776, %v4663
  %v4778 = vpop.permute.xlu0 %4777
  %4781 = vset.pattern.permute.xlu0 0
  %4782 = vperm.xlu0 %4781, %v4664
  %v4783 = vpop.permute.xlu0 %4782
  %4786 = vset.pattern.permute.xlu0 0
  %4787 = vperm.xlu0 %4786, %v4665
  %v4788 = vpop.permute.xlu0 %4787
  %4791 = vset.pattern.permute.xlu0 0
  %4792 = vperm.xlu0 %4791, %v4666
  %v4793 = vpop.permute.xlu0 %4792
  %v4795 = vmul.f32 %v934, %v4718
  %v4796 = vmul.f32 %v936, %v4718
  %v4797 = vmul.f32 %v1527, %v4718
  %v4798 = vmul.f32 %v1529, %v4718
  %v4799 = vmul.f32 %v938, %v4723
  %v4800 = vmul.f32 %v940, %v4723
  %v4801 = vmul.f32 %v1531, %v4723
  %v4802 = vmul.f32 %v1533, %v4723
  %v4803 = vmul.f32 %v944, %v4728
  %v4804 = vmul.f32 %v946, %v4728
  %v4805 = vmul.f32 %v1537, %v4728
  %v4806 = vmul.f32 %v1539, %v4728
  %v4807 = vmul.f32 %v948, %v4733
  %v4808 = vmul.f32 %v950, %v4733
  %v4809 = vmul.f32 %v1541, %v4733
  %v4810 = vmul.f32 %v1543, %v4733
  %v4811 = vmul.f32 %v2813, %v4738
  %v4812 = vmul.f32 %v2814, %v4738
  %v4813 = vmul.f32 %v2815, %v4738
  %v4814 = vmul.f32 %v2816, %v4738
  %v4815 = vmul.f32 %v2817, %v4743
  %v4816 = vmul.f32 %v2818, %v4743
  %v4817 = vmul.f32 %v2819, %v4743
  %v4818 = vmul.f32 %v2820, %v4743
  %v4819 = vmul.f32 %v2821, %v4748
  %v4820 = vmul.f32 %v2822, %v4748
  %v4821 = vmul.f32 %v2823, %v4748
  %v4822 = vmul.f32 %v2824, %v4748
  %v4823 = vmul.f32 %v2825, %v4753
  %v4824 = vmul.f32 %v2826, %v4753
  %v4825 = vmul.f32 %v2827, %v4753
  %v4826 = vmul.f32 %v2828, %v4753
  %v4827 = vmul.f32 %v3555, %v4758
  %v4828 = vmul.f32 %v3556, %v4758
  %v4829 = vmul.f32 %v3557, %v4758
  %v4830 = vmul.f32 %v3558, %v4758
  %v4831 = vmul.f32 %v3559, %v4763
  %v4832 = vmul.f32 %v3560, %v4763
  %v4833 = vmul.f32 %v3561, %v4763
  %v4834 = vmul.f32 %v3562, %v4763
  %v4835 = vmul.f32 %v3563, %v4768
  %v4836 = vmul.f32 %v3564, %v4768
  %v4837 = vmul.f32 %v3565, %v4768
  %v4838 = vmul.f32 %v3566, %v4768
  %v4839 = vmul.f32 %v3567, %v4773
  %v4840 = vmul.f32 %v3568, %v4773
  %v4841 = vmul.f32 %v3569, %v4773
  %v4842 = vmul.f32 %v3570, %v4773
  %v4843 = vmul.f32 %v4299, %v4778
  %v4844 = vmul.f32 %v4300, %v4778
  %v4845 = vmul.f32 %v4301, %v4778
  %v4846 = vmul.f32 %v4302, %v4778
  %v4847 = vmul.f32 %v4303, %v4783
  %v4848 = vmul.f32 %v4304, %v4783
  %v4849 = vmul.f32 %v4305, %v4783
  %v4850 = vmul.f32 %v4306, %v4783
  %v4851 = vmul.f32 %v4307, %v4788
  %v4852 = vmul.f32 %v4308, %v4788
  %v4853 = vmul.f32 %v4309, %v4788
  %v4854 = vmul.f32 %v4310, %v4788
  %v4855 = vmul.f32 %v4311, %v4793
  %v4856 = vmul.f32 %v4312, %v4793
  %v4857 = vmul.f32 %v4313, %v4793
  %v4858 = vmul.f32 %v4314, %v4793
  %4860 = vset.pattern.permute.xlu0 0
  %4861 = vperm.xlu0 %4860, %v4699
  %v4862 = vpop.permute.xlu0 %4861
  %4865 = vset.pattern.permute.xlu0 0
  %4866 = vperm.xlu0 %4865, %v4700
  %v4867 = vpop.permute.xlu0 %4866
  %4870 = vset.pattern.permute.xlu0 0
  %4871 = vperm.xlu0 %4870, %v4701
  %v4872 = vpop.permute.xlu0 %4871
  %4875 = vset.pattern.permute.xlu0 0
  %4876 = vperm.xlu0 %4875, %v4702
  %v4877 = vpop.permute.xlu0 %4876
  %4880 = vset.pattern.permute.xlu0 0
  %4881 = vperm.xlu0 %4880, %v4703
  %v4882 = vpop.permute.xlu0 %4881
  %4885 = vset.pattern.permute.xlu0 0
  %4886 = vperm.xlu0 %4885, %v4704
  %v4887 = vpop.permute.xlu0 %4886
  %4890 = vset.pattern.permute.xlu0 0
  %4891 = vperm.xlu0 %4890, %v4705
  %v4892 = vpop.permute.xlu0 %4891
  %4895 = vset.pattern.permute.xlu0 0
  %4896 = vperm.xlu0 %4895, %v4706
  %v4897 = vpop.permute.xlu0 %4896
  %4900 = vset.pattern.permute.xlu0 0
  %4901 = vperm.xlu0 %4900, %v4707
  %v4902 = vpop.permute.xlu0 %4901
  %4905 = vset.pattern.permute.xlu0 0
  %4906 = vperm.xlu0 %4905, %v4708
  %v4907 = vpop.permute.xlu0 %4906
  %4910 = vset.pattern.permute.xlu0 0
  %4911 = vperm.xlu0 %4910, %v4709
  %v4912 = vpop.permute.xlu0 %4911
  %4915 = vset.pattern.permute.xlu0 0
  %4916 = vperm.xlu0 %4915, %v4710
  %v4917 = vpop.permute.xlu0 %4916
  %4920 = vset.pattern.permute.xlu0 0
  %4921 = vperm.xlu0 %4920, %v4711
  %v4922 = vpop.permute.xlu0 %4921
  %4925 = vset.pattern.permute.xlu0 0
  %4926 = vperm.xlu0 %4925, %v4712
  %v4927 = vpop.permute.xlu0 %4926
  %4930 = vset.pattern.permute.xlu0 0
  %4931 = vperm.xlu0 %4930, %v4713
  %v4932 = vpop.permute.xlu0 %4931
  %4935 = vset.pattern.permute.xlu0 0
  %4936 = vperm.xlu0 %4935, %v4714
  %v4937 = vpop.permute.xlu0 %4936
  %v4939 = vadd.f32 %v4795, %v4862
  %v4940 = vadd.f32 %v4796, %v4862
  %v4941 = vadd.f32 %v4797, %v4862
  %v4942 = vadd.f32 %v4798, %v4862
  %v4943 = vadd.f32 %v4799, %v4867
  %v4944 = vadd.f32 %v4800, %v4867
  %v4945 = vadd.f32 %v4801, %v4867
  %v4946 = vadd.f32 %v4802, %v4867
  %v4947 = vadd.f32 %v4803, %v4872
  %v4948 = vadd.f32 %v4804, %v4872
  %v4949 = vadd.f32 %v4805, %v4872
  %v4950 = vadd.f32 %v4806, %v4872
  %v4951 = vadd.f32 %v4807, %v4877
  %v4952 = vadd.f32 %v4808, %v4877
  %v4953 = vadd.f32 %v4809, %v4877
  %v4954 = vadd.f32 %v4810, %v4877
  %v4955 = vadd.f32 %v4811, %v4882
  %v4956 = vadd.f32 %v4812, %v4882
  %v4957 = vadd.f32 %v4813, %v4882
  %v4958 = vadd.f32 %v4814, %v4882
  %v4959 = vadd.f32 %v4815, %v4887
  %v4960 = vadd.f32 %v4816, %v4887
  %v4961 = vadd.f32 %v4817, %v4887
  %v4962 = vadd.f32 %v4818, %v4887
  %v4963 = vadd.f32 %v4819, %v4892
  %v4964 = vadd.f32 %v4820, %v4892
  %v4965 = vadd.f32 %v4821, %v4892
  %v4966 = vadd.f32 %v4822, %v4892
  %v4967 = vadd.f32 %v4823, %v4897
  %v4968 = vadd.f32 %v4824, %v4897
  %v4969 = vadd.f32 %v4825, %v4897
  %v4970 = vadd.f32 %v4826, %v4897
  %v4971 = vadd.f32 %v4827, %v4902
  %v4972 = vadd.f32 %v4828, %v4902
  %v4973 = vadd.f32 %v4829, %v4902
  %v4974 = vadd.f32 %v4830, %v4902
  %v4975 = vadd.f32 %v4831, %v4907
  %v4976 = vadd.f32 %v4832, %v4907
  %v4977 = vadd.f32 %v4833, %v4907
  %v4978 = vadd.f32 %v4834, %v4907
  %v4979 = vadd.f32 %v4835, %v4912
  %v4980 = vadd.f32 %v4836, %v4912
  %v4981 = vadd.f32 %v4837, %v4912
  %v4982 = vadd.f32 %v4838, %v4912
  %v4983 = vadd.f32 %v4839, %v4917
  %v4984 = vadd.f32 %v4840, %v4917
  %v4985 = vadd.f32 %v4841, %v4917
  %v4986 = vadd.f32 %v4842, %v4917
  %v4987 = vadd.f32 %v4843, %v4922
  %v4988 = vadd.f32 %v4844, %v4922
  %v4989 = vadd.f32 %v4845, %v4922
  %v4990 = vadd.f32 %v4846, %v4922
  %v4991 = vadd.f32 %v4847, %v4927
  %v4992 = vadd.f32 %v4848, %v4927
  %v4993 = vadd.f32 %v4849, %v4927
  %v4994 = vadd.f32 %v4850, %v4927
  %v4995 = vadd.f32 %v4851, %v4932
  %v4996 = vadd.f32 %v4852, %v4932
  %v4997 = vadd.f32 %v4853, %v4932
  %v4998 = vadd.f32 %v4854, %v4932
  %v4999 = vadd.f32 %v4855, %v4937
  %v5000 = vadd.f32 %v4856, %v4937
  %v5001 = vadd.f32 %v4857, %v4937
  %v5002 = vadd.f32 %v4858, %v4937
  %v5003 = vmax.f32 %v4939, 0.0
  %v5004 = vmax.f32 %v4940, 0.0
  %v5005 = vmax.f32 %v4941, 0.0
  %v5006 = vmax.f32 %v4942, 0.0
  %v5007 = vmax.f32 %v4943, 0.0
  %v5008 = vmax.f32 %v4944, 0.0
  %v5009 = vmax.f32 %v4945, 0.0
  %v5010 = vmax.f32 %v4946, 0.0
  %v5011 = vmax.f32 %v4947, 0.0
  %v5012 = vmax.f32 %v4948, 0.0
  %v5013 = vmax.f32 %v4949, 0.0
  %v5014 = vmax.f32 %v4950, 0.0
  %v5015 = vmax.f32 %v4951, 0.0
  %v5016 = vmax.f32 %v4952, 0.0
  %v5017 = vmax.f32 %v4953, 0.0
  %v5018 = vmax.f32 %v4954, 0.0
  %v5019 = vmax.f32 %v4955, 0.0
  %v5020 = vmax.f32 %v4956, 0.0
  %v5021 = vmax.f32 %v4957, 0.0
  %v5022 = vmax.f32 %v4958, 0.0
  %v5023 = vmax.f32 %v4959, 0.0
  %v5024 = vmax.f32 %v4960, 0.0
  %v5025 = vmax.f32 %v4961, 0.0
  %v5026 = vmax.f32 %v4962, 0.0
  %v5027 = vmax.f32 %v4963, 0.0
  %v5028 = vmax.f32 %v4964, 0.0
  %v5029 = vmax.f32 %v4965, 0.0
  %v5030 = vmax.f32 %v4966, 0.0
  %v5031 = vmax.f32 %v4967, 0.0
  %v5032 = vmax.f32 %v4968, 0.0
  %v5033 = vmax.f32 %v4969, 0.0
  %v5034 = vmax.f32 %v4970, 0.0
  %v5035 = vmax.f32 %v4971, 0.0
  %v5036 = vmax.f32 %v4972, 0.0
  %v5037 = vmax.f32 %v4973, 0.0
  %v5038 = vmax.f32 %v4974, 0.0
  %v5039 = vmax.f32 %v4975, 0.0
  %v5040 = vmax.f32 %v4976, 0.0
  %v5041 = vmax.f32 %v4977, 0.0
  %v5042 = vmax.f32 %v4978, 0.0
  %v5043 = vmax.f32 %v4979, 0.0
  %v5044 = vmax.f32 %v4980, 0.0
  %v5045 = vmax.f32 %v4981, 0.0
  %v5046 = vmax.f32 %v4982, 0.0
  %v5047 = vmax.f32 %v4983, 0.0
  %v5048 = vmax.f32 %v4984, 0.0
  %v5049 = vmax.f32 %v4985, 0.0
  %v5050 = vmax.f32 %v4986, 0.0
  %v5051 = vmax.f32 %v4987, 0.0
  %v5052 = vmax.f32 %v4988, 0.0
  %v5053 = vmax.f32 %v4989, 0.0
  %v5054 = vmax.f32 %v4990, 0.0
  %v5055 = vmax.f32 %v4991, 0.0
  %v5056 = vmax.f32 %v4992, 0.0
  %v5057 = vmax.f32 %v4993, 0.0
  %v5058 = vmax.f32 %v4994, 0.0
  %v5059 = vmax.f32 %v4995, 0.0
  %v5060 = vmax.f32 %v4996, 0.0
  %v5061 = vmax.f32 %v4997, 0.0
  %v5062 = vmax.f32 %v4998, 0.0
  %v5063 = vmax.f32 %v4999, 0.0
  %v5064 = vmax.f32 %v5000, 0.0
  %v5065 = vmax.f32 %v5001, 0.0
  %v5066 = vmax.f32 %v5002, 0.0
  %5067 = vst [vmem:[%s4] sm:$0xff] %v5003
  %5068 = vst [vmem:[%s4 + $0x8] sm:$0xff] %v5004
  %5069 = vst [vmem:[%s4 + $0x10] sm:$0xff] %v5007
  %5070 = vst [vmem:[%s4 + $0x18] sm:$0xff] %v5008
  %5071 = vst [vmem:[%s4 + $0x20] sm:$0xff] %v5011
  %5072 = vst [vmem:[%s4 + $0x28] sm:$0xff] %v5012
  %5073 = vst [vmem:[%s4 + $0x30] sm:$0xff] %v5015
  %5074 = vst [vmem:[%s4 + $0x38] sm:$0xff] %v5016
  %5075 = vst [vmem:[%s4 + $0x40] sm:$0xff] %v5019
  %5076 = vst [vmem:[%s4 + $0x48] sm:$0xff] %v5020
  %5077 = vst [vmem:[%s4 + $0x50] sm:$0xff] %v5023
  %5078 = vst [vmem:[%s4 + $0x58] sm:$0xff] %v5024
  %5079 = vst [vmem:[%s4 + $0x60] sm:$0xff] %v5027
  %5080 = vst [vmem:[%s4 + $0x68] sm:$0xff] %v5028
  %5081 = vst [vmem:[%s4 + $0x70] sm:$0xff] %v5031
  %5082 = vst [vmem:[%s4 + $0x78] sm:$0xff] %v5032
  %5083 = vst [vmem:[%s4 + $0x80] sm:$0xff] %v5035
  %5084 = vst [vmem:[%s4 + $0x88] sm:$0xff] %v5036
  %5085 = vst [vmem:[%s4 + $0x90] sm:$0xff] %v5039
  %5086 = vst [vmem:[%s4 + $0x98] sm:$0xff] %v5040
  %5087 = vst [vmem:[%s4 + $0xa0] sm:$0xff] %v5043
  %5088 = vst [vmem:[%s4 + $0xa8] sm:$0xff] %v5044
  %5089 = vst [vmem:[%s4 + $0xb0] sm:$0xff] %v5047
  %5090 = vst [vmem:[%s4 + $0xb8] sm:$0xff] %v5048
  %5091 = vst [vmem:[%s4 + $0xc0] sm:$0xff] %v5051
  %5092 = vst [vmem:[%s4 + $0xc8] sm:$0xff] %v5052
  %5093 = vst [vmem:[%s4 + $0xd0] sm:$0xff] %v5055
  %5094 = vst [vmem:[%s4 + $0xd8] sm:$0xff] %v5056
  %5095 = vst [vmem:[%s4 + $0xe0] sm:$0xff] %v5059
  %5096 = vst [vmem:[%s4 + $0xe8] sm:$0xff] %v5060
  %5097 = vst [vmem:[%s4 + $0xf0] sm:$0xff] %v5063
  %5098 = vst [vmem:[%s4 + $0xf8] sm:$0xff] %v5064
  %s5099 = scalar_lea.vmem %s4, 256
  %5100 = vst [vmem:[%s5099] sm:$0xff] %v5005
  %5101 = vst [vmem:[%s5099 + $0x8] sm:$0xff] %v5006
  %5102 = vst [vmem:[%s5099 + $0x10] sm:$0xff] %v5009
  %5103 = vst [vmem:[%s5099 + $0x18] sm:$0xff] %v5010
  %5104 = vst [vmem:[%s5099 + $0x20] sm:$0xff] %v5013
  %5105 = vst [vmem:[%s5099 + $0x28] sm:$0xff] %v5014
  %5106 = vst [vmem:[%s5099 + $0x30] sm:$0xff] %v5017
  %5107 = vst [vmem:[%s5099 + $0x38] sm:$0xff] %v5018
  %5108 = vst [vmem:[%s5099 + $0x40] sm:$0xff] %v5021
  %5109 = vst [vmem:[%s5099 + $0x48] sm:$0xff] %v5022
  %5110 = vst [vmem:[%s5099 + $0x50] sm:$0xff] %v5025
  %5111 = vst [vmem:[%s5099 + $0x58] sm:$0xff] %v5026
  %5112 = vst [vmem:[%s5099 + $0x60] sm:$0xff] %v5029
  %5113 = vst [vmem:[%s5099 + $0x68] sm:$0xff] %v5030
  %5114 = vst [vmem:[%s5099 + $0x70] sm:$0xff] %v5033
  %5115 = vst [vmem:[%s5099 + $0x78] sm:$0xff] %v5034
  %5116 = vst [vmem:[%s5099 + $0x80] sm:$0xff] %v5037
  %5117 = vst [vmem:[%s5099 + $0x88] sm:$0xff] %v5038
  %5118 = vst [vmem:[%s5099 + $0x90] sm:$0xff] %v5041
  %5119 = vst [vmem:[%s5099 + $0x98] sm:$0xff] %v5042
  %5120 = vst [vmem:[%s5099 + $0xa0] sm:$0xff] %v5045
  %5121 = vst [vmem:[%s5099 + $0xa8] sm:$0xff] %v5046
  %5122 = vst [vmem:[%s5099 + $0xb0] sm:$0xff] %v5049
  %5123 = vst [vmem:[%s5099 + $0xb8] sm:$0xff] %v5050
  %5124 = vst [vmem:[%s5099 + $0xc0] sm:$0xff] %v5053
  %5125 = vst [vmem:[%s5099 + $0xc8] sm:$0xff] %v5054
  %5126 = vst [vmem:[%s5099 + $0xd0] sm:$0xff] %v5057
  %5127 = vst [vmem:[%s5099 + $0xd8] sm:$0xff] %v5058
  %5128 = vst [vmem:[%s5099 + $0xe0] sm:$0xff] %v5061
  %5129 = vst [vmem:[%s5099 + $0xe8] sm:$0xff] %v5062
  %5130 = vst [vmem:[%s5099 + $0xf0] sm:$0xff] %v5065
  %5131 = vst [vmem:[%s5099 + $0xf8] sm:$0xff] %v5066
  // Predicated region
  $region18: #{cpfe_forward.1} parent=0 // pred_check
    _
  $region19: #{cpfe_forward.1} parent=0 // pred_check_branch
    %5133 = sbr.rel (0) target = $region21
  $region20: #{cpfe_forward.1} parent=0 // pred_region
    _
  $region21: #{cpfe_forward.1} parent=0 // pred_fallthru
    _
  // Predicated region
  $region22: #{cpfe_forward.1} parent=0 // pred_check
    _
  $region23: #{cpfe_forward.1} parent=0 // pred_check_branch
    %5135 = sbr.rel (0) target = $region25
  $region24: #{cpfe_forward.1} parent=0 // pred_region
    _
  $region25: #{cpfe_forward.1} parent=0 // pred_fallthru
    _

</llo_original>
